<compile_context>
chip_gen: v7x
topology: tpu7x:2x2x1
jax: 0.10.0
libtpu: 0.0.40
codegen_flags: <defaults>
</compile_context>

<pallas_src>
import functools

import jax
import jax.numpy as jnp
from jax import lax
from jax.experimental import pallas as pl
from jax.experimental.pallas import tpu as pltpu

LANE = 128       # channel padding granularity (TPU lane width)
BN_EPS = 1e-5


def _round_up(x, m):
  return (x + m - 1) // m * m


# ------------------------------ Pallas kernel ------------------------------ #

def _make_block_kernel(stride, Ho, Wo, projection):
  """Returns the fused BasicBlock kernel body (one image per grid step)."""
  s = stride
  taps = tuple((ky, kx) for ky in range(3) for kx in range(3))

  def body(x_ref, w1_ref, b1_ref, w2_ref, b2_ref, ws_ref, o_ref, y1_ref):
    cin_p = x_ref.shape[-1]
    cmid_p = w1_ref.shape[-1]
    cout_p = w2_ref.shape[-1]

    def x_tap(ky, kx):
      # Tap (ky, kx) of a stride-s 3x3 conv == contiguous window of phase
      # (ky % s, kx % s) starting at (ky // s, kx // s).
      ph = (ky % s) * s + (kx % s)
      a, b = ky // s, kx // s
      xp = x_ref[ph].astype(jnp.float32)                   # (Hp, Wp, cin_p)
      return xp[a:a + Ho, b:b + Wo, :].reshape(Ho * Wo, cin_p)

    # ---- conv1 (3x3, stride s) + BN + ReLU; f32 accumulation on the MXU ----
    acc1 = jnp.zeros((Ho * Wo, cmid_p), jnp.float32)
    for ti, (ky, kx) in enumerate(taps):
      acc1 = acc1 + jnp.dot(x_tap(ky, kx).astype(jnp.bfloat16), w1_ref[ti],
                            preferred_element_type=jnp.float32)
    y1 = jnp.maximum(acc1 + b1_ref[...], 0.0)

    # Stash y1 in a zero-halo VMEM scratch: gives conv2 its padding=1 without
    # ever writing the intermediate activation to HBM.
    y1_ref[...] = jnp.zeros_like(y1_ref)
    y1_ref[pl.ds(1, Ho), pl.ds(1, Wo), :] = y1.reshape(Ho, Wo, cmid_p)

    # ---- conv2 (3x3, stride 1) + BN ----------------------------------------
    yp = y1_ref[...]                                       # (Ho+2, Wo+2, cmid_p)
    acc2 = jnp.zeros((Ho * Wo, cout_p), jnp.float32)
    for ti, (ky, kx) in enumerate(taps):
      tap = yp[ky:ky + Ho, kx:kx + Wo, :].reshape(Ho * Wo, cmid_p)
      acc2 = acc2 + jnp.dot(tap.astype(jnp.bfloat16), w2_ref[ti],
                            preferred_element_type=jnp.float32)

    # ---- shortcut, fused into the same kernel (no HBM residual tensor) -----
    ctr = x_tap(1, 1)            # x sampled on the stride-s output grid (f32)
    if projection:               # 1x1 conv; BN scale folded into ws, bias in b2
      acc2 = acc2 + jnp.dot(ctr.astype(jnp.bfloat16), ws_ref[...],
                            preferred_element_type=jnp.float32)
    else:                        # identity shortcut
      acc2 = acc2 + ctr

    out = jnp.maximum(acc2 + b2_ref[...], 0.0)
    o_ref[...] = out.reshape(1, Ho, Wo, cout_p).astype(o_ref.dtype)

  if projection:
    def kernel(x_ref, w1_ref, b1_ref, w2_ref, b2_ref, ws_ref, o_ref, y1_ref):
      body(x_ref, w1_ref, b1_ref, w2_ref, b2_ref, ws_ref, o_ref, y1_ref)
  else:
    def kernel(x_ref, w1_ref, b1_ref, w2_ref, b2_ref, o_ref, y1_ref):
      body(x_ref, w1_ref, b1_ref, w2_ref, b2_ref, None, o_ref, y1_ref)
  return kernel


# ------------------------------ JAX glue ----------------------------------- #

def _fold_bn(bn):
  scale = bn["gamma"] / jnp.sqrt(bn["var"] + BN_EPS)
  bias = bn["beta"] - bn["mean"] * scale
  return scale, bias


def _prep_conv3x3(w_oihw, bn, cin_p, cout_p):
  """(Cout,Cin,3,3)+BN -> bf16 (9, cin_p, cout_p) scale-folded W, f32 (1,cout_p) bias."""
  scale, bias = _fold_bn(bn)
  cout, cin, kh, kw = w_oihw.shape
  w = jnp.transpose(w_oihw, (2, 3, 1, 0)) * scale[None, None, None, :]
  w = jnp.pad(w, ((0, 0), (0, 0), (0, cin_p - cin), (0, cout_p - cout)))
  w = w.reshape(kh * kw, cin_p, cout_p).astype(jnp.bfloat16)
  b = jnp.pad(bias, (0, cout_p - cout)).reshape(1, cout_p).astype(jnp.float32)
  return w, b


def _prep_conv1x1(w_oihw, bn, cin_p, cout_p):
  scale, bias = _fold_bn(bn)
  cout, cin = w_oihw.shape[0], w_oihw.shape[1]
  w = jnp.transpose(w_oihw[:, :, 0, 0], (1, 0)) * scale[None, :]
  w = jnp.pad(w, ((0, cin_p - cin), (0, cout_p - cout))).astype(jnp.bfloat16)
  b = jnp.pad(bias, (0, cout_p - cout)).reshape(1, cout_p).astype(jnp.float32)
  return w, b


def _phase_split(x_nhwc, stride, cin_p):
  """Spatial halo pad (1), channel pad to cin_p, and split into stride^2 phases.

  Returns bf16 (N*s*s, Hp, Wp, cin_p) where phase (p, q) holds padded pixels
  (p::s, q::s); a 3x3/stride-s tap (ky, kx) is then the contiguous window
  [ky//s : ky//s+Ho, kx//s : kx//s+Wo] of phase (ky % s, kx % s).
  """
  s = stride
  N, H, W, C = x_nhwc.shape
  Hpad = _round_up(H + 2, s)
  Wpad = _round_up(W + 2, s)
  x = jnp.pad(x_nhwc, ((0, 0), (1, Hpad - H - 1), (1, Wpad - W - 1),
                       (0, cin_p - C)))
  Hp, Wp = Hpad // s, Wpad // s
  x = x.reshape(N, Hp, s, Wp, s, cin_p)
  x = jnp.transpose(x, (0, 2, 4, 1, 3, 5)).reshape(N * s * s, Hp, Wp, cin_p)
  return x.astype(jnp.bfloat16), (Hp, Wp)


def basic_block_forward(x_nchw, params, stride):
  """Pallas-backed BasicBlock forward (eval-mode BN).

  x_nchw: (N, Cin, H, W) f32 -> (N, Cout, Ho, Wo) f32.
  """
  N, cin, H, W = x_nchw.shape
  cout = params["w1"].shape[0]
  Ho = (H + 2 - 3) // stride + 1
  Wo = (W + 2 - 3) // stride + 1
  projection = (stride != 1) or (cin != cout)

  cin_p = _round_up(cin, LANE)
  cmid_p = _round_up(cout, LANE)
  cout_p = cmid_p

  x = jnp.transpose(x_nchw, (0, 2, 3, 1))                      # NHWC
  x_ph, (Hp, Wp) = _phase_split(x, stride, cin_p)

  w1, b1 = _prep_conv3x3(params["w1"], params["bn1"], cin_p, cmid_p)
  w2, b2 = _prep_conv3x3(params["w2"], params["bn2"], cmid_p, cout_p)

  args = [x_ph, w1, b1, w2, b2]
  in_specs = [
      pl.BlockSpec((stride * stride, Hp, Wp, cin_p),
                   lambda n: (n, 0, 0, 0)),                    # one image/step
      pl.BlockSpec((9, cin_p, cmid_p), lambda n: (0, 0, 0)),   # resident W1
      pl.BlockSpec((1, cmid_p), lambda n: (0, 0)),
      pl.BlockSpec((9, cmid_p, cout_p), lambda n: (0, 0, 0)),  # resident W2
      pl.BlockSpec((1, cout_p), lambda n: (0, 0)),
  ]
  if projection:
    ws, bs = _prep_conv1x1(params["ws"], params["bns"], cin_p, cout_p)
    args[4] = b2 + bs            # both biases are added before the final ReLU
    args.append(ws)
    in_specs.append(pl.BlockSpec((cin_p, cout_p), lambda n: (0, 0)))

  kernel = _make_block_kernel(stride, Ho, Wo, projection)

  out = pl.pallas_call(
      kernel,
      out_shape=jax.ShapeDtypeStruct((N, Ho, Wo, cout_p), jnp.float32),
      grid=(N,),
      in_specs=in_specs,
      out_specs=pl.BlockSpec((1, Ho, Wo, cout_p), lambda n: (n, 0, 0, 0)),
      scratch_shapes=[pltpu.VMEM((Ho + 2, Wo + 2, cmid_p), jnp.float32)],
      compiler_params=pltpu.CompilerParams(
          dimension_semantics=("parallel",)),
  )(*args)

  out = out[..., :cout]                                        # drop C pad
  return jnp.transpose(out, (0, 3, 1, 2))                      # back to NCHW


# --------------------------- pure-JAX reference ----------------------------- #

def ref_forward(x_nchw, params, stride):
  def conv(x, w, s, pad):
    return lax.conv_general_dilated(
        x, w, (s, s), ((pad, pad), (pad, pad)),
        dimension_numbers=("NCHW", "OIHW", "NCHW"))

  def bn(x, p):
    sc = p["gamma"] / jnp.sqrt(p["var"] + BN_EPS)
    bi = p["beta"] - p["mean"] * sc
    return x * sc[None, :, None, None] + bi[None, :, None, None]

  y = jax.nn.relu(bn(conv(x_nchw, params["w1"], stride, 1), params["bn1"]))
  y = bn(conv(y, params["w2"], 1, 1), params["bn2"])
  cin, cout = x_nchw.shape[1], params["w1"].shape[0]
  if stride != 1 or cin != cout:
    sc = bn(conv(x_nchw, params["ws"], stride, 0), params["bns"])
  else:
    sc = x_nchw
  return jax.nn.relu(y + sc)


# --------------------------------- params ----------------------------------- #

def init_params(key, in_channels, out_channels, stride):
  ks = jax.random.split(key, 6)

  def conv_init(k, shape):
    fan_in = shape[1] * shape[2] * shape[3]
    return jax.random.normal(k, shape, jnp.float32) * (2.0 / fan_in) ** 0.5

  def bn_init(k):
    kg, kb, km, kv = jax.random.split(k, 4)
    c = out_channels
    return {
        "gamma": 1.0 + 0.1 * jax.random.normal(kg, (c,), jnp.float32),
        "beta": 0.1 * jax.random.normal(kb, (c,), jnp.float32),
        "mean": 0.05 * jax.random.normal(km, (c,), jnp.float32),
        "var": jnp.abs(1.0 + 0.1 * jax.random.normal(kv, (c,), jnp.float32)),
    }

  params = {
      "w1": conv_init(ks[0], (out_channels, in_channels, 3, 3)),
      "bn1": bn_init(ks[1]),
      "w2": conv_init(ks[2], (out_channels, out_channels, 3, 3)),
      "bn2": bn_init(ks[3]),
  }
  if stride != 1 or in_channels != out_channels:
    params["ws"] = conv_init(ks[4], (out_channels, in_channels, 1, 1))
    params["bns"] = bn_init(ks[5])
  return params


# ---------------------------------- main ------------------------------------ #

if __name__ == "__main__":
  key = jax.random.PRNGKey(0)
  kx, kp = jax.random.split(key)

  N, Cin, H, W = 2, 4, 16, 16
  Cout, stride = 8, 2                 # exercises the 1x1 projection shortcut

  x = jax.random.normal(kx, (N, Cin, H, W), jnp.float32)
  params = init_params(kp, Cin, Cout, stride)

  fwd = jax.jit(functools.partial(basic_block_forward, stride=stride))
  out = jax.block_until_ready(fwd(x, params))

  ref = jax.block_until_ready(ref_forward(x, params, stride))
  assert out.shape == ref.shape == (N, Cout, H // stride, W // stride)
  # bf16 MXU operands with f32 accumulation -> loosened tolerance vs f32 ref.
  err = float(jnp.max(jnp.abs(out - ref)))
  tol = 5e-2 * (float(jnp.max(jnp.abs(ref))) + 1.0)
  assert err < tol, (err, tol)

  print("KERNEL_OK")
</pallas_src>

<mosaic_0001>
module attributes {stable_mosaic.version = 11 : i64} {
  func.func @kernel(%arg0: i32, %arg1: memref<4x9x9x128xbf16, #tpu.memory_space<vmem>>, %arg2: memref<9x128x128xbf16, #tpu.memory_space<vmem>>, %arg3: memref<1x128xf32, #tpu.memory_space<vmem>>, %arg4: memref<9x128x128xbf16, #tpu.memory_space<vmem>>, %arg5: memref<1x128xf32, #tpu.memory_space<vmem>>, %arg6: memref<128x128xbf16, #tpu.memory_space<vmem>>, %arg7: memref<1x8x8x128xf32, #tpu.memory_space<vmem>>, %arg8: memref<10x10x128xf32, #tpu.memory_space<vmem>>) attributes {dimension_semantics = [#tpu.dimension_semantics<parallel>], iteration_bounds = array<i64: 2>, scalar_prefetch = 0 : i64, scratch_operands = 1 : i64, tpu.core_type = #tpu.core_type<tc>, window_params = [{transform_indices = @transform_0, window_bounds = array<i64: 4, 9, 9, 128>}, {pipeline_mode = #tpu.pipeline_mode<synchronous>, transform_indices = @transform_1, window_bounds = array<i64: 9, 128, 128>}, {pipeline_mode = #tpu.pipeline_mode<synchronous>, transform_indices = @transform_2, window_bounds = array<i64: 1, 128>}, {pipeline_mode = #tpu.pipeline_mode<synchronous>, transform_indices = @transform_3, window_bounds = array<i64: 9, 128, 128>}, {pipeline_mode = #tpu.pipeline_mode<synchronous>, transform_indices = @transform_4, window_bounds = array<i64: 1, 128>}, {pipeline_mode = #tpu.pipeline_mode<synchronous>, transform_indices = @transform_5, window_bounds = array<i64: 128, 128>}, {transform_indices = @transform_6, window_bounds = array<i64: 1, 8, 8, 128>}]} {
    %cst = arith.constant 0.000000e+00 : f32
    %0 = vector.broadcast %cst : f32 to vector<64x128xf32>
    %c0 = arith.constant 0 : index
    %c0_0 = arith.constant 0 : index
    %c0_1 = arith.constant 0 : index
    %c0_2 = arith.constant 0 : index
    %1 = vector.load %arg1[%c0, %c0_0, %c0_1, %c0_2] : memref<4x9x9x128xbf16, #tpu.memory_space<vmem>>, vector<1x9x9x128xbf16>
    %2 = vector.shape_cast %1 : vector<1x9x9x128xbf16> to vector<9x9x128xbf16>
    %3 = arith.extf %2 : vector<9x9x128xbf16> to vector<9x9x128xf32>
    %4 = vector.extract_strided_slice %3 {offsets = [0, 0, 0], sizes = [8, 8, 128], strides = [1, 1, 1]} : vector<9x9x128xf32> to vector<8x8x128xf32>
    %5 = vector.shape_cast %4 : vector<8x8x128xf32> to vector<64x128xf32>
    %6 = arith.truncf %5 : vector<64x128xf32> to vector<64x128xbf16>
    %c0_3 = arith.constant 0 : index
    %c0_4 = arith.constant 0 : index
    %c0_5 = arith.constant 0 : index
    %7 = vector.load %arg2[%c0_3, %c0_4, %c0_5] : memref<9x128x128xbf16, #tpu.memory_space<vmem>>, vector<1x128x128xbf16>
    %8 = vector.shape_cast %7 : vector<1x128x128xbf16> to vector<128x128xbf16>
    %cst_6 = arith.constant dense<0.000000e+00> : vector<64x128xf32>
    %9 = tpu.matmul %6, %8, %cst_6 {dimension_numbers = #tpu.dot_dimension_numbers<[1], [0], [0], [1], [0, 0, 1, 1], [], []>} : vector<64x128xbf16>, vector<128x128xbf16>, vector<64x128xf32> -> vector<64x128xf32>
    %10 = arith.addf %0, %9 : vector<64x128xf32>
    %c1 = arith.constant 1 : index
    %c0_7 = arith.constant 0 : index
    %c0_8 = arith.constant 0 : index
    %c0_9 = arith.constant 0 : index
    %11 = vector.load %arg1[%c1, %c0_7, %c0_8, %c0_9] : memref<4x9x9x128xbf16, #tpu.memory_space<vmem>>, vector<1x9x9x128xbf16>
    %12 = vector.shape_cast %11 : vector<1x9x9x128xbf16> to vector<9x9x128xbf16>
    %13 = arith.extf %12 : vector<9x9x128xbf16> to vector<9x9x128xf32>
    %14 = vector.extract_strided_slice %13 {offsets = [0, 0, 0], sizes = [8, 8, 128], strides = [1, 1, 1]} : vector<9x9x128xf32> to vector<8x8x128xf32>
    %15 = vector.shape_cast %14 : vector<8x8x128xf32> to vector<64x128xf32>
    %16 = arith.truncf %15 : vector<64x128xf32> to vector<64x128xbf16>
    %c1_10 = arith.constant 1 : index
    %c0_11 = arith.constant 0 : index
    %c0_12 = arith.constant 0 : index
    %17 = vector.load %arg2[%c1_10, %c0_11, %c0_12] : memref<9x128x128xbf16, #tpu.memory_space<vmem>>, vector<1x128x128xbf16>
    %18 = vector.shape_cast %17 : vector<1x128x128xbf16> to vector<128x128xbf16>
    %cst_13 = arith.constant dense<0.000000e+00> : vector<64x128xf32>
    %19 = tpu.matmul %16, %18, %cst_13 {dimension_numbers = #tpu.dot_dimension_numbers<[1], [0], [0], [1], [0, 0, 1, 1], [], []>} : vector<64x128xbf16>, vector<128x128xbf16>, vector<64x128xf32> -> vector<64x128xf32>
    %20 = arith.addf %10, %19 : vector<64x128xf32>
    %c0_14 = arith.constant 0 : index
    %c0_15 = arith.constant 0 : index
    %c0_16 = arith.constant 0 : index
    %c0_17 = arith.constant 0 : index
    %21 = vector.load %arg1[%c0_14, %c0_15, %c0_16, %c0_17] : memref<4x9x9x128xbf16, #tpu.memory_space<vmem>>, vector<1x9x9x128xbf16>
    %22 = vector.shape_cast %21 : vector<1x9x9x128xbf16> to vector<9x9x128xbf16>
    %23 = arith.extf %22 : vector<9x9x128xbf16> to vector<9x9x128xf32>
    %24 = vector.extract_strided_slice %23 {offsets = [0, 1, 0], sizes = [8, 8, 128], strides = [1, 1, 1]} : vector<9x9x128xf32> to vector<8x8x128xf32>
    %25 = vector.shape_cast %24 : vector<8x8x128xf32> to vector<64x128xf32>
    %26 = arith.truncf %25 : vector<64x128xf32> to vector<64x128xbf16>
    %c2 = arith.constant 2 : index
    %c0_18 = arith.constant 0 : index
    %c0_19 = arith.constant 0 : index
    %27 = vector.load %arg2[%c2, %c0_18, %c0_19] : memref<9x128x128xbf16, #tpu.memory_space<vmem>>, vector<1x128x128xbf16>
    %28 = vector.shape_cast %27 : vector<1x128x128xbf16> to vector<128x128xbf16>
    %cst_20 = arith.constant dense<0.000000e+00> : vector<64x128xf32>
    %29 = tpu.matmul %26, %28, %cst_20 {dimension_numbers = #tpu.dot_dimension_numbers<[1], [0], [0], [1], [0, 0, 1, 1], [], []>} : vector<64x128xbf16>, vector<128x128xbf16>, vector<64x128xf32> -> vector<64x128xf32>
    %30 = arith.addf %20, %29 : vector<64x128xf32>
    %c2_21 = arith.constant 2 : index
    %c0_22 = arith.constant 0 : index
    %c0_23 = arith.constant 0 : index
    %c0_24 = arith.constant 0 : index
    %31 = vector.load %arg1[%c2_21, %c0_22, %c0_23, %c0_24] : memref<4x9x9x128xbf16, #tpu.memory_space<vmem>>, vector<1x9x9x128xbf16>
    %32 = vector.shape_cast %31 : vector<1x9x9x128xbf16> to vector<9x9x128xbf16>
    %33 = arith.extf %32 : vector<9x9x128xbf16> to vector<9x9x128xf32>
    %34 = vector.extract_strided_slice %33 {offsets = [0, 0, 0], sizes = [8, 8, 128], strides = [1, 1, 1]} : vector<9x9x128xf32> to vector<8x8x128xf32>
    %35 = vector.shape_cast %34 : vector<8x8x128xf32> to vector<64x128xf32>
    %36 = arith.truncf %35 : vector<64x128xf32> to vector<64x128xbf16>
    %c3 = arith.constant 3 : index
    %c0_25 = arith.constant 0 : index
    %c0_26 = arith.constant 0 : index
    %37 = vector.load %arg2[%c3, %c0_25, %c0_26] : memref<9x128x128xbf16, #tpu.memory_space<vmem>>, vector<1x128x128xbf16>
    %38 = vector.shape_cast %37 : vector<1x128x128xbf16> to vector<128x128xbf16>
    %cst_27 = arith.constant dense<0.000000e+00> : vector<64x128xf32>
    %39 = tpu.matmul %36, %38, %cst_27 {dimension_numbers = #tpu.dot_dimension_numbers<[1], [0], [0], [1], [0, 0, 1, 1], [], []>} : vector<64x128xbf16>, vector<128x128xbf16>, vector<64x128xf32> -> vector<64x128xf32>
    %40 = arith.addf %30, %39 : vector<64x128xf32>
    %c3_28 = arith.constant 3 : index
    %c0_29 = arith.constant 0 : index
    %c0_30 = arith.constant 0 : index
    %c0_31 = arith.constant 0 : index
    %41 = vector.load %arg1[%c3_28, %c0_29, %c0_30, %c0_31] : memref<4x9x9x128xbf16, #tpu.memory_space<vmem>>, vector<1x9x9x128xbf16>
    %42 = vector.shape_cast %41 : vector<1x9x9x128xbf16> to vector<9x9x128xbf16>
    %43 = arith.extf %42 : vector<9x9x128xbf16> to vector<9x9x128xf32>
    %44 = vector.extract_strided_slice %43 {offsets = [0, 0, 0], sizes = [8, 8, 128], strides = [1, 1, 1]} : vector<9x9x128xf32> to vector<8x8x128xf32>
    %45 = vector.shape_cast %44 : vector<8x8x128xf32> to vector<64x128xf32>
    %46 = arith.truncf %45 : vector<64x128xf32> to vector<64x128xbf16>
    %c4 = arith.constant 4 : index
    %c0_32 = arith.constant 0 : index
    %c0_33 = arith.constant 0 : index
    %47 = vector.load %arg2[%c4, %c0_32, %c0_33] : memref<9x128x128xbf16, #tpu.memory_space<vmem>>, vector<1x128x128xbf16>
    %48 = vector.shape_cast %47 : vector<1x128x128xbf16> to vector<128x128xbf16>
    %cst_34 = arith.constant dense<0.000000e+00> : vector<64x128xf32>
    %49 = tpu.matmul %46, %48, %cst_34 {dimension_numbers = #tpu.dot_dimension_numbers<[1], [0], [0], [1], [0, 0, 1, 1], [], []>} : vector<64x128xbf16>, vector<128x128xbf16>, vector<64x128xf32> -> vector<64x128xf32>
    %50 = arith.addf %40, %49 : vector<64x128xf32>
    %c2_35 = arith.constant 2 : index
    %c0_36 = arith.constant 0 : index
    %c0_37 = arith.constant 0 : index
    %c0_38 = arith.constant 0 : index
    %51 = vector.load %arg1[%c2_35, %c0_36, %c0_37, %c0_38] : memref<4x9x9x128xbf16, #tpu.memory_space<vmem>>, vector<1x9x9x128xbf16>
    %52 = vector.shape_cast %51 : vector<1x9x9x128xbf16> to vector<9x9x128xbf16>
    %53 = arith.extf %52 : vector<9x9x128xbf16> to vector<9x9x128xf32>
    %54 = vector.extract_strided_slice %53 {offsets = [0, 1, 0], sizes = [8, 8, 128], strides = [1, 1, 1]} : vector<9x9x128xf32> to vector<8x8x128xf32>
    %55 = vector.shape_cast %54 : vector<8x8x128xf32> to vector<64x128xf32>
    %56 = arith.truncf %55 : vector<64x128xf32> to vector<64x128xbf16>
    %c5 = arith.constant 5 : index
    %c0_39 = arith.constant 0 : index
    %c0_40 = arith.constant 0 : index
    %57 = vector.load %arg2[%c5, %c0_39, %c0_40] : memref<9x128x128xbf16, #tpu.memory_space<vmem>>, vector<1x128x128xbf16>
    %58 = vector.shape_cast %57 : vector<1x128x128xbf16> to vector<128x128xbf16>
    %cst_41 = arith.constant dense<0.000000e+00> : vector<64x128xf32>
    %59 = tpu.matmul %56, %58, %cst_41 {dimension_numbers = #tpu.dot_dimension_numbers<[1], [0], [0], [1], [0, 0, 1, 1], [], []>} : vector<64x128xbf16>, vector<128x128xbf16>, vector<64x128xf32> -> vector<64x128xf32>
    %60 = arith.addf %50, %59 : vector<64x128xf32>
    %c0_42 = arith.constant 0 : index
    %c0_43 = arith.constant 0 : index
    %c0_44 = arith.constant 0 : index
    %c0_45 = arith.constant 0 : index
    %61 = vector.load %arg1[%c0_42, %c0_43, %c0_44, %c0_45] : memref<4x9x9x128xbf16, #tpu.memory_space<vmem>>, vector<1x9x9x128xbf16>
    %62 = vector.shape_cast %61 : vector<1x9x9x128xbf16> to vector<9x9x128xbf16>
    %63 = arith.extf %62 : vector<9x9x128xbf16> to vector<9x9x128xf32>
    %64 = vector.extract_strided_slice %63 {offsets = [1, 0, 0], sizes = [8, 8, 128], strides = [1, 1, 1]} : vector<9x9x128xf32> to vector<8x8x128xf32>
    %65 = vector.shape_cast %64 : vector<8x8x128xf32> to vector<64x128xf32>
    %66 = arith.truncf %65 : vector<64x128xf32> to vector<64x128xbf16>
    %c6 = arith.constant 6 : index
    %c0_46 = arith.constant 0 : index
    %c0_47 = arith.constant 0 : index
    %67 = vector.load %arg2[%c6, %c0_46, %c0_47] : memref<9x128x128xbf16, #tpu.memory_space<vmem>>, vector<1x128x128xbf16>
    %68 = vector.shape_cast %67 : vector<1x128x128xbf16> to vector<128x128xbf16>
    %cst_48 = arith.constant dense<0.000000e+00> : vector<64x128xf32>
    %69 = tpu.matmul %66, %68, %cst_48 {dimension_numbers = #tpu.dot_dimension_numbers<[1], [0], [0], [1], [0, 0, 1, 1], [], []>} : vector<64x128xbf16>, vector<128x128xbf16>, vector<64x128xf32> -> vector<64x128xf32>
    %70 = arith.addf %60, %69 : vector<64x128xf32>
    %c1_49 = arith.constant 1 : index
    %c0_50 = arith.constant 0 : index
    %c0_51 = arith.constant 0 : index
    %c0_52 = arith.constant 0 : index
    %71 = vector.load %arg1[%c1_49, %c0_50, %c0_51, %c0_52] : memref<4x9x9x128xbf16, #tpu.memory_space<vmem>>, vector<1x9x9x128xbf16>
    %72 = vector.shape_cast %71 : vector<1x9x9x128xbf16> to vector<9x9x128xbf16>
    %73 = arith.extf %72 : vector<9x9x128xbf16> to vector<9x9x128xf32>
    %74 = vector.extract_strided_slice %73 {offsets = [1, 0, 0], sizes = [8, 8, 128], strides = [1, 1, 1]} : vector<9x9x128xf32> to vector<8x8x128xf32>
    %75 = vector.shape_cast %74 : vector<8x8x128xf32> to vector<64x128xf32>
    %76 = arith.truncf %75 : vector<64x128xf32> to vector<64x128xbf16>
    %c7 = arith.constant 7 : index
    %c0_53 = arith.constant 0 : index
    %c0_54 = arith.constant 0 : index
    %77 = vector.load %arg2[%c7, %c0_53, %c0_54] : memref<9x128x128xbf16, #tpu.memory_space<vmem>>, vector<1x128x128xbf16>
    %78 = vector.shape_cast %77 : vector<1x128x128xbf16> to vector<128x128xbf16>
    %cst_55 = arith.constant dense<0.000000e+00> : vector<64x128xf32>
    %79 = tpu.matmul %76, %78, %cst_55 {dimension_numbers = #tpu.dot_dimension_numbers<[1], [0], [0], [1], [0, 0, 1, 1], [], []>} : vector<64x128xbf16>, vector<128x128xbf16>, vector<64x128xf32> -> vector<64x128xf32>
    %80 = arith.addf %70, %79 : vector<64x128xf32>
    %c0_56 = arith.constant 0 : index
    %c0_57 = arith.constant 0 : index
    %c0_58 = arith.constant 0 : index
    %c0_59 = arith.constant 0 : index
    %81 = vector.load %arg1[%c0_56, %c0_57, %c0_58, %c0_59] : memref<4x9x9x128xbf16, #tpu.memory_space<vmem>>, vector<1x9x9x128xbf16>
    %82 = vector.shape_cast %81 : vector<1x9x9x128xbf16> to vector<9x9x128xbf16>
    %83 = arith.extf %82 : vector<9x9x128xbf16> to vector<9x9x128xf32>
    %84 = vector.extract_strided_slice %83 {offsets = [1, 1, 0], sizes = [8, 8, 128], strides = [1, 1, 1]} : vector<9x9x128xf32> to vector<8x8x128xf32>
    %85 = vector.shape_cast %84 : vector<8x8x128xf32> to vector<64x128xf32>
    %86 = arith.truncf %85 : vector<64x128xf32> to vector<64x128xbf16>
    %c8 = arith.constant 8 : index
    %c0_60 = arith.constant 0 : index
    %c0_61 = arith.constant 0 : index
    %87 = vector.load %arg2[%c8, %c0_60, %c0_61] : memref<9x128x128xbf16, #tpu.memory_space<vmem>>, vector<1x128x128xbf16>
    %88 = vector.shape_cast %87 : vector<1x128x128xbf16> to vector<128x128xbf16>
    %cst_62 = arith.constant dense<0.000000e+00> : vector<64x128xf32>
    %89 = tpu.matmul %86, %88, %cst_62 {dimension_numbers = #tpu.dot_dimension_numbers<[1], [0], [0], [1], [0, 0, 1, 1], [], []>} : vector<64x128xbf16>, vector<128x128xbf16>, vector<64x128xf32> -> vector<64x128xf32>
    %90 = arith.addf %80, %89 : vector<64x128xf32>
    %c0_63 = arith.constant 0 : index
    %c0_64 = arith.constant 0 : index
    %91 = vector.load %arg3[%c0_63, %c0_64] : memref<1x128xf32, #tpu.memory_space<vmem>>, vector<1x128xf32>
    %92 = vector.broadcast %91 : vector<1x128xf32> to vector<64x128xf32>
    %93 = arith.addf %90, %92 : vector<64x128xf32>
    %cst_65 = arith.constant 0.000000e+00 : f32
    %94 = vector.broadcast %cst_65 : f32 to vector<64x128xf32>
    %95 = arith.maximumf %93, %94 : vector<64x128xf32>
    %cst_66 = arith.constant 0.000000e+00 : f32
    %96 = vector.broadcast %cst_66 : f32 to vector<10x10x128xf32>
    %c0_67 = arith.constant 0 : index
    %c0_68 = arith.constant 0 : index
    %c0_69 = arith.constant 0 : index
    %97 = vector.load %arg8[%c0_67, %c0_68, %c0_69] : memref<10x10x128xf32, #tpu.memory_space<vmem>>, vector<10x10x128xf32>
    tpu.vector_store %arg8[%c0_67, %c0_68, %c0_69], %96 {strides = array<i32>} : memref<10x10x128xf32, #tpu.memory_space<vmem>>, vector<10x10x128xf32>,
    %98 = vector.shape_cast %95 : vector<64x128xf32> to vector<8x8x128xf32>
    %c1_70 = arith.constant 1 : index
    %c1_71 = arith.constant 1 : index
    %c0_72 = arith.constant 0 : index
    %99 = vector.load %arg8[%c1_70, %c1_71, %c0_72] : memref<10x10x128xf32, #tpu.memory_space<vmem>>, vector<8x8x128xf32>
    tpu.vector_store %arg8[%c1_70, %c1_71, %c0_72], %98 {strides = array<i32>} : memref<10x10x128xf32, #tpu.memory_space<vmem>>, vector<8x8x128xf32>,
    %c0_73 = arith.constant 0 : index
    %c0_74 = arith.constant 0 : index
    %c0_75 = arith.constant 0 : index
    %100 = vector.load %arg8[%c0_73, %c0_74, %c0_75] : memref<10x10x128xf32, #tpu.memory_space<vmem>>, vector<10x10x128xf32>
    %cst_76 = arith.constant 0.000000e+00 : f32
    %101 = vector.broadcast %cst_76 : f32 to vector<64x128xf32>
    %102 = vector.extract_strided_slice %100 {offsets = [0, 0, 0], sizes = [8, 8, 128], strides = [1, 1, 1]} : vector<10x10x128xf32> to vector<8x8x128xf32>
    %103 = vector.shape_cast %102 : vector<8x8x128xf32> to vector<64x128xf32>
    %104 = arith.truncf %103 : vector<64x128xf32> to vector<64x128xbf16>
    %c0_77 = arith.constant 0 : index
    %c0_78 = arith.constant 0 : index
    %c0_79 = arith.constant 0 : index
    %105 = vector.load %arg4[%c0_77, %c0_78, %c0_79] : memref<9x128x128xbf16, #tpu.memory_space<vmem>>, vector<1x128x128xbf16>
    %106 = vector.shape_cast %105 : vector<1x128x128xbf16> to vector<128x128xbf16>
    %cst_80 = arith.constant dense<0.000000e+00> : vector<64x128xf32>
    %107 = tpu.matmul %104, %106, %cst_80 {dimension_numbers = #tpu.dot_dimension_numbers<[1], [0], [0], [1], [0, 0, 1, 1], [], []>} : vector<64x128xbf16>, vector<128x128xbf16>, vector<64x128xf32> -> vector<64x128xf32>
    %108 = arith.addf %101, %107 : vector<64x128xf32>
    %109 = vector.extract_strided_slice %100 {offsets = [0, 1, 0], sizes = [8, 8, 128], strides = [1, 1, 1]} : vector<10x10x128xf32> to vector<8x8x128xf32>
    %110 = vector.shape_cast %109 : vector<8x8x128xf32> to vector<64x128xf32>
    %111 = arith.truncf %110 : vector<64x128xf32> to vector<64x128xbf16>
    %c1_81 = arith.constant 1 : index
    %c0_82 = arith.constant 0 : index
    %c0_83 = arith.constant 0 : index
    %112 = vector.load %arg4[%c1_81, %c0_82, %c0_83] : memref<9x128x128xbf16, #tpu.memory_space<vmem>>, vector<1x128x128xbf16>
    %113 = vector.shape_cast %112 : vector<1x128x128xbf16> to vector<128x128xbf16>
    %cst_84 = arith.constant dense<0.000000e+00> : vector<64x128xf32>
    %114 = tpu.matmul %111, %113, %cst_84 {dimension_numbers = #tpu.dot_dimension_numbers<[1], [0], [0], [1], [0, 0, 1, 1], [], []>} : vector<64x128xbf16>, vector<128x128xbf16>, vector<64x128xf32> -> vector<64x128xf32>
    %115 = arith.addf %108, %114 : vector<64x128xf32>
    %116 = vector.extract_strided_slice %100 {offsets = [0, 2, 0], sizes = [8, 8, 128], strides = [1, 1, 1]} : vector<10x10x128xf32> to vector<8x8x128xf32>
    %117 = vector.shape_cast %116 : vector<8x8x128xf32> to vector<64x128xf32>
    %118 = arith.truncf %117 : vector<64x128xf32> to vector<64x128xbf16>
    %c2_85 = arith.constant 2 : index
    %c0_86 = arith.constant 0 : index
    %c0_87 = arith.constant 0 : index
    %119 = vector.load %arg4[%c2_85, %c0_86, %c0_87] : memref<9x128x128xbf16, #tpu.memory_space<vmem>>, vector<1x128x128xbf16>
    %120 = vector.shape_cast %119 : vector<1x128x128xbf16> to vector<128x128xbf16>
    %cst_88 = arith.constant dense<0.000000e+00> : vector<64x128xf32>
    %121 = tpu.matmul %118, %120, %cst_88 {dimension_numbers = #tpu.dot_dimension_numbers<[1], [0], [0], [1], [0, 0, 1, 1], [], []>} : vector<64x128xbf16>, vector<128x128xbf16>, vector<64x128xf32> -> vector<64x128xf32>
    %122 = arith.addf %115, %121 : vector<64x128xf32>
    %123 = vector.extract_strided_slice %100 {offsets = [1, 0, 0], sizes = [8, 8, 128], strides = [1, 1, 1]} : vector<10x10x128xf32> to vector<8x8x128xf32>
    %124 = vector.shape_cast %123 : vector<8x8x128xf32> to vector<64x128xf32>
    %125 = arith.truncf %124 : vector<64x128xf32> to vector<64x128xbf16>
    %c3_89 = arith.constant 3 : index
    %c0_90 = arith.constant 0 : index
    %c0_91 = arith.constant 0 : index
    %126 = vector.load %arg4[%c3_89, %c0_90, %c0_91] : memref<9x128x128xbf16, #tpu.memory_space<vmem>>, vector<1x128x128xbf16>
    %127 = vector.shape_cast %126 : vector<1x128x128xbf16> to vector<128x128xbf16>
    %cst_92 = arith.constant dense<0.000000e+00> : vector<64x128xf32>
    %128 = tpu.matmul %125, %127, %cst_92 {dimension_numbers = #tpu.dot_dimension_numbers<[1], [0], [0], [1], [0, 0, 1, 1], [], []>} : vector<64x128xbf16>, vector<128x128xbf16>, vector<64x128xf32> -> vector<64x128xf32>
    %129 = arith.addf %122, %128 : vector<64x128xf32>
    %130 = vector.extract_strided_slice %100 {offsets = [1, 1, 0], sizes = [8, 8, 128], strides = [1, 1, 1]} : vector<10x10x128xf32> to vector<8x8x128xf32>
    %131 = vector.shape_cast %130 : vector<8x8x128xf32> to vector<64x128xf32>
    %132 = arith.truncf %131 : vector<64x128xf32> to vector<64x128xbf16>
    %c4_93 = arith.constant 4 : index
    %c0_94 = arith.constant 0 : index
    %c0_95 = arith.constant 0 : index
    %133 = vector.load %arg4[%c4_93, %c0_94, %c0_95] : memref<9x128x128xbf16, #tpu.memory_space<vmem>>, vector<1x128x128xbf16>
    %134 = vector.shape_cast %133 : vector<1x128x128xbf16> to vector<128x128xbf16>
    %cst_96 = arith.constant dense<0.000000e+00> : vector<64x128xf32>
    %135 = tpu.matmul %132, %134, %cst_96 {dimension_numbers = #tpu.dot_dimension_numbers<[1], [0], [0], [1], [0, 0, 1, 1], [], []>} : vector<64x128xbf16>, vector<128x128xbf16>, vector<64x128xf32> -> vector<64x128xf32>
    %136 = arith.addf %129, %135 : vector<64x128xf32>
    %137 = vector.extract_strided_slice %100 {offsets = [1, 2, 0], sizes = [8, 8, 128], strides = [1, 1, 1]} : vector<10x10x128xf32> to vector<8x8x128xf32>
    %138 = vector.shape_cast %137 : vector<8x8x128xf32> to vector<64x128xf32>
    %139 = arith.truncf %138 : vector<64x128xf32> to vector<64x128xbf16>
    %c5_97 = arith.constant 5 : index
    %c0_98 = arith.constant 0 : index
    %c0_99 = arith.constant 0 : index
    %140 = vector.load %arg4[%c5_97, %c0_98, %c0_99] : memref<9x128x128xbf16, #tpu.memory_space<vmem>>, vector<1x128x128xbf16>
    %141 = vector.shape_cast %140 : vector<1x128x128xbf16> to vector<128x128xbf16>
    %cst_100 = arith.constant dense<0.000000e+00> : vector<64x128xf32>
    %142 = tpu.matmul %139, %141, %cst_100 {dimension_numbers = #tpu.dot_dimension_numbers<[1], [0], [0], [1], [0, 0, 1, 1], [], []>} : vector<64x128xbf16>, vector<128x128xbf16>, vector<64x128xf32> -> vector<64x128xf32>
    %143 = arith.addf %136, %142 : vector<64x128xf32>
    %144 = vector.extract_strided_slice %100 {offsets = [2, 0, 0], sizes = [8, 8, 128], strides = [1, 1, 1]} : vector<10x10x128xf32> to vector<8x8x128xf32>
    %145 = vector.shape_cast %144 : vector<8x8x128xf32> to vector<64x128xf32>
    %146 = arith.truncf %145 : vector<64x128xf32> to vector<64x128xbf16>
    %c6_101 = arith.constant 6 : index
    %c0_102 = arith.constant 0 : index
    %c0_103 = arith.constant 0 : index
    %147 = vector.load %arg4[%c6_101, %c0_102, %c0_103] : memref<9x128x128xbf16, #tpu.memory_space<vmem>>, vector<1x128x128xbf16>
    %148 = vector.shape_cast %147 : vector<1x128x128xbf16> to vector<128x128xbf16>
    %cst_104 = arith.constant dense<0.000000e+00> : vector<64x128xf32>
    %149 = tpu.matmul %146, %148, %cst_104 {dimension_numbers = #tpu.dot_dimension_numbers<[1], [0], [0], [1], [0, 0, 1, 1], [], []>} : vector<64x128xbf16>, vector<128x128xbf16>, vector<64x128xf32> -> vector<64x128xf32>
    %150 = arith.addf %143, %149 : vector<64x128xf32>
    %151 = vector.extract_strided_slice %100 {offsets = [2, 1, 0], sizes = [8, 8, 128], strides = [1, 1, 1]} : vector<10x10x128xf32> to vector<8x8x128xf32>
    %152 = vector.shape_cast %151 : vector<8x8x128xf32> to vector<64x128xf32>
    %153 = arith.truncf %152 : vector<64x128xf32> to vector<64x128xbf16>
    %c7_105 = arith.constant 7 : index
    %c0_106 = arith.constant 0 : index
    %c0_107 = arith.constant 0 : index
    %154 = vector.load %arg4[%c7_105, %c0_106, %c0_107] : memref<9x128x128xbf16, #tpu.memory_space<vmem>>, vector<1x128x128xbf16>
    %155 = vector.shape_cast %154 : vector<1x128x128xbf16> to vector<128x128xbf16>
    %cst_108 = arith.constant dense<0.000000e+00> : vector<64x128xf32>
    %156 = tpu.matmul %153, %155, %cst_108 {dimension_numbers = #tpu.dot_dimension_numbers<[1], [0], [0], [1], [0, 0, 1, 1], [], []>} : vector<64x128xbf16>, vector<128x128xbf16>, vector<64x128xf32> -> vector<64x128xf32>
    %157 = arith.addf %150, %156 : vector<64x128xf32>
    %158 = vector.extract_strided_slice %100 {offsets = [2, 2, 0], sizes = [8, 8, 128], strides = [1, 1, 1]} : vector<10x10x128xf32> to vector<8x8x128xf32>
    %159 = vector.shape_cast %158 : vector<8x8x128xf32> to vector<64x128xf32>
    %160 = arith.truncf %159 : vector<64x128xf32> to vector<64x128xbf16>
    %c8_109 = arith.constant 8 : index
    %c0_110 = arith.constant 0 : index
    %c0_111 = arith.constant 0 : index
    %161 = vector.load %arg4[%c8_109, %c0_110, %c0_111] : memref<9x128x128xbf16, #tpu.memory_space<vmem>>, vector<1x128x128xbf16>
    %162 = vector.shape_cast %161 : vector<1x128x128xbf16> to vector<128x128xbf16>
    %cst_112 = arith.constant dense<0.000000e+00> : vector<64x128xf32>
    %163 = tpu.matmul %160, %162, %cst_112 {dimension_numbers = #tpu.dot_dimension_numbers<[1], [0], [0], [1], [0, 0, 1, 1], [], []>} : vector<64x128xbf16>, vector<128x128xbf16>, vector<64x128xf32> -> vector<64x128xf32>
    %164 = arith.addf %157, %163 : vector<64x128xf32>
    %c3_113 = arith.constant 3 : index
    %c0_114 = arith.constant 0 : index
    %c0_115 = arith.constant 0 : index
    %c0_116 = arith.constant 0 : index
    %165 = vector.load %arg1[%c3_113, %c0_114, %c0_115, %c0_116] : memref<4x9x9x128xbf16, #tpu.memory_space<vmem>>, vector<1x9x9x128xbf16>
    %166 = vector.shape_cast %165 : vector<1x9x9x128xbf16> to vector<9x9x128xbf16>
    %167 = arith.extf %166 : vector<9x9x128xbf16> to vector<9x9x128xf32>
    %168 = vector.extract_strided_slice %167 {offsets = [0, 0, 0], sizes = [8, 8, 128], strides = [1, 1, 1]} : vector<9x9x128xf32> to vector<8x8x128xf32>
    %169 = vector.shape_cast %168 : vector<8x8x128xf32> to vector<64x128xf32>
    %170 = arith.truncf %169 : vector<64x128xf32> to vector<64x128xbf16>
    %c0_117 = arith.constant 0 : index
    %c0_118 = arith.constant 0 : index
    %171 = vector.load %arg6[%c0_117, %c0_118] : memref<128x128xbf16, #tpu.memory_space<vmem>>, vector<128x128xbf16>
    %cst_119 = arith.constant dense<0.000000e+00> : vector<64x128xf32>
    %172 = tpu.matmul %170, %171, %cst_119 {dimension_numbers = #tpu.dot_dimension_numbers<[1], [0], [0], [1], [0, 0, 1, 1], [], []>} : vector<64x128xbf16>, vector<128x128xbf16>, vector<64x128xf32> -> vector<64x128xf32>
    %173 = arith.addf %164, %172 : vector<64x128xf32>
    %c0_120 = arith.constant 0 : index
    %c0_121 = arith.constant 0 : index
    %174 = vector.load %arg5[%c0_120, %c0_121] : memref<1x128xf32, #tpu.memory_space<vmem>>, vector<1x128xf32>
    %175 = vector.broadcast %174 : vector<1x128xf32> to vector<64x128xf32>
    %176 = arith.addf %173, %175 : vector<64x128xf32>
    %cst_122 = arith.constant 0.000000e+00 : f32
    %177 = vector.broadcast %cst_122 : f32 to vector<64x128xf32>
    %178 = arith.maximumf %176, %177 : vector<64x128xf32>
    %179 = vector.shape_cast %178 : vector<64x128xf32> to vector<1x8x8x128xf32>
    %c0_123 = arith.constant 0 : index
    %c0_124 = arith.constant 0 : index
    %c0_125 = arith.constant 0 : index
    %c0_126 = arith.constant 0 : index
    %180 = vector.load %arg7[%c0_123, %c0_124, %c0_125, %c0_126] : memref<1x8x8x128xf32, #tpu.memory_space<vmem>>, vector<1x8x8x128xf32>
    tpu.vector_store %arg7[%c0_123, %c0_124, %c0_125, %c0_126], %179 {strides = array<i32>} : memref<1x8x8x128xf32, #tpu.memory_space<vmem>>, vector<1x8x8x128xf32>,
    return
  }
  func.func @transform_0(%arg0: i32) -> (i32, i32, i32, i32) {
    %c0_i32 = arith.constant 0 : i32
    %c0_i32_0 = arith.constant 0 : i32
    %c0_i32_1 = arith.constant 0 : i32
    %c0_i32_2 = arith.constant 0 : i32
    return %arg0, %c0_i32, %c0_i32_0, %c0_i32_1 : i32, i32, i32, i32
  }
  func.func @transform_1(%arg0: i32) -> (i32, i32, i32) {
    %c0_i32 = arith.constant 0 : i32
    %c0_i32_0 = arith.constant 0 : i32
    %c0_i32_1 = arith.constant 0 : i32
    %c0_i32_2 = arith.constant 0 : i32
    return %c0_i32, %c0_i32_0, %c0_i32_1 : i32, i32, i32
  }
  func.func @transform_2(%arg0: i32) -> (i32, i32) {
    %c0_i32 = arith.constant 0 : i32
    %c0_i32_0 = arith.constant 0 : i32
    %c0_i32_1 = arith.constant 0 : i32
    return %c0_i32, %c0_i32_0 : i32, i32
  }
  func.func @transform_3(%arg0: i32) -> (i32, i32, i32) {
    %c0_i32 = arith.constant 0 : i32
    %c0_i32_0 = arith.constant 0 : i32
    %c0_i32_1 = arith.constant 0 : i32
    %c0_i32_2 = arith.constant 0 : i32
    return %c0_i32, %c0_i32_0, %c0_i32_1 : i32, i32, i32
  }
  func.func @transform_4(%arg0: i32) -> (i32, i32) {
    %c0_i32 = arith.constant 0 : i32
    %c0_i32_0 = arith.constant 0 : i32
    %c0_i32_1 = arith.constant 0 : i32
    return %c0_i32, %c0_i32_0 : i32, i32
  }
  func.func @transform_5(%arg0: i32) -> (i32, i32) {
    %c0_i32 = arith.constant 0 : i32
    %c0_i32_0 = arith.constant 0 : i32
    %c0_i32_1 = arith.constant 0 : i32
    return %c0_i32, %c0_i32_0 : i32, i32
  }
  func.func @transform_6(%arg0: i32) -> (i32, i32, i32, i32) {
    %c0_i32 = arith.constant 0 : i32
    %c0_i32_0 = arith.constant 0 : i32
    %c0_i32_1 = arith.constant 0 : i32
    %c0_i32_2 = arith.constant 0 : i32
    return %arg0, %c0_i32, %c0_i32_0, %c0_i32_1 : i32, i32, i32, i32
  }
}

</mosaic_0001>

<llo_original>
// kernel: basic_block_forward.1
$region0: #{basic_block_forward.1}
  #allocation0 [shape = 'u32[]', space=smem, size = 0x4, offset = 0x4, fixed_abs, tag = 'smem constant byte address 0x4 - core index']
  #allocation1 [shape = 'u32[144,128]{1,0:T(1,128)}', space=vmem, size = 0x12000, scoped, tag = 'internal scratch']
  #allocation2 [shape = 'f32[10,10,128]{2,1,0:T(8,128)}', space=vmem, size = 0x14000, scoped, tag = 'scratch operand']
  %s0 = inlined_call_operand.vmem [shape: bf16[8,9,9,128], index: 0, kind: input, shape index: {}]
  %s1 = inlined_call_operand.vmem [shape: bf16[9,128,128], index: 1, kind: input, shape index: {}]
  %s2 = inlined_call_operand.vmem [shape: f32[1,128], index: 2, kind: input, shape index: {}]
  %s3 = inlined_call_operand.vmem [shape: bf16[9,128,128], index: 3, kind: input, shape index: {}]
  %s4 = inlined_call_operand.vmem [shape: f32[1,128], index: 4, kind: input, shape index: {}]
  %s5 = inlined_call_operand.vmem [shape: bf16[128,128], index: 5, kind: input, shape index: {}]
  %s6 = inlined_call_operand.vmem [shape: f32[2,8,8,128], index: 6, kind: output, shape index: {}]
  %s7 = sld [smem:[#allocation0]]
  $region57: #{basic_block_forward.1} parent=0
    _
  %s9 = ssub.s32 1, %s7
  %s10 = scalar_select 0, %s9, %s7
  loop: start=0, step=1, limit=4
  $region2: #{basic_block_forward.1} parent=0 // loop_pre_header
    _
  $region3: #{basic_block_forward.1} parent=0 // loop_header
    %s12 = sphi 0, %s16
    %p13 = scmp.ge.s32.totalorder %s12, 4
    %s22 = sphi 0, %s24
    %s25 = sphi 0, %s22
    %s26 = sphi 0, %s25
    %s42 = sphi 0, %s26
    %s46 = sphi 0, %s46
    %s48 = sphi 0, %s46
    %s49 = sphi 0, %s48
    %s63 = sphi 0, %s49
    %s67 = sphi 0, %s67
    %s69 = sphi 0, %s67
    %s70 = sphi 0, %s69
    %s84 = sphi 0, %s70
    %s88 = sphi 0, %s88
    %s90 = sphi 0, %s88
    %s91 = sphi 0, %s90
    %s105 = sphi 0, %s91
    %s109 = sphi 0, %s109
    %s111 = sphi 0, %s109
    %s112 = sphi 0, %s111
    %s126 = sphi 0, %s112
    %s130 = sphi 0, %s130
    %s132 = sphi 0, %s130
    %s133 = sphi 0, %s132
    %s147 = sphi 0, %s133
    %s153 = sphi 0, %s155
    %s156 = sphi 0, %s153
    %s157 = sphi 0, %s156
    %s173 = sphi 0, %s157
  $region4: #{basic_block_forward.1} parent=0 // loop_header_branch
    %15 = sbr.rel (%p13) target = $region8
  $region5: #{basic_block_forward.1} parent=0 // loop_body
    %s17 = ssub.s32 %s12, 1
    %s18 = ssub.s32 %s12, 2
    %s19 = sadd.s32 %s12, 1
    %s20 = ssub.s32 %s12, %s19
    %p21 = scmp.eq.s32.totalorder %s20, 0
    %s23 = sadd.s32 %s22, 1
    %s24 = scalar_select %p21, %s22, %s23
    %p27 = pneg %p21
    %p28 = scmp.eq.s32.totalorder %s12, 1
    %p29 = por %p27, %p28
    %p30 = scmp.ne.s32.totalorder %s22, %s25
    %p31 = scmp.eq.s32.totalorder %s12, 0
    %p32 = por %p30, %p31
    %p33 = scmp.ne.s32.totalorder %s22, %s25
    %p34 = scmp.eq.s32.totalorder %s17, 1
    %p35 = por %p33, %p34
    %p36 = scmp.ne.s32.totalorder %s25, %s26
    %p37 = scmp.eq.s32.totalorder %s17, 0
    %p38 = por %p36, %p37
    %p39 = scmp.ne.s32.totalorder %s25, %s26
    %p40 = scmp.eq.s32.totalorder %s18, 1
    %p41 = por %p39, %p40
    %p43 = scmp.ne.s32.totalorder %s26, %s42
    %p44 = scmp.eq.s32.totalorder %s18, 0
    %p45 = por %p43, %p44
    %s47 = sadd.s32 %s46, 1
    %p50 = scmp.eq.s32.totalorder %s12, 1
    %p51 = scmp.ne.s32.totalorder %s46, %s48
    %p52 = scmp.eq.s32.totalorder %s12, 0
    %p53 = por %p51, %p52
    %p54 = scmp.ne.s32.totalorder %s46, %s48
    %p55 = scmp.eq.s32.totalorder %s17, 1
    %p56 = por %p54, %p55
    %p57 = scmp.ne.s32.totalorder %s48, %s49
    %p58 = scmp.eq.s32.totalorder %s17, 0
    %p59 = por %p57, %p58
    %p60 = scmp.ne.s32.totalorder %s48, %s49
    %p61 = scmp.eq.s32.totalorder %s18, 1
    %p62 = por %p60, %p61
    %p64 = scmp.ne.s32.totalorder %s49, %s63
    %p65 = scmp.eq.s32.totalorder %s18, 0
    %p66 = por %p64, %p65
    %s68 = sadd.s32 %s67, 1
    %p71 = scmp.eq.s32.totalorder %s12, 1
    %p72 = scmp.ne.s32.totalorder %s67, %s69
    %p73 = scmp.eq.s32.totalorder %s12, 0
    %p74 = por %p72, %p73
    %p75 = scmp.ne.s32.totalorder %s67, %s69
    %p76 = scmp.eq.s32.totalorder %s17, 1
    %p77 = por %p75, %p76
    %p78 = scmp.ne.s32.totalorder %s69, %s70
    %p79 = scmp.eq.s32.totalorder %s17, 0
    %p80 = por %p78, %p79
    %p81 = scmp.ne.s32.totalorder %s69, %s70
    %p82 = scmp.eq.s32.totalorder %s18, 1
    %p83 = por %p81, %p82
    %p85 = scmp.ne.s32.totalorder %s70, %s84
    %p86 = scmp.eq.s32.totalorder %s18, 0
    %p87 = por %p85, %p86
    %s89 = sadd.s32 %s88, 1
    %p92 = scmp.eq.s32.totalorder %s12, 1
    %p93 = scmp.ne.s32.totalorder %s88, %s90
    %p94 = scmp.eq.s32.totalorder %s12, 0
    %p95 = por %p93, %p94
    %p96 = scmp.ne.s32.totalorder %s88, %s90
    %p97 = scmp.eq.s32.totalorder %s17, 1
    %p98 = por %p96, %p97
    %p99 = scmp.ne.s32.totalorder %s90, %s91
    %p100 = scmp.eq.s32.totalorder %s17, 0
    %p101 = por %p99, %p100
    %p102 = scmp.ne.s32.totalorder %s90, %s91
    %p103 = scmp.eq.s32.totalorder %s18, 1
    %p104 = por %p102, %p103
    %p106 = scmp.ne.s32.totalorder %s91, %s105
    %p107 = scmp.eq.s32.totalorder %s18, 0
    %p108 = por %p106, %p107
    %s110 = sadd.s32 %s109, 1
    %p113 = scmp.eq.s32.totalorder %s12, 1
    %p114 = scmp.ne.s32.totalorder %s109, %s111
    %p115 = scmp.eq.s32.totalorder %s12, 0
    %p116 = por %p114, %p115
    %p117 = scmp.ne.s32.totalorder %s109, %s111
    %p118 = scmp.eq.s32.totalorder %s17, 1
    %p119 = por %p117, %p118
    %p120 = scmp.ne.s32.totalorder %s111, %s112
    %p121 = scmp.eq.s32.totalorder %s17, 0
    %p122 = por %p120, %p121
    %p123 = scmp.ne.s32.totalorder %s111, %s112
    %p124 = scmp.eq.s32.totalorder %s18, 1
    %p125 = por %p123, %p124
    %p127 = scmp.ne.s32.totalorder %s112, %s126
    %p128 = scmp.eq.s32.totalorder %s18, 0
    %p129 = por %p127, %p128
    %s131 = sadd.s32 %s130, 1
    %p134 = scmp.eq.s32.totalorder %s12, 1
    %p135 = scmp.ne.s32.totalorder %s130, %s132
    %p136 = scmp.eq.s32.totalorder %s12, 0
    %p137 = por %p135, %p136
    %p138 = scmp.ne.s32.totalorder %s130, %s132
    %p139 = scmp.eq.s32.totalorder %s17, 1
    %p140 = por %p138, %p139
    %p141 = scmp.ne.s32.totalorder %s132, %s133
    %p142 = scmp.eq.s32.totalorder %s17, 0
    %p143 = por %p141, %p142
    %p144 = scmp.ne.s32.totalorder %s132, %s133
    %p145 = scmp.eq.s32.totalorder %s18, 1
    %p146 = por %p144, %p145
    %p148 = scmp.ne.s32.totalorder %s133, %s147
    %p149 = scmp.eq.s32.totalorder %s18, 0
    %p150 = por %p148, %p149
    %s151 = ssub.s32 %s12, %s19
    %p152 = scmp.eq.s32.totalorder %s151, 0
    %s154 = sadd.s32 %s153, 1
    %s155 = scalar_select %p152, %s153, %s154
    %p158 = pneg %p152
    %p159 = scmp.eq.s32.totalorder %s12, 1
    %p160 = por %p158, %p159
    %p161 = scmp.ne.s32.totalorder %s153, %s156
    %p162 = scmp.eq.s32.totalorder %s12, 0
    %p163 = por %p161, %p162
    %p164 = scmp.ne.s32.totalorder %s153, %s156
    %p165 = scmp.eq.s32.totalorder %s17, 1
    %p166 = por %p164, %p165
    %p167 = scmp.ne.s32.totalorder %s156, %s157
    %p168 = scmp.eq.s32.totalorder %s17, 0
    %p169 = por %p167, %p168
    %p170 = scmp.ne.s32.totalorder %s156, %s157
    %p171 = scmp.eq.s32.totalorder %s18, 1
    %p172 = por %p170, %p171
    %p174 = scmp.ne.s32.totalorder %s157, %s173
    %p175 = scmp.eq.s32.totalorder %s18, 0
    %p176 = por %p174, %p175
    %p177 = scmp.le.s32.totalorder 1, %s12
    %p178 = scmp.lt.s32.totalorder %s12, 3
    %p179 = pnand %p177, %p178
    %p180 = pneg %p179
    // Predicated region
    $region9: #{basic_block_forward.1} parent=5 // pred_check
      _
    $region10: #{basic_block_forward.1} parent=5 // pred_check_branch
      %182 = sbr.rel (%p179) target = $region12
    $region11: #{basic_block_forward.1} parent=5 // pred_region
      %s183 = ssub.s32 %s12, 1
      // Predicated region
      $region13: #{basic_block_forward.1} parent=11 // pred_check
        %p184 = pneg %p59
      $region14: #{basic_block_forward.1} parent=11 // pred_check_branch
        %186 = sbr.rel (%p184) target = $region16
      $region15: #{basic_block_forward.1} parent=11 // pred_region
        _
      $region16: #{basic_block_forward.1} parent=11 // pred_fallthru
        _
      // Predicated region
      $region17: #{basic_block_forward.1} parent=11 // pred_check
        %p187 = pneg %p80
      $region18: #{basic_block_forward.1} parent=11 // pred_check_branch
        %189 = sbr.rel (%p187) target = $region20
      $region19: #{basic_block_forward.1} parent=11 // pred_region
        _
      $region20: #{basic_block_forward.1} parent=11 // pred_fallthru
        _
      // Predicated region
      $region21: #{basic_block_forward.1} parent=11 // pred_check
        %p190 = pneg %p101
      $region22: #{basic_block_forward.1} parent=11 // pred_check_branch
        %192 = sbr.rel (%p190) target = $region24
      $region23: #{basic_block_forward.1} parent=11 // pred_region
        _
      $region24: #{basic_block_forward.1} parent=11 // pred_fallthru
        _
      // Predicated region
      $region25: #{basic_block_forward.1} parent=11 // pred_check
        %p193 = pneg %p122
      $region26: #{basic_block_forward.1} parent=11 // pred_check_branch
        %195 = sbr.rel (%p193) target = $region28
      $region27: #{basic_block_forward.1} parent=11 // pred_region
        _
      $region28: #{basic_block_forward.1} parent=11 // pred_fallthru
        _
      // Predicated region
      $region29: #{basic_block_forward.1} parent=11 // pred_check
        %p196 = pneg %p143
      $region30: #{basic_block_forward.1} parent=11 // pred_check_branch
        %198 = sbr.rel (%p196) target = $region32
      $region31: #{basic_block_forward.1} parent=11 // pred_region
        _
      $region32: #{basic_block_forward.1} parent=11 // pred_fallthru
        _
    $region12: #{basic_block_forward.1} parent=5 // pred_fallthru
      _
    %p199 = scmp.lt.s32.totalorder %s12, 2
    // Predicated region
    $region33: #{basic_block_forward.1} parent=5 // pred_check
      %p200 = pneg %p199
    $region34: #{basic_block_forward.1} parent=5 // pred_check_branch
      %202 = sbr.rel (%p200) target = $region36
    $region35: #{basic_block_forward.1} parent=5 // pred_region
      // Predicated region
      $region37: #{basic_block_forward.1} parent=35 // pred_check
        %p203 = pneg %p32
      $region38: #{basic_block_forward.1} parent=35 // pred_check_branch
        %205 = sbr.rel (%p203) target = $region40
      $region39: #{basic_block_forward.1} parent=35 // pred_region
        %s206 = smul.u32 4, %s12
        %p207 = scmp.lt.s32.totalorder %s206, 7
        %s208 = scalar_select %p207, %s206, 7
        %s209 = smul.addr %s208, 18
        %s210 = smul.addr %s209, 4
        %s211 = scalar_lea.vmem %s0, %s210
        %s212 = smul.u32 4, %s12
      $region40: #{basic_block_forward.1} parent=35 // pred_fallthru
        _
    $region36: #{basic_block_forward.1} parent=5 // pred_fallthru
      _
    %p213 = scmp.le.s32.totalorder 1, %s12
    %p214 = scmp.lt.s32.totalorder %s12, 3
    %p215 = pnand %p213, %p214
    %p216 = pneg %p215
    // Predicated region
    $region41: #{basic_block_forward.1} parent=5 // pred_check
      _
    $region42: #{basic_block_forward.1} parent=5 // pred_check_branch
      %218 = sbr.rel (%p215) target = $region44
    $region43: #{basic_block_forward.1} parent=5 // pred_region
      %s219 = ssub.s32 %s12, 1
      %s220 = smul.u32 4, %s17
      %p221 = scmp.lt.s32.totalorder %s220, 7
      %s222 = scalar_select %p221, %s220, 7
      %s223 = smul.addr %s222, 18
      %s224 = smul.addr %s223, 4
      %s225 = scalar_lea.vmem %s0, %s224
      %p226 = pneg %p38
      %p227 = pneg %p35
      %p228 = pneg %p59
      %p229 = pneg %p56
      %p230 = pneg %p80
      %p231 = pneg %p77
      %p232 = pneg %p101
      %p233 = pneg %p98
      %p234 = pneg %p122
      %p235 = pneg %p119
      %p236 = pneg %p143
      %p237 = pneg %p140
      %p238 = pneg %p169
      %p239 = pneg %p166
      %p240 = scmp.lt.s32.totalorder %s17, 1
      %s241 = scalar_select %p240, %s17, 1
      %s242 = smul.addr %s241, 8
      %s243 = smul.addr %s242, 8
      %s244 = scalar_lea.vmem %s6, %s243
      %s245 = smul.u32 4, %s17
      %p246 = scmp.lt.s32.totalorder %s245, 7
      %s247 = scalar_select %p246, %s245, 7
      %s248 = smul.addr %s247, 18
      %s249 = smul.addr %s248, 4
      %s250 = scalar_lea.vmem %s0, %s249
      %s251 = smul.u32 4, %s17
      %p252 = scmp.lt.s32.totalorder %s17, 1
      %s253 = scalar_select %p252, %s17, 1
      %s254 = smul.addr %s253, 8
      %s255 = smul.addr %s254, 8
      %s256 = scalar_lea.vmem %s6, %s255
      %v258 = vld [vmem:[%s250] sm:$0xf]
      %v259 = vld [vmem:[%s250 + $0x4] sm:$0x1]
      %v260 = vld [vmem:[%s250 + $0x8] sm:$0xf]
      %v261 = vld [vmem:[%s250 + $0xc] sm:$0x1]
      %v262 = vld [vmem:[%s250 + $0x10] sm:$0xf]
      %v263 = vld [vmem:[%s250 + $0x14] sm:$0x1]
      %v264 = vld [vmem:[%s250 + $0x18] sm:$0xf]
      %v265 = vld [vmem:[%s250 + $0x1c] sm:$0x1]
      %v266 = vld [vmem:[%s250 + $0x20] sm:$0xf]
      %v267 = vld [vmem:[%s250 + $0x24] sm:$0x1]
      %v268 = vld [vmem:[%s250 + $0x28] sm:$0xf]
      %v269 = vld [vmem:[%s250 + $0x2c] sm:$0x1]
      %v270 = vld [vmem:[%s250 + $0x30] sm:$0xf]
      %v271 = vld [vmem:[%s250 + $0x34] sm:$0x1]
      %v272 = vld [vmem:[%s250 + $0x38] sm:$0xf]
      %v273 = vld [vmem:[%s250 + $0x3c] sm:$0x1]
      %v274 = vld [vmem:[%s250 + $0x40] sm:$0xf]
      %v275 = vld [vmem:[%s250 + $0x44] sm:$0x1]
      %v276 = vunpack.c.l.bf16 %v258
      %v277 = vunpack.c.l.bf16 %v259
      %v278 = vunpack.c.l.bf16 %v260
      %v279 = vunpack.c.l.bf16 %v261
      %v280 = vunpack.c.l.bf16 %v262
      %v281 = vunpack.c.l.bf16 %v263
      %v282 = vunpack.c.l.bf16 %v264
      %v283 = vunpack.c.l.bf16 %v265
      %v284 = vunpack.c.l.bf16 %v266
      %v285 = vunpack.c.l.bf16 %v267
      %v286 = vunpack.c.l.bf16 %v268
      %v287 = vunpack.c.l.bf16 %v269
      %v288 = vunpack.c.l.bf16 %v270
      %v289 = vunpack.c.l.bf16 %v271
      %v290 = vunpack.c.l.bf16 %v272
      %v291 = vunpack.c.l.bf16 %v273
      %v292 = vunpack.c.l.bf16 %v274
      %v293 = vunpack.c.l.bf16 %v275
      %v294 = vpack.c.bf16 %v278, %v276
      %v295 = vpack.c.bf16 %v282, %v280
      %v296 = vpack.c.bf16 %v286, %v284
      %v297 = vpack.c.bf16 %v290, %v288
      %v298 = vld [vmem:[%s1] sm:$0xf]
      %v299 = vld [vmem:[%s1 + $0x4] sm:$0xf]
      %v300 = vld [vmem:[%s1 + $0x8] sm:$0xf]
      %v301 = vld [vmem:[%s1 + $0xc] sm:$0xf]
      %v302 = vld [vmem:[%s1 + $0x10] sm:$0xf]
      %v303 = vld [vmem:[%s1 + $0x14] sm:$0xf]
      %v304 = vld [vmem:[%s1 + $0x18] sm:$0xf]
      %v305 = vld [vmem:[%s1 + $0x1c] sm:$0xf]
      %v306 = vld [vmem:[%s1 + $0x20] sm:$0xf]
      %v307 = vld [vmem:[%s1 + $0x24] sm:$0xf]
      %v308 = vld [vmem:[%s1 + $0x28] sm:$0xf]
      %v309 = vld [vmem:[%s1 + $0x2c] sm:$0xf]
      %v310 = vld [vmem:[%s1 + $0x30] sm:$0xf]
      %v311 = vld [vmem:[%s1 + $0x34] sm:$0xf]
      %v312 = vld [vmem:[%s1 + $0x38] sm:$0xf]
      %v313 = vld [vmem:[%s1 + $0x3c] sm:$0xf]
      %s314 = scalar_lea.vmem %s250, 72
      %v315 = vld [vmem:[%s314] sm:$0xf]
      %v316 = vld [vmem:[%s314 + $0x8] sm:$0xf]
      %v317 = vld [vmem:[%s314 + $0x10] sm:$0xf]
      %v318 = vld [vmem:[%s314 + $0x18] sm:$0xf]
      %v319 = vld [vmem:[%s314 + $0x20] sm:$0xf]
      %v320 = vld [vmem:[%s314 + $0x28] sm:$0xf]
      %v321 = vld [vmem:[%s314 + $0x30] sm:$0xf]
      %v322 = vld [vmem:[%s314 + $0x38] sm:$0xf]
      %v323 = vld [vmem:[%s314 + $0x40] sm:$0xf]
      %v324 = vunpack.c.l.bf16 %v315
      %v325 = vunpack.c.l.bf16 %v316
      %v326 = vunpack.c.l.bf16 %v317
      %v327 = vunpack.c.l.bf16 %v318
      %v328 = vunpack.c.l.bf16 %v319
      %v329 = vunpack.c.l.bf16 %v320
      %v330 = vunpack.c.l.bf16 %v321
      %v331 = vunpack.c.l.bf16 %v322
      %v332 = vunpack.c.l.bf16 %v323
      %v333 = vpack.c.bf16 %v325, %v324
      %v334 = vpack.c.bf16 %v327, %v326
      %v335 = vpack.c.bf16 %v329, %v328
      %v336 = vpack.c.bf16 %v331, %v330
      %s337 = scalar_lea.vmem %s1, 64
      %v338 = vld [vmem:[%s337] sm:$0xf]
      %v339 = vld [vmem:[%s337 + $0x4] sm:$0xf]
      %v340 = vld [vmem:[%s337 + $0x8] sm:$0xf]
      %v341 = vld [vmem:[%s337 + $0xc] sm:$0xf]
      %v342 = vld [vmem:[%s337 + $0x10] sm:$0xf]
      %v343 = vld [vmem:[%s337 + $0x14] sm:$0xf]
      %v344 = vld [vmem:[%s337 + $0x18] sm:$0xf]
      %v345 = vld [vmem:[%s337 + $0x1c] sm:$0xf]
      %v346 = vld [vmem:[%s337 + $0x20] sm:$0xf]
      %v347 = vld [vmem:[%s337 + $0x24] sm:$0xf]
      %v348 = vld [vmem:[%s337 + $0x28] sm:$0xf]
      %v349 = vld [vmem:[%s337 + $0x2c] sm:$0xf]
      %v350 = vld [vmem:[%s337 + $0x30] sm:$0xf]
      %v351 = vld [vmem:[%s337 + $0x34] sm:$0xf]
      %v352 = vld [vmem:[%s337 + $0x38] sm:$0xf]
      %v353 = vld [vmem:[%s337 + $0x3c] sm:$0xf]
      %v370 = vunpack.c.l.b16 %v338
      %v371 = vunpack.c.l.b16 %v339
      %v372 = vunpack.c.l.b16 %v340
      %v373 = vunpack.c.l.b16 %v341
      %v374 = vunpack.c.l.b16 %v342
      %v375 = vunpack.c.l.b16 %v343
      %v376 = vunpack.c.l.b16 %v344
      %v377 = vunpack.c.l.b16 %v345
      %v378 = vunpack.c.l.b16 %v346
      %v379 = vunpack.c.l.b16 %v347
      %v380 = vunpack.c.l.b16 %v348
      %v381 = vunpack.c.l.b16 %v349
      %v382 = vunpack.c.l.b16 %v350
      %v383 = vunpack.c.l.b16 %v351
      %v384 = vunpack.c.l.b16 %v352
      %v385 = vunpack.c.l.b16 %v353
      %v386 = vpack.c.b16 %v371, %v370
      %v387 = vpack.c.b16 %v373, %v372
      %v388 = vpack.c.b16 %v375, %v374
      %v389 = vpack.c.b16 %v377, %v376
      %v390 = vpack.c.b16 %v379, %v378
      %v391 = vpack.c.b16 %v381, %v380
      %v392 = vpack.c.b16 %v383, %v382
      %v393 = vpack.c.b16 %v385, %v384
      %402 = vmatprep.subr.bf16.mxu0 0
      %403 = vmatpush1.bf16.msra.mxu0 %v386
      %404 = vmatprep.subr.bf16.mxu0 0
      %405 = vmatpush1.bf16.msra.mxu0 %v387
      %406 = vmatprep.subr.bf16.mxu0 0
      %407 = vmatpush1.bf16.msra.mxu0 %v388
      %408 = vmatprep.subr.bf16.mxu0 0
      %409 = vmatpush1.bf16.msra.mxu0 %v389
      %410 = vmatprep.subr.bf16.mxu0 0
      %411 = vmatpush1.bf16.msra.mxu0 %v390
      %412 = vmatprep.subr.bf16.mxu0 0
      %413 = vmatpush1.bf16.msra.mxu0 %v391
      %414 = vmatprep.subr.bf16.mxu0 0
      %415 = vmatpush1.bf16.msra.mxu0 %v392
      %416 = vmatprep.subr.bf16.mxu0 0
      %417 = vmatpush1.bf16.msra.mxu0 %v393
      %418 = vmatprep.subr.bf16.mxu0 0
      %419 = vmatpush1.bf16.msra.mxu0 0
      %420 = vmatprep.subr.bf16.mxu0 0
      %421 = vmatpush1.bf16.msra.mxu0 0
      %422 = vmatprep.subr.bf16.mxu0 0
      %423 = vmatpush1.bf16.msra.mxu0 0
      %424 = vmatprep.subr.bf16.mxu0 0
      %425 = vmatpush1.bf16.msra.mxu0 0
      %426 = vmatprep.subr.bf16.mxu0 0
      %427 = vmatpush1.bf16.msra.mxu0 0
      %428 = vmatprep.subr.bf16.mxu0 0
      %429 = vmatpush1.bf16.msra.mxu0 0
      %430 = vmatprep.subr.bf16.mxu0 0
      %431 = vmatpush1.bf16.msra.mxu0 0
      %432 = vmatprep.subr.bf16.mxu0 0
      %433 = vmatpush1.bf16.msra.mxu0 0
      %434 = vmatprep.mubr.bf16.mxu0 0
      %435 = vmatmul.mubr.bf16.gmra.mrb[0].mxu0 %v333
      %v436 = vpop.f32.mrb[0].mxu0
      %v437 = vadd.f32 0.0, %v436
      %v438 = vpop.f32.mrb[0].mxu0
      %v439 = vpop.f32.mrb[0].mxu0
      %v440 = vadd.f32 0.0, %v439
      %v441 = vpop.f32.mrb[0].mxu0
      %442 = vmatprep.mubr.bf16.mxu0 0
      %443 = vmatmul.mubr.bf16.gmra.mrb[0].mxu0 %v334
      %v444 = vpop.f32.mrb[0].mxu0
      %v445 = vadd.f32 0.0, %v444
      %v446 = vpop.f32.mrb[0].mxu0
      %v447 = vpop.f32.mrb[0].mxu0
      %v448 = vadd.f32 0.0, %v447
      %v449 = vpop.f32.mrb[0].mxu0
      %450 = vmatprep.mubr.bf16.mxu0 0
      %451 = vmatmul.mubr.bf16.gmra.mrb[0].mxu0 %v335
      %v452 = vpop.f32.mrb[0].mxu0
      %v453 = vadd.f32 0.0, %v452
      %v454 = vpop.f32.mrb[0].mxu0
      %v455 = vpop.f32.mrb[0].mxu0
      %v456 = vadd.f32 0.0, %v455
      %v457 = vpop.f32.mrb[0].mxu0
      %458 = vmatprep.mubr.bf16.mxu0 0
      %459 = vmatmul.mubr.bf16.gmra.mrb[0].mxu0 %v336
      %v460 = vpop.f32.mrb[0].mxu0
      %v461 = vadd.f32 0.0, %v460
      %v462 = vpop.f32.mrb[0].mxu0
      %v463 = vpop.f32.mrb[0].mxu0
      %v464 = vadd.f32 0.0, %v463
      %v465 = vpop.f32.mrb[0].mxu0
      %466 = vdwg.mxu0
      %v483 = vunpack.c.l.b16 %v298
      %v484 = vunpack.c.l.b16 %v299
      %v485 = vunpack.c.l.b16 %v300
      %v486 = vunpack.c.l.b16 %v301
      %v487 = vunpack.c.l.b16 %v302
      %v488 = vunpack.c.l.b16 %v303
      %v489 = vunpack.c.l.b16 %v304
      %v490 = vunpack.c.l.b16 %v305
      %v491 = vunpack.c.l.b16 %v306
      %v492 = vunpack.c.l.b16 %v307
      %v493 = vunpack.c.l.b16 %v308
      %v494 = vunpack.c.l.b16 %v309
      %v495 = vunpack.c.l.b16 %v310
      %v496 = vunpack.c.l.b16 %v311
      %v497 = vunpack.c.l.b16 %v312
      %v498 = vunpack.c.l.b16 %v313
      %v499 = vpack.c.b16 %v484, %v483
      %v500 = vpack.c.b16 %v486, %v485
      %v501 = vpack.c.b16 %v488, %v487
      %v502 = vpack.c.b16 %v490, %v489
      %v503 = vpack.c.b16 %v492, %v491
      %v504 = vpack.c.b16 %v494, %v493
      %v505 = vpack.c.b16 %v496, %v495
      %v506 = vpack.c.b16 %v498, %v497
      %515 = vmatprep.subr.bf16.mxu0 0
      %516 = vmatpush1.bf16.msra.mxu0 %v499
      %517 = vmatprep.subr.bf16.mxu0 0
      %518 = vmatpush1.bf16.msra.mxu0 %v500
      %519 = vmatprep.subr.bf16.mxu0 0
      %520 = vmatpush1.bf16.msra.mxu0 %v501
      %521 = vmatprep.subr.bf16.mxu0 0
      %522 = vmatpush1.bf16.msra.mxu0 %v502
      %523 = vmatprep.subr.bf16.mxu0 0
      %524 = vmatpush1.bf16.msra.mxu0 %v503
      %525 = vmatprep.subr.bf16.mxu0 0
      %526 = vmatpush1.bf16.msra.mxu0 %v504
      %527 = vmatprep.subr.bf16.mxu0 0
      %528 = vmatpush1.bf16.msra.mxu0 %v505
      %529 = vmatprep.subr.bf16.mxu0 0
      %530 = vmatpush1.bf16.msra.mxu0 %v506
      %531 = vmatprep.subr.bf16.mxu0 0
      %532 = vmatpush1.bf16.msra.mxu0 0
      %533 = vmatprep.subr.bf16.mxu0 0
      %534 = vmatpush1.bf16.msra.mxu0 0
      %535 = vmatprep.subr.bf16.mxu0 0
      %536 = vmatpush1.bf16.msra.mxu0 0
      %537 = vmatprep.subr.bf16.mxu0 0
      %538 = vmatpush1.bf16.msra.mxu0 0
      %539 = vmatprep.subr.bf16.mxu0 0
      %540 = vmatpush1.bf16.msra.mxu0 0
      %541 = vmatprep.subr.bf16.mxu0 0
      %542 = vmatpush1.bf16.msra.mxu0 0
      %543 = vmatprep.subr.bf16.mxu0 0
      %544 = vmatpush1.bf16.msra.mxu0 0
      %545 = vmatprep.subr.bf16.mxu0 0
      %546 = vmatpush1.bf16.msra.mxu0 0
      %547 = vmatprep.mubr.bf16.mxu0 0
      %548 = vmatmul.mubr.bf16.gmra.mrb[0].mxu0 %v294
      %v549 = vpop.f32.mrb[0].mxu0
      %v550 = vadd.f32 %v437, %v549
      %v551 = vpop.f32.mrb[0].mxu0
      %v552 = vpop.f32.mrb[0].mxu0
      %v553 = vadd.f32 %v440, %v552
      %v554 = vpop.f32.mrb[0].mxu0
      %555 = vmatprep.mubr.bf16.mxu0 0
      %556 = vmatmul.mubr.bf16.gmra.mrb[0].mxu0 %v295
      %v557 = vpop.f32.mrb[0].mxu0
      %v558 = vadd.f32 %v445, %v557
      %v559 = vpop.f32.mrb[0].mxu0
      %v560 = vpop.f32.mrb[0].mxu0
      %v561 = vadd.f32 %v448, %v560
      %v562 = vpop.f32.mrb[0].mxu0
      %563 = vmatprep.mubr.bf16.mxu0 0
      %564 = vmatmul.mubr.bf16.gmra.mrb[0].mxu0 %v296
      %v565 = vpop.f32.mrb[0].mxu0
      %v566 = vadd.f32 %v453, %v565
      %v567 = vpop.f32.mrb[0].mxu0
      %v568 = vpop.f32.mrb[0].mxu0
      %v569 = vadd.f32 %v456, %v568
      %v570 = vpop.f32.mrb[0].mxu0
      %571 = vmatprep.mubr.bf16.mxu0 0
      %572 = vmatmul.mubr.bf16.gmra.mrb[0].mxu0 %v297
      %v573 = vpop.f32.mrb[0].mxu0
      %v574 = vadd.f32 %v461, %v573
      %v575 = vpop.f32.mrb[0].mxu0
      %v576 = vpop.f32.mrb[0].mxu0
      %v577 = vadd.f32 %v464, %v576
      %v578 = vpop.f32.mrb[0].mxu0
      %579 = vdwg.mxu0
      %vm596 = vcmask 1046528
      %v597 = vrot.slane %v276, 1
      %v598 = vrot.slane %v277, 1
      %v599 = vsel %vm596, %v597, %v598
      %v600 = vrot.slane %v278, 1
      %v601 = vrot.slane %v279, 1
      %v602 = vsel %vm596, %v600, %v601
      %v603 = vrot.slane %v280, 1
      %v604 = vrot.slane %v281, 1
      %v605 = vsel %vm596, %v603, %v604
      %v606 = vrot.slane %v282, 1
      %v607 = vrot.slane %v283, 1
      %v608 = vsel %vm596, %v606, %v607
      %v609 = vrot.slane %v284, 1
      %v610 = vrot.slane %v285, 1
      %v611 = vsel %vm596, %v609, %v610
      %v612 = vrot.slane %v286, 1
      %v613 = vrot.slane %v287, 1
      %v614 = vsel %vm596, %v612, %v613
      %v615 = vrot.slane %v288, 1
      %v616 = vrot.slane %v289, 1
      %v617 = vsel %vm596, %v615, %v616
      %v618 = vrot.slane %v290, 1
      %v619 = vrot.slane %v291, 1
      %v620 = vsel %vm596, %v618, %v619
      %v629 = vpack.c.bf16 %v602, %v599
      %v630 = vpack.c.bf16 %v608, %v605
      %v631 = vpack.c.bf16 %v614, %v611
      %v632 = vpack.c.bf16 %v620, %v617
      %s633 = scalar_lea.vmem %s1, 128
      %v634 = vld [vmem:[%s633] sm:$0xf]
      %v635 = vld [vmem:[%s633 + $0x4] sm:$0xf]
      %v636 = vld [vmem:[%s633 + $0x8] sm:$0xf]
      %v637 = vld [vmem:[%s633 + $0xc] sm:$0xf]
      %v638 = vld [vmem:[%s633 + $0x10] sm:$0xf]
      %v639 = vld [vmem:[%s633 + $0x14] sm:$0xf]
      %v640 = vld [vmem:[%s633 + $0x18] sm:$0xf]
      %v641 = vld [vmem:[%s633 + $0x1c] sm:$0xf]
      %v642 = vld [vmem:[%s633 + $0x20] sm:$0xf]
      %v643 = vld [vmem:[%s633 + $0x24] sm:$0xf]
      %v644 = vld [vmem:[%s633 + $0x28] sm:$0xf]
      %v645 = vld [vmem:[%s633 + $0x2c] sm:$0xf]
      %v646 = vld [vmem:[%s633 + $0x30] sm:$0xf]
      %v647 = vld [vmem:[%s633 + $0x34] sm:$0xf]
      %v648 = vld [vmem:[%s633 + $0x38] sm:$0xf]
      %v649 = vld [vmem:[%s633 + $0x3c] sm:$0xf]
      %v666 = vunpack.c.l.b16 %v634
      %v667 = vunpack.c.l.b16 %v635
      %v668 = vunpack.c.l.b16 %v636
      %v669 = vunpack.c.l.b16 %v637
      %v670 = vunpack.c.l.b16 %v638
      %v671 = vunpack.c.l.b16 %v639
      %v672 = vunpack.c.l.b16 %v640
      %v673 = vunpack.c.l.b16 %v641
      %v674 = vunpack.c.l.b16 %v642
      %v675 = vunpack.c.l.b16 %v643
      %v676 = vunpack.c.l.b16 %v644
      %v677 = vunpack.c.l.b16 %v645
      %v678 = vunpack.c.l.b16 %v646
      %v679 = vunpack.c.l.b16 %v647
      %v680 = vunpack.c.l.b16 %v648
      %v681 = vunpack.c.l.b16 %v649
      %v682 = vpack.c.b16 %v667, %v666
      %v683 = vpack.c.b16 %v669, %v668
      %v684 = vpack.c.b16 %v671, %v670
      %v685 = vpack.c.b16 %v673, %v672
      %v686 = vpack.c.b16 %v675, %v674
      %v687 = vpack.c.b16 %v677, %v676
      %v688 = vpack.c.b16 %v679, %v678
      %v689 = vpack.c.b16 %v681, %v680
      %698 = vmatprep.subr.bf16.mxu0 0
      %699 = vmatpush1.bf16.msra.mxu0 %v682
      %700 = vmatprep.subr.bf16.mxu0 0
      %701 = vmatpush1.bf16.msra.mxu0 %v683
      %702 = vmatprep.subr.bf16.mxu0 0
      %703 = vmatpush1.bf16.msra.mxu0 %v684
      %704 = vmatprep.subr.bf16.mxu0 0
      %705 = vmatpush1.bf16.msra.mxu0 %v685
      %706 = vmatprep.subr.bf16.mxu0 0
      %707 = vmatpush1.bf16.msra.mxu0 %v686
      %708 = vmatprep.subr.bf16.mxu0 0
      %709 = vmatpush1.bf16.msra.mxu0 %v687
      %710 = vmatprep.subr.bf16.mxu0 0
      %711 = vmatpush1.bf16.msra.mxu0 %v688
      %712 = vmatprep.subr.bf16.mxu0 0
      %713 = vmatpush1.bf16.msra.mxu0 %v689
      %714 = vmatprep.subr.bf16.mxu0 0
      %715 = vmatpush1.bf16.msra.mxu0 0
      %716 = vmatprep.subr.bf16.mxu0 0
      %717 = vmatpush1.bf16.msra.mxu0 0
      %718 = vmatprep.subr.bf16.mxu0 0
      %719 = vmatpush1.bf16.msra.mxu0 0
      %720 = vmatprep.subr.bf16.mxu0 0
      %721 = vmatpush1.bf16.msra.mxu0 0
      %722 = vmatprep.subr.bf16.mxu0 0
      %723 = vmatpush1.bf16.msra.mxu0 0
      %724 = vmatprep.subr.bf16.mxu0 0
      %725 = vmatpush1.bf16.msra.mxu0 0
      %726 = vmatprep.subr.bf16.mxu0 0
      %727 = vmatpush1.bf16.msra.mxu0 0
      %728 = vmatprep.subr.bf16.mxu0 0
      %729 = vmatpush1.bf16.msra.mxu0 0
      %730 = vmatprep.mubr.bf16.mxu0 0
      %731 = vmatmul.mubr.bf16.gmra.mrb[0].mxu0 %v629
      %v732 = vpop.f32.mrb[0].mxu0
      %v733 = vadd.f32 0.0, %v732
      %v734 = vpop.f32.mrb[0].mxu0
      %v735 = vpop.f32.mrb[0].mxu0
      %v736 = vadd.f32 0.0, %v735
      %v737 = vpop.f32.mrb[0].mxu0
      %738 = vmatprep.mubr.bf16.mxu0 0
      %739 = vmatmul.mubr.bf16.gmra.mrb[0].mxu0 %v630
      %v740 = vpop.f32.mrb[0].mxu0
      %v741 = vadd.f32 0.0, %v740
      %v742 = vpop.f32.mrb[0].mxu0
      %v743 = vpop.f32.mrb[0].mxu0
      %v744 = vadd.f32 0.0, %v743
      %v745 = vpop.f32.mrb[0].mxu0
      %746 = vmatprep.mubr.bf16.mxu0 0
      %747 = vmatmul.mubr.bf16.gmra.mrb[0].mxu0 %v631
      %v748 = vpop.f32.mrb[0].mxu0
      %v749 = vadd.f32 0.0, %v748
      %v750 = vpop.f32.mrb[0].mxu0
      %v751 = vpop.f32.mrb[0].mxu0
      %v752 = vadd.f32 0.0, %v751
      %v753 = vpop.f32.mrb[0].mxu0
      %754 = vmatprep.mubr.bf16.mxu0 0
      %755 = vmatmul.mubr.bf16.gmra.mrb[0].mxu0 %v632
      %v756 = vpop.f32.mrb[0].mxu0
      %v757 = vadd.f32 0.0, %v756
      %v758 = vpop.f32.mrb[0].mxu0
      %v759 = vpop.f32.mrb[0].mxu0
      %v760 = vadd.f32 0.0, %v759
      %v761 = vpop.f32.mrb[0].mxu0
      %762 = vdwg.mxu0
      %v763 = vadd.f32 %v550, %v733
      %v764 = vadd.f32 %v553, %v736
      %v765 = vadd.f32 %v558, %v741
      %v766 = vadd.f32 %v561, %v744
      %v767 = vadd.f32 %v566, %v749
      %v768 = vadd.f32 %v569, %v752
      %v769 = vadd.f32 %v574, %v757
      %v770 = vadd.f32 %v577, %v760
      %s771 = scalar_lea.vmem %s250, 144
      %v772 = vld [vmem:[%s771] sm:$0xf]
      %v773 = vld [vmem:[%s771 + $0x4] sm:$0x1]
      %v774 = vld [vmem:[%s771 + $0x8] sm:$0xf]
      %v775 = vld [vmem:[%s771 + $0xc] sm:$0x1]
      %v776 = vld [vmem:[%s771 + $0x10] sm:$0xf]
      %v777 = vld [vmem:[%s771 + $0x14] sm:$0x1]
      %v778 = vld [vmem:[%s771 + $0x18] sm:$0xf]
      %v779 = vld [vmem:[%s771 + $0x1c] sm:$0x1]
      %v780 = vld [vmem:[%s771 + $0x20] sm:$0xf]
      %v781 = vld [vmem:[%s771 + $0x24] sm:$0x1]
      %v782 = vld [vmem:[%s771 + $0x28] sm:$0xf]
      %v783 = vld [vmem:[%s771 + $0x2c] sm:$0x1]
      %v784 = vld [vmem:[%s771 + $0x30] sm:$0xf]
      %v785 = vld [vmem:[%s771 + $0x34] sm:$0x1]
      %v786 = vld [vmem:[%s771 + $0x38] sm:$0xf]
      %v787 = vld [vmem:[%s771 + $0x3c] sm:$0x1]
      %v788 = vunpack.c.l.bf16 %v772
      %v789 = vunpack.c.l.bf16 %v773
      %v790 = vunpack.c.l.bf16 %v774
      %v791 = vunpack.c.l.bf16 %v775
      %v792 = vunpack.c.l.bf16 %v776
      %v793 = vunpack.c.l.bf16 %v777
      %v794 = vunpack.c.l.bf16 %v778
      %v795 = vunpack.c.l.bf16 %v779
      %v796 = vunpack.c.l.bf16 %v780
      %v797 = vunpack.c.l.bf16 %v781
      %v798 = vunpack.c.l.bf16 %v782
      %v799 = vunpack.c.l.bf16 %v783
      %v800 = vunpack.c.l.bf16 %v784
      %v801 = vunpack.c.l.bf16 %v785
      %v802 = vunpack.c.l.bf16 %v786
      %v803 = vunpack.c.l.bf16 %v787
      %v804 = vpack.c.bf16 %v790, %v788
      %v805 = vpack.c.bf16 %v794, %v792
      %v806 = vpack.c.bf16 %v798, %v796
      %v807 = vpack.c.bf16 %v802, %v800
      %s808 = scalar_lea.vmem %s1, 192
      %v809 = vld [vmem:[%s808] sm:$0xf]
      %v810 = vld [vmem:[%s808 + $0x4] sm:$0xf]
      %v811 = vld [vmem:[%s808 + $0x8] sm:$0xf]
      %v812 = vld [vmem:[%s808 + $0xc] sm:$0xf]
      %v813 = vld [vmem:[%s808 + $0x10] sm:$0xf]
      %v814 = vld [vmem:[%s808 + $0x14] sm:$0xf]
      %v815 = vld [vmem:[%s808 + $0x18] sm:$0xf]
      %v816 = vld [vmem:[%s808 + $0x1c] sm:$0xf]
      %v817 = vld [vmem:[%s808 + $0x20] sm:$0xf]
      %v818 = vld [vmem:[%s808 + $0x24] sm:$0xf]
      %v819 = vld [vmem:[%s808 + $0x28] sm:$0xf]
      %v820 = vld [vmem:[%s808 + $0x2c] sm:$0xf]
      %v821 = vld [vmem:[%s808 + $0x30] sm:$0xf]
      %v822 = vld [vmem:[%s808 + $0x34] sm:$0xf]
      %v823 = vld [vmem:[%s808 + $0x38] sm:$0xf]
      %v824 = vld [vmem:[%s808 + $0x3c] sm:$0xf]
      %v841 = vunpack.c.l.b16 %v809
      %v842 = vunpack.c.l.b16 %v810
      %v843 = vunpack.c.l.b16 %v811
      %v844 = vunpack.c.l.b16 %v812
      %v845 = vunpack.c.l.b16 %v813
      %v846 = vunpack.c.l.b16 %v814
      %v847 = vunpack.c.l.b16 %v815
      %v848 = vunpack.c.l.b16 %v816
      %v849 = vunpack.c.l.b16 %v817
      %v850 = vunpack.c.l.b16 %v818
      %v851 = vunpack.c.l.b16 %v819
      %v852 = vunpack.c.l.b16 %v820
      %v853 = vunpack.c.l.b16 %v821
      %v854 = vunpack.c.l.b16 %v822
      %v855 = vunpack.c.l.b16 %v823
      %v856 = vunpack.c.l.b16 %v824
      %v857 = vpack.c.b16 %v842, %v841
      %v858 = vpack.c.b16 %v844, %v843
      %v859 = vpack.c.b16 %v846, %v845
      %v860 = vpack.c.b16 %v848, %v847
      %v861 = vpack.c.b16 %v850, %v849
      %v862 = vpack.c.b16 %v852, %v851
      %v863 = vpack.c.b16 %v854, %v853
      %v864 = vpack.c.b16 %v856, %v855
      %873 = vmatprep.subr.bf16.mxu0 0
      %874 = vmatpush1.bf16.msra.mxu0 %v857
      %875 = vmatprep.subr.bf16.mxu0 0
      %876 = vmatpush1.bf16.msra.mxu0 %v858
      %877 = vmatprep.subr.bf16.mxu0 0
      %878 = vmatpush1.bf16.msra.mxu0 %v859
      %879 = vmatprep.subr.bf16.mxu0 0
      %880 = vmatpush1.bf16.msra.mxu0 %v860
      %881 = vmatprep.subr.bf16.mxu0 0
      %882 = vmatpush1.bf16.msra.mxu0 %v861
      %883 = vmatprep.subr.bf16.mxu0 0
      %884 = vmatpush1.bf16.msra.mxu0 %v862
      %885 = vmatprep.subr.bf16.mxu0 0
      %886 = vmatpush1.bf16.msra.mxu0 %v863
      %887 = vmatprep.subr.bf16.mxu0 0
      %888 = vmatpush1.bf16.msra.mxu0 %v864
      %889 = vmatprep.subr.bf16.mxu0 0
      %890 = vmatpush1.bf16.msra.mxu0 0
      %891 = vmatprep.subr.bf16.mxu0 0
      %892 = vmatpush1.bf16.msra.mxu0 0
      %893 = vmatprep.subr.bf16.mxu0 0
      %894 = vmatpush1.bf16.msra.mxu0 0
      %895 = vmatprep.subr.bf16.mxu0 0
      %896 = vmatpush1.bf16.msra.mxu0 0
      %897 = vmatprep.subr.bf16.mxu0 0
      %898 = vmatpush1.bf16.msra.mxu0 0
      %899 = vmatprep.subr.bf16.mxu0 0
      %900 = vmatpush1.bf16.msra.mxu0 0
      %901 = vmatprep.subr.bf16.mxu0 0
      %902 = vmatpush1.bf16.msra.mxu0 0
      %903 = vmatprep.subr.bf16.mxu0 0
      %904 = vmatpush1.bf16.msra.mxu0 0
      %905 = vmatprep.mubr.bf16.mxu0 0
      %906 = vmatmul.mubr.bf16.gmra.mrb[0].mxu0 %v804
      %v907 = vpop.f32.mrb[0].mxu0
      %v908 = vadd.f32 0.0, %v907
      %v909 = vpop.f32.mrb[0].mxu0
      %v910 = vpop.f32.mrb[0].mxu0
      %v911 = vadd.f32 0.0, %v910
      %v912 = vpop.f32.mrb[0].mxu0
      %913 = vmatprep.mubr.bf16.mxu0 0
      %914 = vmatmul.mubr.bf16.gmra.mrb[0].mxu0 %v805
      %v915 = vpop.f32.mrb[0].mxu0
      %v916 = vadd.f32 0.0, %v915
      %v917 = vpop.f32.mrb[0].mxu0
      %v918 = vpop.f32.mrb[0].mxu0
      %v919 = vadd.f32 0.0, %v918
      %v920 = vpop.f32.mrb[0].mxu0
      %921 = vmatprep.mubr.bf16.mxu0 0
      %922 = vmatmul.mubr.bf16.gmra.mrb[0].mxu0 %v806
      %v923 = vpop.f32.mrb[0].mxu0
      %v924 = vadd.f32 0.0, %v923
      %v925 = vpop.f32.mrb[0].mxu0
      %v926 = vpop.f32.mrb[0].mxu0
      %v927 = vadd.f32 0.0, %v926
      %v928 = vpop.f32.mrb[0].mxu0
      %929 = vmatprep.mubr.bf16.mxu0 0
      %930 = vmatmul.mubr.bf16.gmra.mrb[0].mxu0 %v807
      %v931 = vpop.f32.mrb[0].mxu0
      %v932 = vadd.f32 0.0, %v931
      %v933 = vpop.f32.mrb[0].mxu0
      %v934 = vpop.f32.mrb[0].mxu0
      %v935 = vadd.f32 0.0, %v934
      %v936 = vpop.f32.mrb[0].mxu0
      %937 = vdwg.mxu0
      %v938 = vadd.f32 %v763, %v908
      %v939 = vadd.f32 %v764, %v911
      %v940 = vadd.f32 %v765, %v916
      %v941 = vadd.f32 %v766, %v919
      %v942 = vadd.f32 %v767, %v924
      %v943 = vadd.f32 %v768, %v927
      %v944 = vadd.f32 %v769, %v932
      %v945 = vadd.f32 %v770, %v935
      %s946 = scalar_lea.vmem %s250, 216
      %v947 = vld [vmem:[%s946] sm:$0xf]
      %v948 = vld [vmem:[%s946 + $0x8] sm:$0xf]
      %v949 = vld [vmem:[%s946 + $0x10] sm:$0xf]
      %v950 = vld [vmem:[%s946 + $0x18] sm:$0xf]
      %v951 = vld [vmem:[%s946 + $0x20] sm:$0xf]
      %v952 = vld [vmem:[%s946 + $0x28] sm:$0xf]
      %v953 = vld [vmem:[%s946 + $0x30] sm:$0xf]
      %v954 = vld [vmem:[%s946 + $0x38] sm:$0xf]
      %v955 = vunpack.c.l.bf16 %v947
      %v956 = vunpack.c.l.bf16 %v948
      %v957 = vunpack.c.l.bf16 %v949
      %v958 = vunpack.c.l.bf16 %v950
      %v959 = vunpack.c.l.bf16 %v951
      %v960 = vunpack.c.l.bf16 %v952
      %v961 = vunpack.c.l.bf16 %v953
      %v962 = vunpack.c.l.bf16 %v954
      %v963 = vpack.c.bf16 %v956, %v955
      %v964 = vpack.c.bf16 %v958, %v957
      %v965 = vpack.c.bf16 %v960, %v959
      %v966 = vpack.c.bf16 %v962, %v961
      %s967 = scalar_lea.vmem %s1, 256
      %v968 = vld [vmem:[%s967] sm:$0xf]
      %v969 = vld [vmem:[%s967 + $0x4] sm:$0xf]
      %v970 = vld [vmem:[%s967 + $0x8] sm:$0xf]
      %v971 = vld [vmem:[%s967 + $0xc] sm:$0xf]
      %v972 = vld [vmem:[%s967 + $0x10] sm:$0xf]
      %v973 = vld [vmem:[%s967 + $0x14] sm:$0xf]
      %v974 = vld [vmem:[%s967 + $0x18] sm:$0xf]
      %v975 = vld [vmem:[%s967 + $0x1c] sm:$0xf]
      %v976 = vld [vmem:[%s967 + $0x20] sm:$0xf]
      %v977 = vld [vmem:[%s967 + $0x24] sm:$0xf]
      %v978 = vld [vmem:[%s967 + $0x28] sm:$0xf]
      %v979 = vld [vmem:[%s967 + $0x2c] sm:$0xf]
      %v980 = vld [vmem:[%s967 + $0x30] sm:$0xf]
      %v981 = vld [vmem:[%s967 + $0x34] sm:$0xf]
      %v982 = vld [vmem:[%s967 + $0x38] sm:$0xf]
      %v983 = vld [vmem:[%s967 + $0x3c] sm:$0xf]
      %v1000 = vunpack.c.l.b16 %v968
      %v1001 = vunpack.c.l.b16 %v969
      %v1002 = vunpack.c.l.b16 %v970
      %v1003 = vunpack.c.l.b16 %v971
      %v1004 = vunpack.c.l.b16 %v972
      %v1005 = vunpack.c.l.b16 %v973
      %v1006 = vunpack.c.l.b16 %v974
      %v1007 = vunpack.c.l.b16 %v975
      %v1008 = vunpack.c.l.b16 %v976
      %v1009 = vunpack.c.l.b16 %v977
      %v1010 = vunpack.c.l.b16 %v978
      %v1011 = vunpack.c.l.b16 %v979
      %v1012 = vunpack.c.l.b16 %v980
      %v1013 = vunpack.c.l.b16 %v981
      %v1014 = vunpack.c.l.b16 %v982
      %v1015 = vunpack.c.l.b16 %v983
      %v1016 = vpack.c.b16 %v1001, %v1000
      %v1017 = vpack.c.b16 %v1003, %v1002
      %v1018 = vpack.c.b16 %v1005, %v1004
      %v1019 = vpack.c.b16 %v1007, %v1006
      %v1020 = vpack.c.b16 %v1009, %v1008
      %v1021 = vpack.c.b16 %v1011, %v1010
      %v1022 = vpack.c.b16 %v1013, %v1012
      %v1023 = vpack.c.b16 %v1015, %v1014
      %1032 = vmatprep.subr.bf16.mxu0 0
      %1033 = vmatpush1.bf16.msra.mxu0 %v1016
      %1034 = vmatprep.subr.bf16.mxu0 0
      %1035 = vmatpush1.bf16.msra.mxu0 %v1017
      %1036 = vmatprep.subr.bf16.mxu0 0
      %1037 = vmatpush1.bf16.msra.mxu0 %v1018
      %1038 = vmatprep.subr.bf16.mxu0 0
      %1039 = vmatpush1.bf16.msra.mxu0 %v1019
      %1040 = vmatprep.subr.bf16.mxu0 0
      %1041 = vmatpush1.bf16.msra.mxu0 %v1020
      %1042 = vmatprep.subr.bf16.mxu0 0
      %1043 = vmatpush1.bf16.msra.mxu0 %v1021
      %1044 = vmatprep.subr.bf16.mxu0 0
      %1045 = vmatpush1.bf16.msra.mxu0 %v1022
      %1046 = vmatprep.subr.bf16.mxu0 0
      %1047 = vmatpush1.bf16.msra.mxu0 %v1023
      %1048 = vmatprep.subr.bf16.mxu0 0
      %1049 = vmatpush1.bf16.msra.mxu0 0
      %1050 = vmatprep.subr.bf16.mxu0 0
      %1051 = vmatpush1.bf16.msra.mxu0 0
      %1052 = vmatprep.subr.bf16.mxu0 0
      %1053 = vmatpush1.bf16.msra.mxu0 0
      %1054 = vmatprep.subr.bf16.mxu0 0
      %1055 = vmatpush1.bf16.msra.mxu0 0
      %1056 = vmatprep.subr.bf16.mxu0 0
      %1057 = vmatpush1.bf16.msra.mxu0 0
      %1058 = vmatprep.subr.bf16.mxu0 0
      %1059 = vmatpush1.bf16.msra.mxu0 0
      %1060 = vmatprep.subr.bf16.mxu0 0
      %1061 = vmatpush1.bf16.msra.mxu0 0
      %1062 = vmatprep.subr.bf16.mxu0 0
      %1063 = vmatpush1.bf16.msra.mxu0 0
      %1064 = vmatprep.mubr.bf16.mxu0 0
      %1065 = vmatmul.mubr.bf16.gmra.mrb[0].mxu0 %v963
      %v1066 = vpop.f32.mrb[0].mxu0
      %v1067 = vadd.f32 0.0, %v1066
      %v1068 = vpop.f32.mrb[0].mxu0
      %v1069 = vpop.f32.mrb[0].mxu0
      %v1070 = vadd.f32 0.0, %v1069
      %v1071 = vpop.f32.mrb[0].mxu0
      %1072 = vmatprep.mubr.bf16.mxu0 0
      %1073 = vmatmul.mubr.bf16.gmra.mrb[0].mxu0 %v964
      %v1074 = vpop.f32.mrb[0].mxu0
      %v1075 = vadd.f32 0.0, %v1074
      %v1076 = vpop.f32.mrb[0].mxu0
      %v1077 = vpop.f32.mrb[0].mxu0
      %v1078 = vadd.f32 0.0, %v1077
      %v1079 = vpop.f32.mrb[0].mxu0
      %1080 = vmatprep.mubr.bf16.mxu0 0
      %1081 = vmatmul.mubr.bf16.gmra.mrb[0].mxu0 %v965
      %v1082 = vpop.f32.mrb[0].mxu0
      %v1083 = vadd.f32 0.0, %v1082
      %v1084 = vpop.f32.mrb[0].mxu0
      %v1085 = vpop.f32.mrb[0].mxu0
      %v1086 = vadd.f32 0.0, %v1085
      %v1087 = vpop.f32.mrb[0].mxu0
      %1088 = vmatprep.mubr.bf16.mxu0 0
      %1089 = vmatmul.mubr.bf16.gmra.mrb[0].mxu0 %v966
      %v1090 = vpop.f32.mrb[0].mxu0
      %v1091 = vadd.f32 0.0, %v1090
      %v1092 = vpop.f32.mrb[0].mxu0
      %v1093 = vpop.f32.mrb[0].mxu0
      %v1094 = vadd.f32 0.0, %v1093
      %v1095 = vpop.f32.mrb[0].mxu0
      %1096 = vdwg.mxu0
      %v1097 = vadd.f32 %v938, %v1067
      %v1098 = vadd.f32 %v939, %v1070
      %v1099 = vadd.f32 %v940, %v1075
      %v1100 = vadd.f32 %v941, %v1078
      %v1101 = vadd.f32 %v942, %v1083
      %v1102 = vadd.f32 %v943, %v1086
      %v1103 = vadd.f32 %v944, %v1091
      %v1104 = vadd.f32 %v945, %v1094
      %v1121 = vrot.slane %v788, 1
      %v1122 = vrot.slane %v789, 1
      %v1123 = vsel %vm596, %v1121, %v1122
      %v1124 = vrot.slane %v790, 1
      %v1125 = vrot.slane %v791, 1
      %v1126 = vsel %vm596, %v1124, %v1125
      %v1127 = vrot.slane %v792, 1
      %v1128 = vrot.slane %v793, 1
      %v1129 = vsel %vm596, %v1127, %v1128
      %v1130 = vrot.slane %v794, 1
      %v1131 = vrot.slane %v795, 1
      %v1132 = vsel %vm596, %v1130, %v1131
      %v1133 = vrot.slane %v796, 1
      %v1134 = vrot.slane %v797, 1
      %v1135 = vsel %vm596, %v1133, %v1134
      %v1136 = vrot.slane %v798, 1
      %v1137 = vrot.slane %v799, 1
      %v1138 = vsel %vm596, %v1136, %v1137
      %v1139 = vrot.slane %v800, 1
      %v1140 = vrot.slane %v801, 1
      %v1141 = vsel %vm596, %v1139, %v1140
      %v1142 = vrot.slane %v802, 1
      %v1143 = vrot.slane %v803, 1
      %v1144 = vsel %vm596, %v1142, %v1143
      %v1153 = vpack.c.bf16 %v1126, %v1123
      %v1154 = vpack.c.bf16 %v1132, %v1129
      %v1155 = vpack.c.bf16 %v1138, %v1135
      %v1156 = vpack.c.bf16 %v1144, %v1141
      %s1157 = scalar_lea.vmem %s1, 320
      %v1158 = vld [vmem:[%s1157] sm:$0xf]
      %v1159 = vld [vmem:[%s1157 + $0x4] sm:$0xf]
      %v1160 = vld [vmem:[%s1157 + $0x8] sm:$0xf]
      %v1161 = vld [vmem:[%s1157 + $0xc] sm:$0xf]
      %v1162 = vld [vmem:[%s1157 + $0x10] sm:$0xf]
      %v1163 = vld [vmem:[%s1157 + $0x14] sm:$0xf]
      %v1164 = vld [vmem:[%s1157 + $0x18] sm:$0xf]
      %v1165 = vld [vmem:[%s1157 + $0x1c] sm:$0xf]
      %v1166 = vld [vmem:[%s1157 + $0x20] sm:$0xf]
      %v1167 = vld [vmem:[%s1157 + $0x24] sm:$0xf]
      %v1168 = vld [vmem:[%s1157 + $0x28] sm:$0xf]
      %v1169 = vld [vmem:[%s1157 + $0x2c] sm:$0xf]
      %v1170 = vld [vmem:[%s1157 + $0x30] sm:$0xf]
      %v1171 = vld [vmem:[%s1157 + $0x34] sm:$0xf]
      %v1172 = vld [vmem:[%s1157 + $0x38] sm:$0xf]
      %v1173 = vld [vmem:[%s1157 + $0x3c] sm:$0xf]
      %v1190 = vunpack.c.l.b16 %v1158
      %v1191 = vunpack.c.l.b16 %v1159
      %v1192 = vunpack.c.l.b16 %v1160
      %v1193 = vunpack.c.l.b16 %v1161
      %v1194 = vunpack.c.l.b16 %v1162
      %v1195 = vunpack.c.l.b16 %v1163
      %v1196 = vunpack.c.l.b16 %v1164
      %v1197 = vunpack.c.l.b16 %v1165
      %v1198 = vunpack.c.l.b16 %v1166
      %v1199 = vunpack.c.l.b16 %v1167
      %v1200 = vunpack.c.l.b16 %v1168
      %v1201 = vunpack.c.l.b16 %v1169
      %v1202 = vunpack.c.l.b16 %v1170
      %v1203 = vunpack.c.l.b16 %v1171
      %v1204 = vunpack.c.l.b16 %v1172
      %v1205 = vunpack.c.l.b16 %v1173
      %v1206 = vpack.c.b16 %v1191, %v1190
      %v1207 = vpack.c.b16 %v1193, %v1192
      %v1208 = vpack.c.b16 %v1195, %v1194
      %v1209 = vpack.c.b16 %v1197, %v1196
      %v1210 = vpack.c.b16 %v1199, %v1198
      %v1211 = vpack.c.b16 %v1201, %v1200
      %v1212 = vpack.c.b16 %v1203, %v1202
      %v1213 = vpack.c.b16 %v1205, %v1204
      %1222 = vmatprep.subr.bf16.mxu0 0
      %1223 = vmatpush1.bf16.msra.mxu0 %v1206
      %1224 = vmatprep.subr.bf16.mxu0 0
      %1225 = vmatpush1.bf16.msra.mxu0 %v1207
      %1226 = vmatprep.subr.bf16.mxu0 0
      %1227 = vmatpush1.bf16.msra.mxu0 %v1208
      %1228 = vmatprep.subr.bf16.mxu0 0
      %1229 = vmatpush1.bf16.msra.mxu0 %v1209
      %1230 = vmatprep.subr.bf16.mxu0 0
      %1231 = vmatpush1.bf16.msra.mxu0 %v1210
      %1232 = vmatprep.subr.bf16.mxu0 0
      %1233 = vmatpush1.bf16.msra.mxu0 %v1211
      %1234 = vmatprep.subr.bf16.mxu0 0
      %1235 = vmatpush1.bf16.msra.mxu0 %v1212
      %1236 = vmatprep.subr.bf16.mxu0 0
      %1237 = vmatpush1.bf16.msra.mxu0 %v1213
      %1238 = vmatprep.subr.bf16.mxu0 0
      %1239 = vmatpush1.bf16.msra.mxu0 0
      %1240 = vmatprep.subr.bf16.mxu0 0
      %1241 = vmatpush1.bf16.msra.mxu0 0
      %1242 = vmatprep.subr.bf16.mxu0 0
      %1243 = vmatpush1.bf16.msra.mxu0 0
      %1244 = vmatprep.subr.bf16.mxu0 0
      %1245 = vmatpush1.bf16.msra.mxu0 0
      %1246 = vmatprep.subr.bf16.mxu0 0
      %1247 = vmatpush1.bf16.msra.mxu0 0
      %1248 = vmatprep.subr.bf16.mxu0 0
      %1249 = vmatpush1.bf16.msra.mxu0 0
      %1250 = vmatprep.subr.bf16.mxu0 0
      %1251 = vmatpush1.bf16.msra.mxu0 0
      %1252 = vmatprep.subr.bf16.mxu0 0
      %1253 = vmatpush1.bf16.msra.mxu0 0
      %1254 = vmatprep.mubr.bf16.mxu0 0
      %1255 = vmatmul.mubr.bf16.gmra.mrb[0].mxu0 %v1153
      %v1256 = vpop.f32.mrb[0].mxu0
      %v1257 = vadd.f32 0.0, %v1256
      %v1258 = vpop.f32.mrb[0].mxu0
      %v1259 = vpop.f32.mrb[0].mxu0
      %v1260 = vadd.f32 0.0, %v1259
      %v1261 = vpop.f32.mrb[0].mxu0
      %1262 = vmatprep.mubr.bf16.mxu0 0
      %1263 = vmatmul.mubr.bf16.gmra.mrb[0].mxu0 %v1154
      %v1264 = vpop.f32.mrb[0].mxu0
      %v1265 = vadd.f32 0.0, %v1264
      %v1266 = vpop.f32.mrb[0].mxu0
      %v1267 = vpop.f32.mrb[0].mxu0
      %v1268 = vadd.f32 0.0, %v1267
      %v1269 = vpop.f32.mrb[0].mxu0
      %1270 = vmatprep.mubr.bf16.mxu0 0
      %1271 = vmatmul.mubr.bf16.gmra.mrb[0].mxu0 %v1155
      %v1272 = vpop.f32.mrb[0].mxu0
      %v1273 = vadd.f32 0.0, %v1272
      %v1274 = vpop.f32.mrb[0].mxu0
      %v1275 = vpop.f32.mrb[0].mxu0
      %v1276 = vadd.f32 0.0, %v1275
      %v1277 = vpop.f32.mrb[0].mxu0
      %1278 = vmatprep.mubr.bf16.mxu0 0
      %1279 = vmatmul.mubr.bf16.gmra.mrb[0].mxu0 %v1156
      %v1280 = vpop.f32.mrb[0].mxu0
      %v1281 = vadd.f32 0.0, %v1280
      %v1282 = vpop.f32.mrb[0].mxu0
      %v1283 = vpop.f32.mrb[0].mxu0
      %v1284 = vadd.f32 0.0, %v1283
      %v1285 = vpop.f32.mrb[0].mxu0
      %1286 = vdwg.mxu0
      %v1287 = vadd.f32 %v1097, %v1257
      %v1288 = vadd.f32 %v1098, %v1260
      %v1289 = vadd.f32 %v1099, %v1265
      %v1290 = vadd.f32 %v1100, %v1268
      %v1291 = vadd.f32 %v1101, %v1273
      %v1292 = vadd.f32 %v1102, %v1276
      %v1293 = vadd.f32 %v1103, %v1281
      %v1294 = vadd.f32 %v1104, %v1284
      %v1295 = vpack.c.bf16 %v280, %v278
      %v1296 = vpack.c.bf16 %v284, %v282
      %v1297 = vpack.c.bf16 %v288, %v286
      %v1298 = vpack.c.bf16 %v292, %v290
      %s1299 = scalar_lea.vmem %s1, 384
      %v1300 = vld [vmem:[%s1299] sm:$0xf]
      %v1301 = vld [vmem:[%s1299 + $0x4] sm:$0xf]
      %v1302 = vld [vmem:[%s1299 + $0x8] sm:$0xf]
      %v1303 = vld [vmem:[%s1299 + $0xc] sm:$0xf]
      %v1304 = vld [vmem:[%s1299 + $0x10] sm:$0xf]
      %v1305 = vld [vmem:[%s1299 + $0x14] sm:$0xf]
      %v1306 = vld [vmem:[%s1299 + $0x18] sm:$0xf]
      %v1307 = vld [vmem:[%s1299 + $0x1c] sm:$0xf]
      %v1308 = vld [vmem:[%s1299 + $0x20] sm:$0xf]
      %v1309 = vld [vmem:[%s1299 + $0x24] sm:$0xf]
      %v1310 = vld [vmem:[%s1299 + $0x28] sm:$0xf]
      %v1311 = vld [vmem:[%s1299 + $0x2c] sm:$0xf]
      %v1312 = vld [vmem:[%s1299 + $0x30] sm:$0xf]
      %v1313 = vld [vmem:[%s1299 + $0x34] sm:$0xf]
      %v1314 = vld [vmem:[%s1299 + $0x38] sm:$0xf]
      %v1315 = vld [vmem:[%s1299 + $0x3c] sm:$0xf]
      %v1332 = vunpack.c.l.b16 %v1300
      %v1333 = vunpack.c.l.b16 %v1301
      %v1334 = vunpack.c.l.b16 %v1302
      %v1335 = vunpack.c.l.b16 %v1303
      %v1336 = vunpack.c.l.b16 %v1304
      %v1337 = vunpack.c.l.b16 %v1305
      %v1338 = vunpack.c.l.b16 %v1306
      %v1339 = vunpack.c.l.b16 %v1307
      %v1340 = vunpack.c.l.b16 %v1308
      %v1341 = vunpack.c.l.b16 %v1309
      %v1342 = vunpack.c.l.b16 %v1310
      %v1343 = vunpack.c.l.b16 %v1311
      %v1344 = vunpack.c.l.b16 %v1312
      %v1345 = vunpack.c.l.b16 %v1313
      %v1346 = vunpack.c.l.b16 %v1314
      %v1347 = vunpack.c.l.b16 %v1315
      %v1348 = vpack.c.b16 %v1333, %v1332
      %v1349 = vpack.c.b16 %v1335, %v1334
      %v1350 = vpack.c.b16 %v1337, %v1336
      %v1351 = vpack.c.b16 %v1339, %v1338
      %v1352 = vpack.c.b16 %v1341, %v1340
      %v1353 = vpack.c.b16 %v1343, %v1342
      %v1354 = vpack.c.b16 %v1345, %v1344
      %v1355 = vpack.c.b16 %v1347, %v1346
      %1364 = vmatprep.subr.bf16.mxu0 0
      %1365 = vmatpush1.bf16.msra.mxu0 %v1348
      %1366 = vmatprep.subr.bf16.mxu0 0
      %1367 = vmatpush1.bf16.msra.mxu0 %v1349
      %1368 = vmatprep.subr.bf16.mxu0 0
      %1369 = vmatpush1.bf16.msra.mxu0 %v1350
      %1370 = vmatprep.subr.bf16.mxu0 0
      %1371 = vmatpush1.bf16.msra.mxu0 %v1351
      %1372 = vmatprep.subr.bf16.mxu0 0
      %1373 = vmatpush1.bf16.msra.mxu0 %v1352
      %1374 = vmatprep.subr.bf16.mxu0 0
      %1375 = vmatpush1.bf16.msra.mxu0 %v1353
      %1376 = vmatprep.subr.bf16.mxu0 0
      %1377 = vmatpush1.bf16.msra.mxu0 %v1354
      %1378 = vmatprep.subr.bf16.mxu0 0
      %1379 = vmatpush1.bf16.msra.mxu0 %v1355
      %1380 = vmatprep.subr.bf16.mxu0 0
      %1381 = vmatpush1.bf16.msra.mxu0 0
      %1382 = vmatprep.subr.bf16.mxu0 0
      %1383 = vmatpush1.bf16.msra.mxu0 0
      %1384 = vmatprep.subr.bf16.mxu0 0
      %1385 = vmatpush1.bf16.msra.mxu0 0
      %1386 = vmatprep.subr.bf16.mxu0 0
      %1387 = vmatpush1.bf16.msra.mxu0 0
      %1388 = vmatprep.subr.bf16.mxu0 0
      %1389 = vmatpush1.bf16.msra.mxu0 0
      %1390 = vmatprep.subr.bf16.mxu0 0
      %1391 = vmatpush1.bf16.msra.mxu0 0
      %1392 = vmatprep.subr.bf16.mxu0 0
      %1393 = vmatpush1.bf16.msra.mxu0 0
      %1394 = vmatprep.subr.bf16.mxu0 0
      %1395 = vmatpush1.bf16.msra.mxu0 0
      %1396 = vmatprep.mubr.bf16.mxu0 0
      %1397 = vmatmul.mubr.bf16.gmra.mrb[0].mxu0 %v1295
      %v1398 = vpop.f32.mrb[0].mxu0
      %v1399 = vadd.f32 0.0, %v1398
      %v1400 = vpop.f32.mrb[0].mxu0
      %v1401 = vpop.f32.mrb[0].mxu0
      %v1402 = vadd.f32 0.0, %v1401
      %v1403 = vpop.f32.mrb[0].mxu0
      %1404 = vmatprep.mubr.bf16.mxu0 0
      %1405 = vmatmul.mubr.bf16.gmra.mrb[0].mxu0 %v1296
      %v1406 = vpop.f32.mrb[0].mxu0
      %v1407 = vadd.f32 0.0, %v1406
      %v1408 = vpop.f32.mrb[0].mxu0
      %v1409 = vpop.f32.mrb[0].mxu0
      %v1410 = vadd.f32 0.0, %v1409
      %v1411 = vpop.f32.mrb[0].mxu0
      %1412 = vmatprep.mubr.bf16.mxu0 0
      %1413 = vmatmul.mubr.bf16.gmra.mrb[0].mxu0 %v1297
      %v1414 = vpop.f32.mrb[0].mxu0
      %v1415 = vadd.f32 0.0, %v1414
      %v1416 = vpop.f32.mrb[0].mxu0
      %v1417 = vpop.f32.mrb[0].mxu0
      %v1418 = vadd.f32 0.0, %v1417
      %v1419 = vpop.f32.mrb[0].mxu0
      %1420 = vmatprep.mubr.bf16.mxu0 0
      %1421 = vmatmul.mubr.bf16.gmra.mrb[0].mxu0 %v1298
      %v1422 = vpop.f32.mrb[0].mxu0
      %v1423 = vadd.f32 0.0, %v1422
      %v1424 = vpop.f32.mrb[0].mxu0
      %v1425 = vpop.f32.mrb[0].mxu0
      %v1426 = vadd.f32 0.0, %v1425
      %v1427 = vpop.f32.mrb[0].mxu0
      %1428 = vdwg.mxu0
      %v1429 = vadd.f32 %v1287, %v1399
      %v1430 = vadd.f32 %v1288, %v1402
      %v1431 = vadd.f32 %v1289, %v1407
      %v1432 = vadd.f32 %v1290, %v1410
      %v1433 = vadd.f32 %v1291, %v1415
      %v1434 = vadd.f32 %v1292, %v1418
      %v1435 = vadd.f32 %v1293, %v1423
      %v1436 = vadd.f32 %v1294, %v1426
      %v1437 = vpack.c.bf16 %v326, %v325
      %v1438 = vpack.c.bf16 %v328, %v327
      %v1439 = vpack.c.bf16 %v330, %v329
      %v1440 = vpack.c.bf16 %v332, %v331
      %s1441 = scalar_lea.vmem %s1, 448
      %v1442 = vld [vmem:[%s1441] sm:$0xf]
      %v1443 = vld [vmem:[%s1441 + $0x4] sm:$0xf]
      %v1444 = vld [vmem:[%s1441 + $0x8] sm:$0xf]
      %v1445 = vld [vmem:[%s1441 + $0xc] sm:$0xf]
      %v1446 = vld [vmem:[%s1441 + $0x10] sm:$0xf]
      %v1447 = vld [vmem:[%s1441 + $0x14] sm:$0xf]
      %v1448 = vld [vmem:[%s1441 + $0x18] sm:$0xf]
      %v1449 = vld [vmem:[%s1441 + $0x1c] sm:$0xf]
      %v1450 = vld [vmem:[%s1441 + $0x20] sm:$0xf]
      %v1451 = vld [vmem:[%s1441 + $0x24] sm:$0xf]
      %v1452 = vld [vmem:[%s1441 + $0x28] sm:$0xf]
      %v1453 = vld [vmem:[%s1441 + $0x2c] sm:$0xf]
      %v1454 = vld [vmem:[%s1441 + $0x30] sm:$0xf]
      %v1455 = vld [vmem:[%s1441 + $0x34] sm:$0xf]
      %v1456 = vld [vmem:[%s1441 + $0x38] sm:$0xf]
      %v1457 = vld [vmem:[%s1441 + $0x3c] sm:$0xf]
      %v1474 = vunpack.c.l.b16 %v1442
      %v1475 = vunpack.c.l.b16 %v1443
      %v1476 = vunpack.c.l.b16 %v1444
      %v1477 = vunpack.c.l.b16 %v1445
      %v1478 = vunpack.c.l.b16 %v1446
      %v1479 = vunpack.c.l.b16 %v1447
      %v1480 = vunpack.c.l.b16 %v1448
      %v1481 = vunpack.c.l.b16 %v1449
      %v1482 = vunpack.c.l.b16 %v1450
      %v1483 = vunpack.c.l.b16 %v1451
      %v1484 = vunpack.c.l.b16 %v1452
      %v1485 = vunpack.c.l.b16 %v1453
      %v1486 = vunpack.c.l.b16 %v1454
      %v1487 = vunpack.c.l.b16 %v1455
      %v1488 = vunpack.c.l.b16 %v1456
      %v1489 = vunpack.c.l.b16 %v1457
      %v1490 = vpack.c.b16 %v1475, %v1474
      %v1491 = vpack.c.b16 %v1477, %v1476
      %v1492 = vpack.c.b16 %v1479, %v1478
      %v1493 = vpack.c.b16 %v1481, %v1480
      %v1494 = vpack.c.b16 %v1483, %v1482
      %v1495 = vpack.c.b16 %v1485, %v1484
      %v1496 = vpack.c.b16 %v1487, %v1486
      %v1497 = vpack.c.b16 %v1489, %v1488
      %1506 = vmatprep.subr.bf16.mxu0 0
      %1507 = vmatpush1.bf16.msra.mxu0 %v1490
      %1508 = vmatprep.subr.bf16.mxu0 0
      %1509 = vmatpush1.bf16.msra.mxu0 %v1491
      %1510 = vmatprep.subr.bf16.mxu0 0
      %1511 = vmatpush1.bf16.msra.mxu0 %v1492
      %1512 = vmatprep.subr.bf16.mxu0 0
      %1513 = vmatpush1.bf16.msra.mxu0 %v1493
      %1514 = vmatprep.subr.bf16.mxu0 0
      %1515 = vmatpush1.bf16.msra.mxu0 %v1494
      %1516 = vmatprep.subr.bf16.mxu0 0
      %1517 = vmatpush1.bf16.msra.mxu0 %v1495
      %1518 = vmatprep.subr.bf16.mxu0 0
      %1519 = vmatpush1.bf16.msra.mxu0 %v1496
      %1520 = vmatprep.subr.bf16.mxu0 0
      %1521 = vmatpush1.bf16.msra.mxu0 %v1497
      %1522 = vmatprep.subr.bf16.mxu0 0
      %1523 = vmatpush1.bf16.msra.mxu0 0
      %1524 = vmatprep.subr.bf16.mxu0 0
      %1525 = vmatpush1.bf16.msra.mxu0 0
      %1526 = vmatprep.subr.bf16.mxu0 0
      %1527 = vmatpush1.bf16.msra.mxu0 0
      %1528 = vmatprep.subr.bf16.mxu0 0
      %1529 = vmatpush1.bf16.msra.mxu0 0
      %1530 = vmatprep.subr.bf16.mxu0 0
      %1531 = vmatpush1.bf16.msra.mxu0 0
      %1532 = vmatprep.subr.bf16.mxu0 0
      %1533 = vmatpush1.bf16.msra.mxu0 0
      %1534 = vmatprep.subr.bf16.mxu0 0
      %1535 = vmatpush1.bf16.msra.mxu0 0
      %1536 = vmatprep.subr.bf16.mxu0 0
      %1537 = vmatpush1.bf16.msra.mxu0 0
      %1538 = vmatprep.mubr.bf16.mxu0 0
      %1539 = vmatmul.mubr.bf16.gmra.mrb[0].mxu0 %v1437
      %v1540 = vpop.f32.mrb[0].mxu0
      %v1541 = vadd.f32 0.0, %v1540
      %v1542 = vpop.f32.mrb[0].mxu0
      %v1543 = vpop.f32.mrb[0].mxu0
      %v1544 = vadd.f32 0.0, %v1543
      %v1545 = vpop.f32.mrb[0].mxu0
      %1546 = vmatprep.mubr.bf16.mxu0 0
      %1547 = vmatmul.mubr.bf16.gmra.mrb[0].mxu0 %v1438
      %v1548 = vpop.f32.mrb[0].mxu0
      %v1549 = vadd.f32 0.0, %v1548
      %v1550 = vpop.f32.mrb[0].mxu0
      %v1551 = vpop.f32.mrb[0].mxu0
      %v1552 = vadd.f32 0.0, %v1551
      %v1553 = vpop.f32.mrb[0].mxu0
      %1554 = vmatprep.mubr.bf16.mxu0 0
      %1555 = vmatmul.mubr.bf16.gmra.mrb[0].mxu0 %v1439
      %v1556 = vpop.f32.mrb[0].mxu0
      %v1557 = vadd.f32 0.0, %v1556
      %v1558 = vpop.f32.mrb[0].mxu0
      %v1559 = vpop.f32.mrb[0].mxu0
      %v1560 = vadd.f32 0.0, %v1559
      %v1561 = vpop.f32.mrb[0].mxu0
      %1562 = vmatprep.mubr.bf16.mxu0 0
      %1563 = vmatmul.mubr.bf16.gmra.mrb[0].mxu0 %v1440
      %v1564 = vpop.f32.mrb[0].mxu0
      %v1565 = vadd.f32 0.0, %v1564
      %v1566 = vpop.f32.mrb[0].mxu0
      %v1567 = vpop.f32.mrb[0].mxu0
      %v1568 = vadd.f32 0.0, %v1567
      %v1569 = vpop.f32.mrb[0].mxu0
      %1570 = vdwg.mxu0
      %v1571 = vadd.f32 %v1429, %v1541
      %v1572 = vadd.f32 %v1430, %v1544
      %v1573 = vadd.f32 %v1431, %v1549
      %v1574 = vadd.f32 %v1432, %v1552
      %v1575 = vadd.f32 %v1433, %v1557
      %v1576 = vadd.f32 %v1434, %v1560
      %v1577 = vadd.f32 %v1435, %v1565
      %v1578 = vadd.f32 %v1436, %v1568
      %v1581 = vrot.slane %v292, 1
      %v1582 = vrot.slane %v293, 1
      %v1583 = vsel %vm596, %v1581, %v1582
      %v1585 = vpack.c.bf16 %v605, %v602
      %v1586 = vpack.c.bf16 %v611, %v608
      %v1587 = vpack.c.bf16 %v617, %v614
      %v1588 = vpack.c.bf16 %v1583, %v620
      %s1589 = scalar_lea.vmem %s1, 512
      %v1590 = vld [vmem:[%s1589] sm:$0xf]
      %v1591 = vld [vmem:[%s1589 + $0x4] sm:$0xf]
      %v1592 = vld [vmem:[%s1589 + $0x8] sm:$0xf]
      %v1593 = vld [vmem:[%s1589 + $0xc] sm:$0xf]
      %v1594 = vld [vmem:[%s1589 + $0x10] sm:$0xf]
      %v1595 = vld [vmem:[%s1589 + $0x14] sm:$0xf]
      %v1596 = vld [vmem:[%s1589 + $0x18] sm:$0xf]
      %v1597 = vld [vmem:[%s1589 + $0x1c] sm:$0xf]
      %v1598 = vld [vmem:[%s1589 + $0x20] sm:$0xf]
      %v1599 = vld [vmem:[%s1589 + $0x24] sm:$0xf]
      %v1600 = vld [vmem:[%s1589 + $0x28] sm:$0xf]
      %v1601 = vld [vmem:[%s1589 + $0x2c] sm:$0xf]
      %v1602 = vld [vmem:[%s1589 + $0x30] sm:$0xf]
      %v1603 = vld [vmem:[%s1589 + $0x34] sm:$0xf]
      %v1604 = vld [vmem:[%s1589 + $0x38] sm:$0xf]
      %v1605 = vld [vmem:[%s1589 + $0x3c] sm:$0xf]
      %v1622 = vunpack.c.l.b16 %v1590
      %v1623 = vunpack.c.l.b16 %v1591
      %v1624 = vunpack.c.l.b16 %v1592
      %v1625 = vunpack.c.l.b16 %v1593
      %v1626 = vunpack.c.l.b16 %v1594
      %v1627 = vunpack.c.l.b16 %v1595
      %v1628 = vunpack.c.l.b16 %v1596
      %v1629 = vunpack.c.l.b16 %v1597
      %v1630 = vunpack.c.l.b16 %v1598
      %v1631 = vunpack.c.l.b16 %v1599
      %v1632 = vunpack.c.l.b16 %v1600
      %v1633 = vunpack.c.l.b16 %v1601
      %v1634 = vunpack.c.l.b16 %v1602
      %v1635 = vunpack.c.l.b16 %v1603
      %v1636 = vunpack.c.l.b16 %v1604
      %v1637 = vunpack.c.l.b16 %v1605
      %v1638 = vpack.c.b16 %v1623, %v1622
      %v1639 = vpack.c.b16 %v1625, %v1624
      %v1640 = vpack.c.b16 %v1627, %v1626
      %v1641 = vpack.c.b16 %v1629, %v1628
      %v1642 = vpack.c.b16 %v1631, %v1630
      %v1643 = vpack.c.b16 %v1633, %v1632
      %v1644 = vpack.c.b16 %v1635, %v1634
      %v1645 = vpack.c.b16 %v1637, %v1636
      %1654 = vmatprep.subr.bf16.mxu0 0
      %1655 = vmatpush1.bf16.msra.mxu0 %v1638
      %1656 = vmatprep.subr.bf16.mxu0 0
      %1657 = vmatpush1.bf16.msra.mxu0 %v1639
      %1658 = vmatprep.subr.bf16.mxu0 0
      %1659 = vmatpush1.bf16.msra.mxu0 %v1640
      %1660 = vmatprep.subr.bf16.mxu0 0
      %1661 = vmatpush1.bf16.msra.mxu0 %v1641
      %1662 = vmatprep.subr.bf16.mxu0 0
      %1663 = vmatpush1.bf16.msra.mxu0 %v1642
      %1664 = vmatprep.subr.bf16.mxu0 0
      %1665 = vmatpush1.bf16.msra.mxu0 %v1643
      %1666 = vmatprep.subr.bf16.mxu0 0
      %1667 = vmatpush1.bf16.msra.mxu0 %v1644
      %1668 = vmatprep.subr.bf16.mxu0 0
      %1669 = vmatpush1.bf16.msra.mxu0 %v1645
      %1670 = vmatprep.subr.bf16.mxu0 0
      %1671 = vmatpush1.bf16.msra.mxu0 0
      %1672 = vmatprep.subr.bf16.mxu0 0
      %1673 = vmatpush1.bf16.msra.mxu0 0
      %1674 = vmatprep.subr.bf16.mxu0 0
      %1675 = vmatpush1.bf16.msra.mxu0 0
      %1676 = vmatprep.subr.bf16.mxu0 0
      %1677 = vmatpush1.bf16.msra.mxu0 0
      %1678 = vmatprep.subr.bf16.mxu0 0
      %1679 = vmatpush1.bf16.msra.mxu0 0
      %1680 = vmatprep.subr.bf16.mxu0 0
      %1681 = vmatpush1.bf16.msra.mxu0 0
      %1682 = vmatprep.subr.bf16.mxu0 0
      %1683 = vmatpush1.bf16.msra.mxu0 0
      %1684 = vmatprep.subr.bf16.mxu0 0
      %1685 = vmatpush1.bf16.msra.mxu0 0
      %1686 = vmatprep.mubr.bf16.mxu0 0
      %1687 = vmatmul.mubr.bf16.gmra.mrb[0].mxu0 %v1585
      %v1688 = vpop.f32.mrb[0].mxu0
      %v1689 = vadd.f32 0.0, %v1688
      %v1690 = vpop.f32.mrb[0].mxu0
      %v1691 = vpop.f32.mrb[0].mxu0
      %v1692 = vadd.f32 0.0, %v1691
      %v1693 = vpop.f32.mrb[0].mxu0
      %1694 = vmatprep.mubr.bf16.mxu0 0
      %1695 = vmatmul.mubr.bf16.gmra.mrb[0].mxu0 %v1586
      %v1696 = vpop.f32.mrb[0].mxu0
      %v1697 = vadd.f32 0.0, %v1696
      %v1698 = vpop.f32.mrb[0].mxu0
      %v1699 = vpop.f32.mrb[0].mxu0
      %v1700 = vadd.f32 0.0, %v1699
      %v1701 = vpop.f32.mrb[0].mxu0
      %1702 = vmatprep.mubr.bf16.mxu0 0
      %1703 = vmatmul.mubr.bf16.gmra.mrb[0].mxu0 %v1587
      %v1704 = vpop.f32.mrb[0].mxu0
      %v1705 = vadd.f32 0.0, %v1704
      %v1706 = vpop.f32.mrb[0].mxu0
      %v1707 = vpop.f32.mrb[0].mxu0
      %v1708 = vadd.f32 0.0, %v1707
      %v1709 = vpop.f32.mrb[0].mxu0
      %1710 = vmatprep.mubr.bf16.mxu0 0
      %1711 = vmatmul.mubr.bf16.gmra.mrb[0].mxu0 %v1588
      %v1712 = vpop.f32.mrb[0].mxu0
      %v1713 = vadd.f32 0.0, %v1712
      %v1714 = vpop.f32.mrb[0].mxu0
      %v1715 = vpop.f32.mrb[0].mxu0
      %v1716 = vadd.f32 0.0, %v1715
      %v1717 = vpop.f32.mrb[0].mxu0
      %1718 = vdwg.mxu0
      %v1719 = vadd.f32 %v1571, %v1689
      %v1720 = vadd.f32 %v1572, %v1692
      %v1721 = vadd.f32 %v1573, %v1697
      %v1722 = vadd.f32 %v1574, %v1700
      %v1723 = vadd.f32 %v1575, %v1705
      %v1724 = vadd.f32 %v1576, %v1708
      %v1725 = vadd.f32 %v1577, %v1713
      %v1726 = vadd.f32 %v1578, %v1716
      %v1727 = vld [vmem:[%s2] sm:$0x1]
      %v1729 = vlaneseq
      %v1730 = vshrl.u32 %v1729, 7
      %v1731 = vsub.s32 0, %v1730
      %v1732 = vrot.slane %v1727, %v1731
      %v1734 = vadd.f32 %v1719, %v1732
      %v1735 = vadd.f32 %v1720, %v1732
      %v1736 = vadd.f32 %v1721, %v1732
      %v1737 = vadd.f32 %v1722, %v1732
      %v1738 = vadd.f32 %v1723, %v1732
      %v1739 = vadd.f32 %v1724, %v1732
      %v1740 = vadd.f32 %v1725, %v1732
      %v1741 = vadd.f32 %v1726, %v1732
      %v1742 = vmax.f32 %v1734, 0.0
      %v1743 = vmax.f32 %v1735, 0.0
      %v1744 = vmax.f32 %v1736, 0.0
      %v1745 = vmax.f32 %v1737, 0.0
      %v1746 = vmax.f32 %v1738, 0.0
      %v1747 = vmax.f32 %v1739, 0.0
      %v1748 = vmax.f32 %v1740, 0.0
      %v1749 = vmax.f32 %v1741, 0.0
      %1750 = vst [vmem:[#allocation2] sm:$0xff] 0.0
      %1751 = vst [vmem:[#allocation2 + $0x8] sm:$0x3] 0.0
      %1752 = vst [vmem:[#allocation2 + $0x10] sm:$0xff] 0.0
      %1753 = vst [vmem:[#allocation2 + $0x18] sm:$0x3] 0.0
      %1754 = vst [vmem:[#allocation2 + $0x20] sm:$0xff] 0.0
      %1755 = vst [vmem:[#allocation2 + $0x28] sm:$0x3] 0.0
      %1756 = vst [vmem:[#allocation2 + $0x30] sm:$0xff] 0.0
      %1757 = vst [vmem:[#allocation2 + $0x38] sm:$0x3] 0.0
      %1758 = vst [vmem:[#allocation2 + $0x40] sm:$0xff] 0.0
      %1759 = vst [vmem:[#allocation2 + $0x48] sm:$0x3] 0.0
      %1760 = vst [vmem:[#allocation2 + $0x50] sm:$0xff] 0.0
      %1761 = vst [vmem:[#allocation2 + $0x58] sm:$0x3] 0.0
      %1762 = vst [vmem:[#allocation2 + $0x60] sm:$0xff] 0.0
      %1763 = vst [vmem:[#allocation2 + $0x68] sm:$0x3] 0.0
      %1764 = vst [vmem:[#allocation2 + $0x70] sm:$0xff] 0.0
      %1765 = vst [vmem:[#allocation2 + $0x78] sm:$0x3] 0.0
      %1766 = vst [vmem:[#allocation2 + $0x80] sm:$0xff] 0.0
      %1767 = vst [vmem:[#allocation2 + $0x88] sm:$0x3] 0.0
      %1768 = vst [vmem:[#allocation2 + $0x90] sm:$0xff] 0.0
      %1769 = vst [vmem:[#allocation2 + $0x98] sm:$0x3] 0.0
      %s1770 = scalar_lea.vmem [#allocation2], 16
      %1771 = vst [vmem:[%s1770 + $0x1] sm:$0xff] %v1742
      %1772 = vst [vmem:[%s1770 + $0x11] sm:$0xff] %v1743
      %1773 = vst [vmem:[%s1770 + $0x21] sm:$0xff] %v1744
      %1774 = vst [vmem:[%s1770 + $0x31] sm:$0xff] %v1745
      %1775 = vst [vmem:[%s1770 + $0x41] sm:$0xff] %v1746
      %1776 = vst [vmem:[%s1770 + $0x51] sm:$0xff] %v1747
      %1777 = vst [vmem:[%s1770 + $0x61] sm:$0xff] %v1748
      %1778 = vst [vmem:[%s1770 + $0x71] sm:$0xff] %v1749
      %v1779 = vld [vmem:[#allocation2] sm:$0xff]
      %v1780 = vld [vmem:[#allocation2 + $0x8] sm:$0x3]
      %v1781 = vld [vmem:[#allocation2 + $0x10] sm:$0xff]
      %v1782 = vld [vmem:[#allocation2 + $0x18] sm:$0x3]
      %v1783 = vld [vmem:[#allocation2 + $0x20] sm:$0xff]
      %v1784 = vld [vmem:[#allocation2 + $0x28] sm:$0x3]
      %v1785 = vld [vmem:[#allocation2 + $0x30] sm:$0xff]
      %v1786 = vld [vmem:[#allocation2 + $0x38] sm:$0x3]
      %v1787 = vld [vmem:[#allocation2 + $0x40] sm:$0xff]
      %v1788 = vld [vmem:[#allocation2 + $0x48] sm:$0x3]
      %v1789 = vld [vmem:[#allocation2 + $0x50] sm:$0xff]
      %v1790 = vld [vmem:[#allocation2 + $0x58] sm:$0x3]
      %v1791 = vld [vmem:[#allocation2 + $0x60] sm:$0xff]
      %v1792 = vld [vmem:[#allocation2 + $0x68] sm:$0x3]
      %v1793 = vld [vmem:[#allocation2 + $0x70] sm:$0xff]
      %v1794 = vld [vmem:[#allocation2 + $0x78] sm:$0x3]
      %v1795 = vld [vmem:[#allocation2 + $0x80] sm:$0xff]
      %v1796 = vld [vmem:[#allocation2 + $0x88] sm:$0x3]
      %v1797 = vld [vmem:[#allocation2 + $0x90] sm:$0xff]
      %v1798 = vld [vmem:[#allocation2 + $0x98] sm:$0x3]
      %v1799 = vpack.c.bf16 %v1781, %v1779
      %v1800 = vpack.c.bf16 %v1785, %v1783
      %v1801 = vpack.c.bf16 %v1789, %v1787
      %v1802 = vpack.c.bf16 %v1793, %v1791
      %v1803 = vld [vmem:[%s3] sm:$0xf]
      %v1804 = vld [vmem:[%s3 + $0x4] sm:$0xf]
      %v1805 = vld [vmem:[%s3 + $0x8] sm:$0xf]
      %v1806 = vld [vmem:[%s3 + $0xc] sm:$0xf]
      %v1807 = vld [vmem:[%s3 + $0x10] sm:$0xf]
      %v1808 = vld [vmem:[%s3 + $0x14] sm:$0xf]
      %v1809 = vld [vmem:[%s3 + $0x18] sm:$0xf]
      %v1810 = vld [vmem:[%s3 + $0x1c] sm:$0xf]
      %v1811 = vld [vmem:[%s3 + $0x20] sm:$0xf]
      %v1812 = vld [vmem:[%s3 + $0x24] sm:$0xf]
      %v1813 = vld [vmem:[%s3 + $0x28] sm:$0xf]
      %v1814 = vld [vmem:[%s3 + $0x2c] sm:$0xf]
      %v1815 = vld [vmem:[%s3 + $0x30] sm:$0xf]
      %v1816 = vld [vmem:[%s3 + $0x34] sm:$0xf]
      %v1817 = vld [vmem:[%s3 + $0x38] sm:$0xf]
      %v1818 = vld [vmem:[%s3 + $0x3c] sm:$0xf]
      %v1835 = vrot.slane %v1779, 1
      %v1836 = vrot.slane %v1780, 1
      %v1837 = vsel %vm596, %v1835, %v1836
      %v1838 = vrot.slane %v1781, 1
      %v1839 = vrot.slane %v1782, 1
      %v1840 = vsel %vm596, %v1838, %v1839
      %v1841 = vrot.slane %v1783, 1
      %v1842 = vrot.slane %v1784, 1
      %v1843 = vsel %vm596, %v1841, %v1842
      %v1844 = vrot.slane %v1785, 1
      %v1845 = vrot.slane %v1786, 1
      %v1846 = vsel %vm596, %v1844, %v1845
      %v1847 = vrot.slane %v1787, 1
      %v1848 = vrot.slane %v1788, 1
      %v1849 = vsel %vm596, %v1847, %v1848
      %v1850 = vrot.slane %v1789, 1
      %v1851 = vrot.slane %v1790, 1
      %v1852 = vsel %vm596, %v1850, %v1851
      %v1853 = vrot.slane %v1791, 1
      %v1854 = vrot.slane %v1792, 1
      %v1855 = vsel %vm596, %v1853, %v1854
      %v1856 = vrot.slane %v1793, 1
      %v1857 = vrot.slane %v1794, 1
      %v1858 = vsel %vm596, %v1856, %v1857
      %v1867 = vpack.c.bf16 %v1840, %v1837
      %v1868 = vpack.c.bf16 %v1846, %v1843
      %v1869 = vpack.c.bf16 %v1852, %v1849
      %v1870 = vpack.c.bf16 %v1858, %v1855
      %s1871 = scalar_lea.vmem %s3, 64
      %v1872 = vld [vmem:[%s1871] sm:$0xf]
      %v1873 = vld [vmem:[%s1871 + $0x4] sm:$0xf]
      %v1874 = vld [vmem:[%s1871 + $0x8] sm:$0xf]
      %v1875 = vld [vmem:[%s1871 + $0xc] sm:$0xf]
      %v1876 = vld [vmem:[%s1871 + $0x10] sm:$0xf]
      %v1877 = vld [vmem:[%s1871 + $0x14] sm:$0xf]
      %v1878 = vld [vmem:[%s1871 + $0x18] sm:$0xf]
      %v1879 = vld [vmem:[%s1871 + $0x1c] sm:$0xf]
      %v1880 = vld [vmem:[%s1871 + $0x20] sm:$0xf]
      %v1881 = vld [vmem:[%s1871 + $0x24] sm:$0xf]
      %v1882 = vld [vmem:[%s1871 + $0x28] sm:$0xf]
      %v1883 = vld [vmem:[%s1871 + $0x2c] sm:$0xf]
      %v1884 = vld [vmem:[%s1871 + $0x30] sm:$0xf]
      %v1885 = vld [vmem:[%s1871 + $0x34] sm:$0xf]
      %v1886 = vld [vmem:[%s1871 + $0x38] sm:$0xf]
      %v1887 = vld [vmem:[%s1871 + $0x3c] sm:$0xf]
      %v1904 = vunpack.c.l.b16 %v1872
      %v1905 = vunpack.c.l.b16 %v1873
      %v1906 = vunpack.c.l.b16 %v1874
      %v1907 = vunpack.c.l.b16 %v1875
      %v1908 = vunpack.c.l.b16 %v1876
      %v1909 = vunpack.c.l.b16 %v1877
      %v1910 = vunpack.c.l.b16 %v1878
      %v1911 = vunpack.c.l.b16 %v1879
      %v1912 = vunpack.c.l.b16 %v1880
      %v1913 = vunpack.c.l.b16 %v1881
      %v1914 = vunpack.c.l.b16 %v1882
      %v1915 = vunpack.c.l.b16 %v1883
      %v1916 = vunpack.c.l.b16 %v1884
      %v1917 = vunpack.c.l.b16 %v1885
      %v1918 = vunpack.c.l.b16 %v1886
      %v1919 = vunpack.c.l.b16 %v1887
      %v1920 = vpack.c.b16 %v1905, %v1904
      %v1921 = vpack.c.b16 %v1907, %v1906
      %v1922 = vpack.c.b16 %v1909, %v1908
      %v1923 = vpack.c.b16 %v1911, %v1910
      %v1924 = vpack.c.b16 %v1913, %v1912
      %v1925 = vpack.c.b16 %v1915, %v1914
      %v1926 = vpack.c.b16 %v1917, %v1916
      %v1927 = vpack.c.b16 %v1919, %v1918
      %1936 = vmatprep.subr.bf16.mxu0 0
      %1937 = vmatpush1.bf16.msra.mxu0 %v1920
      %1938 = vmatprep.subr.bf16.mxu0 0
      %1939 = vmatpush1.bf16.msra.mxu0 %v1921
      %1940 = vmatprep.subr.bf16.mxu0 0
      %1941 = vmatpush1.bf16.msra.mxu0 %v1922
      %1942 = vmatprep.subr.bf16.mxu0 0
      %1943 = vmatpush1.bf16.msra.mxu0 %v1923
      %1944 = vmatprep.subr.bf16.mxu0 0
      %1945 = vmatpush1.bf16.msra.mxu0 %v1924
      %1946 = vmatprep.subr.bf16.mxu0 0
      %1947 = vmatpush1.bf16.msra.mxu0 %v1925
      %1948 = vmatprep.subr.bf16.mxu0 0
      %1949 = vmatpush1.bf16.msra.mxu0 %v1926
      %1950 = vmatprep.subr.bf16.mxu0 0
      %1951 = vmatpush1.bf16.msra.mxu0 %v1927
      %1952 = vmatprep.subr.bf16.mxu0 0
      %1953 = vmatpush1.bf16.msra.mxu0 0
      %1954 = vmatprep.subr.bf16.mxu0 0
      %1955 = vmatpush1.bf16.msra.mxu0 0
      %1956 = vmatprep.subr.bf16.mxu0 0
      %1957 = vmatpush1.bf16.msra.mxu0 0
      %1958 = vmatprep.subr.bf16.mxu0 0
      %1959 = vmatpush1.bf16.msra.mxu0 0
      %1960 = vmatprep.subr.bf16.mxu0 0
      %1961 = vmatpush1.bf16.msra.mxu0 0
      %1962 = vmatprep.subr.bf16.mxu0 0
      %1963 = vmatpush1.bf16.msra.mxu0 0
      %1964 = vmatprep.subr.bf16.mxu0 0
      %1965 = vmatpush1.bf16.msra.mxu0 0
      %1966 = vmatprep.subr.bf16.mxu0 0
      %1967 = vmatpush1.bf16.msra.mxu0 0
      %1968 = vmatprep.mubr.bf16.mxu0 0
      %1969 = vmatmul.mubr.bf16.gmra.mrb[0].mxu0 %v1867
      %v1970 = vpop.f32.mrb[0].mxu0
      %v1971 = vadd.f32 0.0, %v1970
      %v1972 = vpop.f32.mrb[0].mxu0
      %v1973 = vpop.f32.mrb[0].mxu0
      %v1974 = vadd.f32 0.0, %v1973
      %v1975 = vpop.f32.mrb[0].mxu0
      %1976 = vmatprep.mubr.bf16.mxu0 0
      %1977 = vmatmul.mubr.bf16.gmra.mrb[0].mxu0 %v1868
      %v1978 = vpop.f32.mrb[0].mxu0
      %v1979 = vadd.f32 0.0, %v1978
      %v1980 = vpop.f32.mrb[0].mxu0
      %v1981 = vpop.f32.mrb[0].mxu0
      %v1982 = vadd.f32 0.0, %v1981
      %v1983 = vpop.f32.mrb[0].mxu0
      %1984 = vmatprep.mubr.bf16.mxu0 0
      %1985 = vmatmul.mubr.bf16.gmra.mrb[0].mxu0 %v1869
      %v1986 = vpop.f32.mrb[0].mxu0
      %v1987 = vadd.f32 0.0, %v1986
      %v1988 = vpop.f32.mrb[0].mxu0
      %v1989 = vpop.f32.mrb[0].mxu0
      %v1990 = vadd.f32 0.0, %v1989
      %v1991 = vpop.f32.mrb[0].mxu0
      %1992 = vmatprep.mubr.bf16.mxu0 0
      %1993 = vmatmul.mubr.bf16.gmra.mrb[0].mxu0 %v1870
      %v1994 = vpop.f32.mrb[0].mxu0
      %v1995 = vadd.f32 0.0, %v1994
      %v1996 = vpop.f32.mrb[0].mxu0
      %v1997 = vpop.f32.mrb[0].mxu0
      %v1998 = vadd.f32 0.0, %v1997
      %v1999 = vpop.f32.mrb[0].mxu0
      %2000 = vdwg.mxu0
      %v2017 = vunpack.c.l.b16 %v1803
      %v2018 = vunpack.c.l.b16 %v1804
      %v2019 = vunpack.c.l.b16 %v1805
      %v2020 = vunpack.c.l.b16 %v1806
      %v2021 = vunpack.c.l.b16 %v1807
      %v2022 = vunpack.c.l.b16 %v1808
      %v2023 = vunpack.c.l.b16 %v1809
      %v2024 = vunpack.c.l.b16 %v1810
      %v2025 = vunpack.c.l.b16 %v1811
      %v2026 = vunpack.c.l.b16 %v1812
      %v2027 = vunpack.c.l.b16 %v1813
      %v2028 = vunpack.c.l.b16 %v1814
      %v2029 = vunpack.c.l.b16 %v1815
      %v2030 = vunpack.c.l.b16 %v1816
      %v2031 = vunpack.c.l.b16 %v1817
      %v2032 = vunpack.c.l.b16 %v1818
      %v2033 = vpack.c.b16 %v2018, %v2017
      %v2034 = vpack.c.b16 %v2020, %v2019
      %v2035 = vpack.c.b16 %v2022, %v2021
      %v2036 = vpack.c.b16 %v2024, %v2023
      %v2037 = vpack.c.b16 %v2026, %v2025
      %v2038 = vpack.c.b16 %v2028, %v2027
      %v2039 = vpack.c.b16 %v2030, %v2029
      %v2040 = vpack.c.b16 %v2032, %v2031
      %2049 = vmatprep.subr.bf16.mxu0 0
      %2050 = vmatpush1.bf16.msra.mxu0 %v2033
      %2051 = vmatprep.subr.bf16.mxu0 0
      %2052 = vmatpush1.bf16.msra.mxu0 %v2034
      %2053 = vmatprep.subr.bf16.mxu0 0
      %2054 = vmatpush1.bf16.msra.mxu0 %v2035
      %2055 = vmatprep.subr.bf16.mxu0 0
      %2056 = vmatpush1.bf16.msra.mxu0 %v2036
      %2057 = vmatprep.subr.bf16.mxu0 0
      %2058 = vmatpush1.bf16.msra.mxu0 %v2037
      %2059 = vmatprep.subr.bf16.mxu0 0
      %2060 = vmatpush1.bf16.msra.mxu0 %v2038
      %2061 = vmatprep.subr.bf16.mxu0 0
      %2062 = vmatpush1.bf16.msra.mxu0 %v2039
      %2063 = vmatprep.subr.bf16.mxu0 0
      %2064 = vmatpush1.bf16.msra.mxu0 %v2040
      %2065 = vmatprep.subr.bf16.mxu0 0
      %2066 = vmatpush1.bf16.msra.mxu0 0
      %2067 = vmatprep.subr.bf16.mxu0 0
      %2068 = vmatpush1.bf16.msra.mxu0 0
      %2069 = vmatprep.subr.bf16.mxu0 0
      %2070 = vmatpush1.bf16.msra.mxu0 0
      %2071 = vmatprep.subr.bf16.mxu0 0
      %2072 = vmatpush1.bf16.msra.mxu0 0
      %2073 = vmatprep.subr.bf16.mxu0 0
      %2074 = vmatpush1.bf16.msra.mxu0 0
      %2075 = vmatprep.subr.bf16.mxu0 0
      %2076 = vmatpush1.bf16.msra.mxu0 0
      %2077 = vmatprep.subr.bf16.mxu0 0
      %2078 = vmatpush1.bf16.msra.mxu0 0
      %2079 = vmatprep.subr.bf16.mxu0 0
      %2080 = vmatpush1.bf16.msra.mxu0 0
      %2081 = vmatprep.mubr.bf16.mxu0 0
      %2082 = vmatmul.mubr.bf16.gmra.mrb[0].mxu0 %v1799
      %v2083 = vpop.f32.mrb[0].mxu0
      %v2084 = vadd.f32 %v1971, %v2083
      %v2085 = vpop.f32.mrb[0].mxu0
      %v2086 = vpop.f32.mrb[0].mxu0
      %v2087 = vadd.f32 %v1974, %v2086
      %v2088 = vpop.f32.mrb[0].mxu0
      %2089 = vmatprep.mubr.bf16.mxu0 0
      %2090 = vmatmul.mubr.bf16.gmra.mrb[0].mxu0 %v1800
      %v2091 = vpop.f32.mrb[0].mxu0
      %v2092 = vadd.f32 %v1979, %v2091
      %v2093 = vpop.f32.mrb[0].mxu0
      %v2094 = vpop.f32.mrb[0].mxu0
      %v2095 = vadd.f32 %v1982, %v2094
      %v2096 = vpop.f32.mrb[0].mxu0
      %2097 = vmatprep.mubr.bf16.mxu0 0
      %2098 = vmatmul.mubr.bf16.gmra.mrb[0].mxu0 %v1801
      %v2099 = vpop.f32.mrb[0].mxu0
      %v2100 = vadd.f32 %v1987, %v2099
      %v2101 = vpop.f32.mrb[0].mxu0
      %v2102 = vpop.f32.mrb[0].mxu0
      %v2103 = vadd.f32 %v1990, %v2102
      %v2104 = vpop.f32.mrb[0].mxu0
      %2105 = vmatprep.mubr.bf16.mxu0 0
      %2106 = vmatmul.mubr.bf16.gmra.mrb[0].mxu0 %v1802
      %v2107 = vpop.f32.mrb[0].mxu0
      %v2108 = vadd.f32 %v1995, %v2107
      %v2109 = vpop.f32.mrb[0].mxu0
      %v2110 = vpop.f32.mrb[0].mxu0
      %v2111 = vadd.f32 %v1998, %v2110
      %v2112 = vpop.f32.mrb[0].mxu0
      %2113 = vdwg.mxu0
      %vm2114 = vcmask 1045504
      %v2115 = vrot.slane %v1779, 2
      %v2116 = vrot.slane %v1780, 2
      %v2117 = vsel %vm2114, %v2115, %v2116
      %v2118 = vrot.slane %v1781, 2
      %v2119 = vrot.slane %v1782, 2
      %v2120 = vsel %vm2114, %v2118, %v2119
      %v2121 = vrot.slane %v1783, 2
      %v2122 = vrot.slane %v1784, 2
      %v2123 = vsel %vm2114, %v2121, %v2122
      %v2124 = vrot.slane %v1785, 2
      %v2125 = vrot.slane %v1786, 2
      %v2126 = vsel %vm2114, %v2124, %v2125
      %v2127 = vrot.slane %v1787, 2
      %v2128 = vrot.slane %v1788, 2
      %v2129 = vsel %vm2114, %v2127, %v2128
      %v2130 = vrot.slane %v1789, 2
      %v2131 = vrot.slane %v1790, 2
      %v2132 = vsel %vm2114, %v2130, %v2131
      %v2133 = vrot.slane %v1791, 2
      %v2134 = vrot.slane %v1792, 2
      %v2135 = vsel %vm2114, %v2133, %v2134
      %v2136 = vrot.slane %v1793, 2
      %v2137 = vrot.slane %v1794, 2
      %v2138 = vsel %vm2114, %v2136, %v2137
      %v2147 = vpack.c.bf16 %v2120, %v2117
      %v2148 = vpack.c.bf16 %v2126, %v2123
      %v2149 = vpack.c.bf16 %v2132, %v2129
      %v2150 = vpack.c.bf16 %v2138, %v2135
      %s2151 = scalar_lea.vmem %s3, 128
      %v2152 = vld [vmem:[%s2151] sm:$0xf]
      %v2153 = vld [vmem:[%s2151 + $0x4] sm:$0xf]
      %v2154 = vld [vmem:[%s2151 + $0x8] sm:$0xf]
      %v2155 = vld [vmem:[%s2151 + $0xc] sm:$0xf]
      %v2156 = vld [vmem:[%s2151 + $0x10] sm:$0xf]
      %v2157 = vld [vmem:[%s2151 + $0x14] sm:$0xf]
      %v2158 = vld [vmem:[%s2151 + $0x18] sm:$0xf]
      %v2159 = vld [vmem:[%s2151 + $0x1c] sm:$0xf]
      %v2160 = vld [vmem:[%s2151 + $0x20] sm:$0xf]
      %v2161 = vld [vmem:[%s2151 + $0x24] sm:$0xf]
      %v2162 = vld [vmem:[%s2151 + $0x28] sm:$0xf]
      %v2163 = vld [vmem:[%s2151 + $0x2c] sm:$0xf]
      %v2164 = vld [vmem:[%s2151 + $0x30] sm:$0xf]
      %v2165 = vld [vmem:[%s2151 + $0x34] sm:$0xf]
      %v2166 = vld [vmem:[%s2151 + $0x38] sm:$0xf]
      %v2167 = vld [vmem:[%s2151 + $0x3c] sm:$0xf]
      %v2184 = vunpack.c.l.b16 %v2152
      %v2185 = vunpack.c.l.b16 %v2153
      %v2186 = vunpack.c.l.b16 %v2154
      %v2187 = vunpack.c.l.b16 %v2155
      %v2188 = vunpack.c.l.b16 %v2156
      %v2189 = vunpack.c.l.b16 %v2157
      %v2190 = vunpack.c.l.b16 %v2158
      %v2191 = vunpack.c.l.b16 %v2159
      %v2192 = vunpack.c.l.b16 %v2160
      %v2193 = vunpack.c.l.b16 %v2161
      %v2194 = vunpack.c.l.b16 %v2162
      %v2195 = vunpack.c.l.b16 %v2163
      %v2196 = vunpack.c.l.b16 %v2164
      %v2197 = vunpack.c.l.b16 %v2165
      %v2198 = vunpack.c.l.b16 %v2166
      %v2199 = vunpack.c.l.b16 %v2167
      %v2200 = vpack.c.b16 %v2185, %v2184
      %v2201 = vpack.c.b16 %v2187, %v2186
      %v2202 = vpack.c.b16 %v2189, %v2188
      %v2203 = vpack.c.b16 %v2191, %v2190
      %v2204 = vpack.c.b16 %v2193, %v2192
      %v2205 = vpack.c.b16 %v2195, %v2194
      %v2206 = vpack.c.b16 %v2197, %v2196
      %v2207 = vpack.c.b16 %v2199, %v2198
      %2216 = vmatprep.subr.bf16.mxu0 0
      %2217 = vmatpush1.bf16.msra.mxu0 %v2200
      %2218 = vmatprep.subr.bf16.mxu0 0
      %2219 = vmatpush1.bf16.msra.mxu0 %v2201
      %2220 = vmatprep.subr.bf16.mxu0 0
      %2221 = vmatpush1.bf16.msra.mxu0 %v2202
      %2222 = vmatprep.subr.bf16.mxu0 0
      %2223 = vmatpush1.bf16.msra.mxu0 %v2203
      %2224 = vmatprep.subr.bf16.mxu0 0
      %2225 = vmatpush1.bf16.msra.mxu0 %v2204
      %2226 = vmatprep.subr.bf16.mxu0 0
      %2227 = vmatpush1.bf16.msra.mxu0 %v2205
      %2228 = vmatprep.subr.bf16.mxu0 0
      %2229 = vmatpush1.bf16.msra.mxu0 %v2206
      %2230 = vmatprep.subr.bf16.mxu0 0
      %2231 = vmatpush1.bf16.msra.mxu0 %v2207
      %2232 = vmatprep.subr.bf16.mxu0 0
      %2233 = vmatpush1.bf16.msra.mxu0 0
      %2234 = vmatprep.subr.bf16.mxu0 0
      %2235 = vmatpush1.bf16.msra.mxu0 0
      %2236 = vmatprep.subr.bf16.mxu0 0
      %2237 = vmatpush1.bf16.msra.mxu0 0
      %2238 = vmatprep.subr.bf16.mxu0 0
      %2239 = vmatpush1.bf16.msra.mxu0 0
      %2240 = vmatprep.subr.bf16.mxu0 0
      %2241 = vmatpush1.bf16.msra.mxu0 0
      %2242 = vmatprep.subr.bf16.mxu0 0
      %2243 = vmatpush1.bf16.msra.mxu0 0
      %2244 = vmatprep.subr.bf16.mxu0 0
      %2245 = vmatpush1.bf16.msra.mxu0 0
      %2246 = vmatprep.subr.bf16.mxu0 0
      %2247 = vmatpush1.bf16.msra.mxu0 0
      %2248 = vmatprep.mubr.bf16.mxu0 0
      %2249 = vmatmul.mubr.bf16.gmra.mrb[0].mxu0 %v2147
      %v2250 = vpop.f32.mrb[0].mxu0
      %v2251 = vadd.f32 0.0, %v2250
      %v2252 = vpop.f32.mrb[0].mxu0
      %v2253 = vpop.f32.mrb[0].mxu0
      %v2254 = vadd.f32 0.0, %v2253
      %v2255 = vpop.f32.mrb[0].mxu0
      %2256 = vmatprep.mubr.bf16.mxu0 0
      %2257 = vmatmul.mubr.bf16.gmra.mrb[0].mxu0 %v2148
      %v2258 = vpop.f32.mrb[0].mxu0
      %v2259 = vadd.f32 0.0, %v2258
      %v2260 = vpop.f32.mrb[0].mxu0
      %v2261 = vpop.f32.mrb[0].mxu0
      %v2262 = vadd.f32 0.0, %v2261
      %v2263 = vpop.f32.mrb[0].mxu0
      %2264 = vmatprep.mubr.bf16.mxu0 0
      %2265 = vmatmul.mubr.bf16.gmra.mrb[0].mxu0 %v2149
      %v2266 = vpop.f32.mrb[0].mxu0
      %v2267 = vadd.f32 0.0, %v2266
      %v2268 = vpop.f32.mrb[0].mxu0
      %v2269 = vpop.f32.mrb[0].mxu0
      %v2270 = vadd.f32 0.0, %v2269
      %v2271 = vpop.f32.mrb[0].mxu0
      %2272 = vmatprep.mubr.bf16.mxu0 0
      %2273 = vmatmul.mubr.bf16.gmra.mrb[0].mxu0 %v2150
      %v2274 = vpop.f32.mrb[0].mxu0
      %v2275 = vadd.f32 0.0, %v2274
      %v2276 = vpop.f32.mrb[0].mxu0
      %v2277 = vpop.f32.mrb[0].mxu0
      %v2278 = vadd.f32 0.0, %v2277
      %v2279 = vpop.f32.mrb[0].mxu0
      %2280 = vdwg.mxu0
      %v2281 = vadd.f32 %v2084, %v2251
      %v2282 = vadd.f32 %v2087, %v2254
      %v2283 = vadd.f32 %v2092, %v2259
      %v2284 = vadd.f32 %v2095, %v2262
      %v2285 = vadd.f32 %v2100, %v2267
      %v2286 = vadd.f32 %v2103, %v2270
      %v2287 = vadd.f32 %v2108, %v2275
      %v2288 = vadd.f32 %v2111, %v2278
      %v2289 = vpack.c.bf16 %v1783, %v1781
      %v2290 = vpack.c.bf16 %v1787, %v1785
      %v2291 = vpack.c.bf16 %v1791, %v1789
      %v2292 = vpack.c.bf16 %v1795, %v1793
      %s2293 = scalar_lea.vmem %s3, 192
      %v2294 = vld [vmem:[%s2293] sm:$0xf]
      %v2295 = vld [vmem:[%s2293 + $0x4] sm:$0xf]
      %v2296 = vld [vmem:[%s2293 + $0x8] sm:$0xf]
      %v2297 = vld [vmem:[%s2293 + $0xc] sm:$0xf]
      %v2298 = vld [vmem:[%s2293 + $0x10] sm:$0xf]
      %v2299 = vld [vmem:[%s2293 + $0x14] sm:$0xf]
      %v2300 = vld [vmem:[%s2293 + $0x18] sm:$0xf]
      %v2301 = vld [vmem:[%s2293 + $0x1c] sm:$0xf]
      %v2302 = vld [vmem:[%s2293 + $0x20] sm:$0xf]
      %v2303 = vld [vmem:[%s2293 + $0x24] sm:$0xf]
      %v2304 = vld [vmem:[%s2293 + $0x28] sm:$0xf]
      %v2305 = vld [vmem:[%s2293 + $0x2c] sm:$0xf]
      %v2306 = vld [vmem:[%s2293 + $0x30] sm:$0xf]
      %v2307 = vld [vmem:[%s2293 + $0x34] sm:$0xf]
      %v2308 = vld [vmem:[%s2293 + $0x38] sm:$0xf]
      %v2309 = vld [vmem:[%s2293 + $0x3c] sm:$0xf]
      %v2326 = vunpack.c.l.b16 %v2294
      %v2327 = vunpack.c.l.b16 %v2295
      %v2328 = vunpack.c.l.b16 %v2296
      %v2329 = vunpack.c.l.b16 %v2297
      %v2330 = vunpack.c.l.b16 %v2298
      %v2331 = vunpack.c.l.b16 %v2299
      %v2332 = vunpack.c.l.b16 %v2300
      %v2333 = vunpack.c.l.b16 %v2301
      %v2334 = vunpack.c.l.b16 %v2302
      %v2335 = vunpack.c.l.b16 %v2303
      %v2336 = vunpack.c.l.b16 %v2304
      %v2337 = vunpack.c.l.b16 %v2305
      %v2338 = vunpack.c.l.b16 %v2306
      %v2339 = vunpack.c.l.b16 %v2307
      %v2340 = vunpack.c.l.b16 %v2308
      %v2341 = vunpack.c.l.b16 %v2309
      %v2342 = vpack.c.b16 %v2327, %v2326
      %v2343 = vpack.c.b16 %v2329, %v2328
      %v2344 = vpack.c.b16 %v2331, %v2330
      %v2345 = vpack.c.b16 %v2333, %v2332
      %v2346 = vpack.c.b16 %v2335, %v2334
      %v2347 = vpack.c.b16 %v2337, %v2336
      %v2348 = vpack.c.b16 %v2339, %v2338
      %v2349 = vpack.c.b16 %v2341, %v2340
      %2358 = vmatprep.subr.bf16.mxu0 0
      %2359 = vmatpush1.bf16.msra.mxu0 %v2342
      %2360 = vmatprep.subr.bf16.mxu0 0
      %2361 = vmatpush1.bf16.msra.mxu0 %v2343
      %2362 = vmatprep.subr.bf16.mxu0 0
      %2363 = vmatpush1.bf16.msra.mxu0 %v2344
      %2364 = vmatprep.subr.bf16.mxu0 0
      %2365 = vmatpush1.bf16.msra.mxu0 %v2345
      %2366 = vmatprep.subr.bf16.mxu0 0
      %2367 = vmatpush1.bf16.msra.mxu0 %v2346
      %2368 = vmatprep.subr.bf16.mxu0 0
      %2369 = vmatpush1.bf16.msra.mxu0 %v2347
      %2370 = vmatprep.subr.bf16.mxu0 0
      %2371 = vmatpush1.bf16.msra.mxu0 %v2348
      %2372 = vmatprep.subr.bf16.mxu0 0
      %2373 = vmatpush1.bf16.msra.mxu0 %v2349
      %2374 = vmatprep.subr.bf16.mxu0 0
      %2375 = vmatpush1.bf16.msra.mxu0 0
      %2376 = vmatprep.subr.bf16.mxu0 0
      %2377 = vmatpush1.bf16.msra.mxu0 0
      %2378 = vmatprep.subr.bf16.mxu0 0
      %2379 = vmatpush1.bf16.msra.mxu0 0
      %2380 = vmatprep.subr.bf16.mxu0 0
      %2381 = vmatpush1.bf16.msra.mxu0 0
      %2382 = vmatprep.subr.bf16.mxu0 0
      %2383 = vmatpush1.bf16.msra.mxu0 0
      %2384 = vmatprep.subr.bf16.mxu0 0
      %2385 = vmatpush1.bf16.msra.mxu0 0
      %2386 = vmatprep.subr.bf16.mxu0 0
      %2387 = vmatpush1.bf16.msra.mxu0 0
      %2388 = vmatprep.subr.bf16.mxu0 0
      %2389 = vmatpush1.bf16.msra.mxu0 0
      %2390 = vmatprep.mubr.bf16.mxu0 0
      %2391 = vmatmul.mubr.bf16.gmra.mrb[0].mxu0 %v2289
      %v2392 = vpop.f32.mrb[0].mxu0
      %v2393 = vadd.f32 0.0, %v2392
      %v2394 = vpop.f32.mrb[0].mxu0
      %v2395 = vpop.f32.mrb[0].mxu0
      %v2396 = vadd.f32 0.0, %v2395
      %v2397 = vpop.f32.mrb[0].mxu0
      %2398 = vmatprep.mubr.bf16.mxu0 0
      %2399 = vmatmul.mubr.bf16.gmra.mrb[0].mxu0 %v2290
      %v2400 = vpop.f32.mrb[0].mxu0
      %v2401 = vadd.f32 0.0, %v2400
      %v2402 = vpop.f32.mrb[0].mxu0
      %v2403 = vpop.f32.mrb[0].mxu0
      %v2404 = vadd.f32 0.0, %v2403
      %v2405 = vpop.f32.mrb[0].mxu0
      %2406 = vmatprep.mubr.bf16.mxu0 0
      %2407 = vmatmul.mubr.bf16.gmra.mrb[0].mxu0 %v2291
      %v2408 = vpop.f32.mrb[0].mxu0
      %v2409 = vadd.f32 0.0, %v2408
      %v2410 = vpop.f32.mrb[0].mxu0
      %v2411 = vpop.f32.mrb[0].mxu0
      %v2412 = vadd.f32 0.0, %v2411
      %v2413 = vpop.f32.mrb[0].mxu0
      %2414 = vmatprep.mubr.bf16.mxu0 0
      %2415 = vmatmul.mubr.bf16.gmra.mrb[0].mxu0 %v2292
      %v2416 = vpop.f32.mrb[0].mxu0
      %v2417 = vadd.f32 0.0, %v2416
      %v2418 = vpop.f32.mrb[0].mxu0
      %v2419 = vpop.f32.mrb[0].mxu0
      %v2420 = vadd.f32 0.0, %v2419
      %v2421 = vpop.f32.mrb[0].mxu0
      %2422 = vdwg.mxu0
      %v2423 = vadd.f32 %v2281, %v2393
      %v2424 = vadd.f32 %v2282, %v2396
      %v2425 = vadd.f32 %v2283, %v2401
      %v2426 = vadd.f32 %v2284, %v2404
      %v2427 = vadd.f32 %v2285, %v2409
      %v2428 = vadd.f32 %v2286, %v2412
      %v2429 = vadd.f32 %v2287, %v2417
      %v2430 = vadd.f32 %v2288, %v2420
      %v2433 = vrot.slane %v1795, 1
      %v2434 = vrot.slane %v1796, 1
      %v2435 = vsel %vm596, %v2433, %v2434
      %v2437 = vpack.c.bf16 %v1843, %v1840
      %v2438 = vpack.c.bf16 %v1849, %v1846
      %v2439 = vpack.c.bf16 %v1855, %v1852
      %v2440 = vpack.c.bf16 %v2435, %v1858
      %s2441 = scalar_lea.vmem %s3, 256
      %v2442 = vld [vmem:[%s2441] sm:$0xf]
      %v2443 = vld [vmem:[%s2441 + $0x4] sm:$0xf]
      %v2444 = vld [vmem:[%s2441 + $0x8] sm:$0xf]
      %v2445 = vld [vmem:[%s2441 + $0xc] sm:$0xf]
      %v2446 = vld [vmem:[%s2441 + $0x10] sm:$0xf]
      %v2447 = vld [vmem:[%s2441 + $0x14] sm:$0xf]
      %v2448 = vld [vmem:[%s2441 + $0x18] sm:$0xf]
      %v2449 = vld [vmem:[%s2441 + $0x1c] sm:$0xf]
      %v2450 = vld [vmem:[%s2441 + $0x20] sm:$0xf]
      %v2451 = vld [vmem:[%s2441 + $0x24] sm:$0xf]
      %v2452 = vld [vmem:[%s2441 + $0x28] sm:$0xf]
      %v2453 = vld [vmem:[%s2441 + $0x2c] sm:$0xf]
      %v2454 = vld [vmem:[%s2441 + $0x30] sm:$0xf]
      %v2455 = vld [vmem:[%s2441 + $0x34] sm:$0xf]
      %v2456 = vld [vmem:[%s2441 + $0x38] sm:$0xf]
      %v2457 = vld [vmem:[%s2441 + $0x3c] sm:$0xf]
      %v2474 = vunpack.c.l.b16 %v2442
      %v2475 = vunpack.c.l.b16 %v2443
      %v2476 = vunpack.c.l.b16 %v2444
      %v2477 = vunpack.c.l.b16 %v2445
      %v2478 = vunpack.c.l.b16 %v2446
      %v2479 = vunpack.c.l.b16 %v2447
      %v2480 = vunpack.c.l.b16 %v2448
      %v2481 = vunpack.c.l.b16 %v2449
      %v2482 = vunpack.c.l.b16 %v2450
      %v2483 = vunpack.c.l.b16 %v2451
      %v2484 = vunpack.c.l.b16 %v2452
      %v2485 = vunpack.c.l.b16 %v2453
      %v2486 = vunpack.c.l.b16 %v2454
      %v2487 = vunpack.c.l.b16 %v2455
      %v2488 = vunpack.c.l.b16 %v2456
      %v2489 = vunpack.c.l.b16 %v2457
      %v2490 = vpack.c.b16 %v2475, %v2474
      %v2491 = vpack.c.b16 %v2477, %v2476
      %v2492 = vpack.c.b16 %v2479, %v2478
      %v2493 = vpack.c.b16 %v2481, %v2480
      %v2494 = vpack.c.b16 %v2483, %v2482
      %v2495 = vpack.c.b16 %v2485, %v2484
      %v2496 = vpack.c.b16 %v2487, %v2486
      %v2497 = vpack.c.b16 %v2489, %v2488
      %2506 = vmatprep.subr.bf16.mxu0 0
      %2507 = vmatpush1.bf16.msra.mxu0 %v2490
      %2508 = vmatprep.subr.bf16.mxu0 0
      %2509 = vmatpush1.bf16.msra.mxu0 %v2491
      %2510 = vmatprep.subr.bf16.mxu0 0
      %2511 = vmatpush1.bf16.msra.mxu0 %v2492
      %2512 = vmatprep.subr.bf16.mxu0 0
      %2513 = vmatpush1.bf16.msra.mxu0 %v2493
      %2514 = vmatprep.subr.bf16.mxu0 0
      %2515 = vmatpush1.bf16.msra.mxu0 %v2494
      %2516 = vmatprep.subr.bf16.mxu0 0
      %2517 = vmatpush1.bf16.msra.mxu0 %v2495
      %2518 = vmatprep.subr.bf16.mxu0 0
      %2519 = vmatpush1.bf16.msra.mxu0 %v2496
      %2520 = vmatprep.subr.bf16.mxu0 0
      %2521 = vmatpush1.bf16.msra.mxu0 %v2497
      %2522 = vmatprep.subr.bf16.mxu0 0
      %2523 = vmatpush1.bf16.msra.mxu0 0
      %2524 = vmatprep.subr.bf16.mxu0 0
      %2525 = vmatpush1.bf16.msra.mxu0 0
      %2526 = vmatprep.subr.bf16.mxu0 0
      %2527 = vmatpush1.bf16.msra.mxu0 0
      %2528 = vmatprep.subr.bf16.mxu0 0
      %2529 = vmatpush1.bf16.msra.mxu0 0
      %2530 = vmatprep.subr.bf16.mxu0 0
      %2531 = vmatpush1.bf16.msra.mxu0 0
      %2532 = vmatprep.subr.bf16.mxu0 0
      %2533 = vmatpush1.bf16.msra.mxu0 0
      %2534 = vmatprep.subr.bf16.mxu0 0
      %2535 = vmatpush1.bf16.msra.mxu0 0
      %2536 = vmatprep.subr.bf16.mxu0 0
      %2537 = vmatpush1.bf16.msra.mxu0 0
      %2538 = vmatprep.mubr.bf16.mxu0 0
      %2539 = vmatmul.mubr.bf16.gmra.mrb[0].mxu0 %v2437
      %v2540 = vpop.f32.mrb[0].mxu0
      %v2541 = vadd.f32 0.0, %v2540
      %v2542 = vpop.f32.mrb[0].mxu0
      %v2543 = vpop.f32.mrb[0].mxu0
      %v2544 = vadd.f32 0.0, %v2543
      %v2545 = vpop.f32.mrb[0].mxu0
      %2546 = vmatprep.mubr.bf16.mxu0 0
      %2547 = vmatmul.mubr.bf16.gmra.mrb[0].mxu0 %v2438
      %v2548 = vpop.f32.mrb[0].mxu0
      %v2549 = vadd.f32 0.0, %v2548
      %v2550 = vpop.f32.mrb[0].mxu0
      %v2551 = vpop.f32.mrb[0].mxu0
      %v2552 = vadd.f32 0.0, %v2551
      %v2553 = vpop.f32.mrb[0].mxu0
      %2554 = vmatprep.mubr.bf16.mxu0 0
      %2555 = vmatmul.mubr.bf16.gmra.mrb[0].mxu0 %v2439
      %v2556 = vpop.f32.mrb[0].mxu0
      %v2557 = vadd.f32 0.0, %v2556
      %v2558 = vpop.f32.mrb[0].mxu0
      %v2559 = vpop.f32.mrb[0].mxu0
      %v2560 = vadd.f32 0.0, %v2559
      %v2561 = vpop.f32.mrb[0].mxu0
      %2562 = vmatprep.mubr.bf16.mxu0 0
      %2563 = vmatmul.mubr.bf16.gmra.mrb[0].mxu0 %v2440
      %v2564 = vpop.f32.mrb[0].mxu0
      %v2565 = vadd.f32 0.0, %v2564
      %v2566 = vpop.f32.mrb[0].mxu0
      %v2567 = vpop.f32.mrb[0].mxu0
      %v2568 = vadd.f32 0.0, %v2567
      %v2569 = vpop.f32.mrb[0].mxu0
      %2570 = vdwg.mxu0
      %v2571 = vadd.f32 %v2423, %v2541
      %v2572 = vadd.f32 %v2424, %v2544
      %v2573 = vadd.f32 %v2425, %v2549
      %v2574 = vadd.f32 %v2426, %v2552
      %v2575 = vadd.f32 %v2427, %v2557
      %v2576 = vadd.f32 %v2428, %v2560
      %v2577 = vadd.f32 %v2429, %v2565
      %v2578 = vadd.f32 %v2430, %v2568
      %v2579 = vrot.slane %v1795, 2
      %v2580 = vrot.slane %v1796, 2
      %v2581 = vsel %vm2114, %v2579, %v2580
      %v2583 = vpack.c.bf16 %v2123, %v2120
      %v2584 = vpack.c.bf16 %v2129, %v2126
      %v2585 = vpack.c.bf16 %v2135, %v2132
      %v2586 = vpack.c.bf16 %v2581, %v2138
      %s2587 = scalar_lea.vmem %s3, 320
      %v2588 = vld [vmem:[%s2587] sm:$0xf]
      %v2589 = vld [vmem:[%s2587 + $0x4] sm:$0xf]
      %v2590 = vld [vmem:[%s2587 + $0x8] sm:$0xf]
      %v2591 = vld [vmem:[%s2587 + $0xc] sm:$0xf]
      %v2592 = vld [vmem:[%s2587 + $0x10] sm:$0xf]
      %v2593 = vld [vmem:[%s2587 + $0x14] sm:$0xf]
      %v2594 = vld [vmem:[%s2587 + $0x18] sm:$0xf]
      %v2595 = vld [vmem:[%s2587 + $0x1c] sm:$0xf]
      %v2596 = vld [vmem:[%s2587 + $0x20] sm:$0xf]
      %v2597 = vld [vmem:[%s2587 + $0x24] sm:$0xf]
      %v2598 = vld [vmem:[%s2587 + $0x28] sm:$0xf]
      %v2599 = vld [vmem:[%s2587 + $0x2c] sm:$0xf]
      %v2600 = vld [vmem:[%s2587 + $0x30] sm:$0xf]
      %v2601 = vld [vmem:[%s2587 + $0x34] sm:$0xf]
      %v2602 = vld [vmem:[%s2587 + $0x38] sm:$0xf]
      %v2603 = vld [vmem:[%s2587 + $0x3c] sm:$0xf]
      %v2620 = vunpack.c.l.b16 %v2588
      %v2621 = vunpack.c.l.b16 %v2589
      %v2622 = vunpack.c.l.b16 %v2590
      %v2623 = vunpack.c.l.b16 %v2591
      %v2624 = vunpack.c.l.b16 %v2592
      %v2625 = vunpack.c.l.b16 %v2593
      %v2626 = vunpack.c.l.b16 %v2594
      %v2627 = vunpack.c.l.b16 %v2595
      %v2628 = vunpack.c.l.b16 %v2596
      %v2629 = vunpack.c.l.b16 %v2597
      %v2630 = vunpack.c.l.b16 %v2598
      %v2631 = vunpack.c.l.b16 %v2599
      %v2632 = vunpack.c.l.b16 %v2600
      %v2633 = vunpack.c.l.b16 %v2601
      %v2634 = vunpack.c.l.b16 %v2602
      %v2635 = vunpack.c.l.b16 %v2603
      %v2636 = vpack.c.b16 %v2621, %v2620
      %v2637 = vpack.c.b16 %v2623, %v2622
      %v2638 = vpack.c.b16 %v2625, %v2624
      %v2639 = vpack.c.b16 %v2627, %v2626
      %v2640 = vpack.c.b16 %v2629, %v2628
      %v2641 = vpack.c.b16 %v2631, %v2630
      %v2642 = vpack.c.b16 %v2633, %v2632
      %v2643 = vpack.c.b16 %v2635, %v2634
      %2652 = vmatprep.subr.bf16.mxu0 0
      %2653 = vmatpush1.bf16.msra.mxu0 %v2636
      %2654 = vmatprep.subr.bf16.mxu0 0
      %2655 = vmatpush1.bf16.msra.mxu0 %v2637
      %2656 = vmatprep.subr.bf16.mxu0 0
      %2657 = vmatpush1.bf16.msra.mxu0 %v2638
      %2658 = vmatprep.subr.bf16.mxu0 0
      %2659 = vmatpush1.bf16.msra.mxu0 %v2639
      %2660 = vmatprep.subr.bf16.mxu0 0
      %2661 = vmatpush1.bf16.msra.mxu0 %v2640
      %2662 = vmatprep.subr.bf16.mxu0 0
      %2663 = vmatpush1.bf16.msra.mxu0 %v2641
      %2664 = vmatprep.subr.bf16.mxu0 0
      %2665 = vmatpush1.bf16.msra.mxu0 %v2642
      %2666 = vmatprep.subr.bf16.mxu0 0
      %2667 = vmatpush1.bf16.msra.mxu0 %v2643
      %2668 = vmatprep.subr.bf16.mxu0 0
      %2669 = vmatpush1.bf16.msra.mxu0 0
      %2670 = vmatprep.subr.bf16.mxu0 0
      %2671 = vmatpush1.bf16.msra.mxu0 0
      %2672 = vmatprep.subr.bf16.mxu0 0
      %2673 = vmatpush1.bf16.msra.mxu0 0
      %2674 = vmatprep.subr.bf16.mxu0 0
      %2675 = vmatpush1.bf16.msra.mxu0 0
      %2676 = vmatprep.subr.bf16.mxu0 0
      %2677 = vmatpush1.bf16.msra.mxu0 0
      %2678 = vmatprep.subr.bf16.mxu0 0
      %2679 = vmatpush1.bf16.msra.mxu0 0
      %2680 = vmatprep.subr.bf16.mxu0 0
      %2681 = vmatpush1.bf16.msra.mxu0 0
      %2682 = vmatprep.subr.bf16.mxu0 0
      %2683 = vmatpush1.bf16.msra.mxu0 0
      %2684 = vmatprep.mubr.bf16.mxu0 0
      %2685 = vmatmul.mubr.bf16.gmra.mrb[0].mxu0 %v2583
      %v2686 = vpop.f32.mrb[0].mxu0
      %v2687 = vadd.f32 0.0, %v2686
      %v2688 = vpop.f32.mrb[0].mxu0
      %v2689 = vpop.f32.mrb[0].mxu0
      %v2690 = vadd.f32 0.0, %v2689
      %v2691 = vpop.f32.mrb[0].mxu0
      %2692 = vmatprep.mubr.bf16.mxu0 0
      %2693 = vmatmul.mubr.bf16.gmra.mrb[0].mxu0 %v2584
      %v2694 = vpop.f32.mrb[0].mxu0
      %v2695 = vadd.f32 0.0, %v2694
      %v2696 = vpop.f32.mrb[0].mxu0
      %v2697 = vpop.f32.mrb[0].mxu0
      %v2698 = vadd.f32 0.0, %v2697
      %v2699 = vpop.f32.mrb[0].mxu0
      %2700 = vmatprep.mubr.bf16.mxu0 0
      %2701 = vmatmul.mubr.bf16.gmra.mrb[0].mxu0 %v2585
      %v2702 = vpop.f32.mrb[0].mxu0
      %v2703 = vadd.f32 0.0, %v2702
      %v2704 = vpop.f32.mrb[0].mxu0
      %v2705 = vpop.f32.mrb[0].mxu0
      %v2706 = vadd.f32 0.0, %v2705
      %v2707 = vpop.f32.mrb[0].mxu0
      %2708 = vmatprep.mubr.bf16.mxu0 0
      %2709 = vmatmul.mubr.bf16.gmra.mrb[0].mxu0 %v2586
      %v2710 = vpop.f32.mrb[0].mxu0
      %v2711 = vadd.f32 0.0, %v2710
      %v2712 = vpop.f32.mrb[0].mxu0
      %v2713 = vpop.f32.mrb[0].mxu0
      %v2714 = vadd.f32 0.0, %v2713
      %v2715 = vpop.f32.mrb[0].mxu0
      %2716 = vdwg.mxu0
      %v2717 = vadd.f32 %v2571, %v2687
      %v2718 = vadd.f32 %v2572, %v2690
      %v2719 = vadd.f32 %v2573, %v2695
      %v2720 = vadd.f32 %v2574, %v2698
      %v2721 = vadd.f32 %v2575, %v2703
      %v2722 = vadd.f32 %v2576, %v2706
      %v2723 = vadd.f32 %v2577, %v2711
      %v2724 = vadd.f32 %v2578, %v2714
      %v2725 = vpack.c.bf16 %v1797, %v1795
      %s2726 = scalar_lea.vmem %s3, 384
      %v2727 = vld [vmem:[%s2726] sm:$0xf]
      %v2728 = vld [vmem:[%s2726 + $0x4] sm:$0xf]
      %v2729 = vld [vmem:[%s2726 + $0x8] sm:$0xf]
      %v2730 = vld [vmem:[%s2726 + $0xc] sm:$0xf]
      %v2731 = vld [vmem:[%s2726 + $0x10] sm:$0xf]
      %v2732 = vld [vmem:[%s2726 + $0x14] sm:$0xf]
      %v2733 = vld [vmem:[%s2726 + $0x18] sm:$0xf]
      %v2734 = vld [vmem:[%s2726 + $0x1c] sm:$0xf]
      %v2735 = vld [vmem:[%s2726 + $0x20] sm:$0xf]
      %v2736 = vld [vmem:[%s2726 + $0x24] sm:$0xf]
      %v2737 = vld [vmem:[%s2726 + $0x28] sm:$0xf]
      %v2738 = vld [vmem:[%s2726 + $0x2c] sm:$0xf]
      %v2739 = vld [vmem:[%s2726 + $0x30] sm:$0xf]
      %v2740 = vld [vmem:[%s2726 + $0x34] sm:$0xf]
      %v2741 = vld [vmem:[%s2726 + $0x38] sm:$0xf]
      %v2742 = vld [vmem:[%s2726 + $0x3c] sm:$0xf]
      %v2759 = vunpack.c.l.b16 %v2727
      %v2760 = vunpack.c.l.b16 %v2728
      %v2761 = vunpack.c.l.b16 %v2729
      %v2762 = vunpack.c.l.b16 %v2730
      %v2763 = vunpack.c.l.b16 %v2731
      %v2764 = vunpack.c.l.b16 %v2732
      %v2765 = vunpack.c.l.b16 %v2733
      %v2766 = vunpack.c.l.b16 %v2734
      %v2767 = vunpack.c.l.b16 %v2735
      %v2768 = vunpack.c.l.b16 %v2736
      %v2769 = vunpack.c.l.b16 %v2737
      %v2770 = vunpack.c.l.b16 %v2738
      %v2771 = vunpack.c.l.b16 %v2739
      %v2772 = vunpack.c.l.b16 %v2740
      %v2773 = vunpack.c.l.b16 %v2741
      %v2774 = vunpack.c.l.b16 %v2742
      %v2775 = vpack.c.b16 %v2760, %v2759
      %v2776 = vpack.c.b16 %v2762, %v2761
      %v2777 = vpack.c.b16 %v2764, %v2763
      %v2778 = vpack.c.b16 %v2766, %v2765
      %v2779 = vpack.c.b16 %v2768, %v2767
      %v2780 = vpack.c.b16 %v2770, %v2769
      %v2781 = vpack.c.b16 %v2772, %v2771
      %v2782 = vpack.c.b16 %v2774, %v2773
      %2791 = vmatprep.subr.bf16.mxu0 0
      %2792 = vmatpush1.bf16.msra.mxu0 %v2775
      %2793 = vmatprep.subr.bf16.mxu0 0
      %2794 = vmatpush1.bf16.msra.mxu0 %v2776
      %2795 = vmatprep.subr.bf16.mxu0 0
      %2796 = vmatpush1.bf16.msra.mxu0 %v2777
      %2797 = vmatprep.subr.bf16.mxu0 0
      %2798 = vmatpush1.bf16.msra.mxu0 %v2778
      %2799 = vmatprep.subr.bf16.mxu0 0
      %2800 = vmatpush1.bf16.msra.mxu0 %v2779
      %2801 = vmatprep.subr.bf16.mxu0 0
      %2802 = vmatpush1.bf16.msra.mxu0 %v2780
      %2803 = vmatprep.subr.bf16.mxu0 0
      %2804 = vmatpush1.bf16.msra.mxu0 %v2781
      %2805 = vmatprep.subr.bf16.mxu0 0
      %2806 = vmatpush1.bf16.msra.mxu0 %v2782
      %2807 = vmatprep.subr.bf16.mxu0 0
      %2808 = vmatpush1.bf16.msra.mxu0 0
      %2809 = vmatprep.subr.bf16.mxu0 0
      %2810 = vmatpush1.bf16.msra.mxu0 0
      %2811 = vmatprep.subr.bf16.mxu0 0
      %2812 = vmatpush1.bf16.msra.mxu0 0
      %2813 = vmatprep.subr.bf16.mxu0 0
      %2814 = vmatpush1.bf16.msra.mxu0 0
      %2815 = vmatprep.subr.bf16.mxu0 0
      %2816 = vmatpush1.bf16.msra.mxu0 0
      %2817 = vmatprep.subr.bf16.mxu0 0
      %2818 = vmatpush1.bf16.msra.mxu0 0
      %2819 = vmatprep.subr.bf16.mxu0 0
      %2820 = vmatpush1.bf16.msra.mxu0 0
      %2821 = vmatprep.subr.bf16.mxu0 0
      %2822 = vmatpush1.bf16.msra.mxu0 0
      %2823 = vmatprep.mubr.bf16.mxu0 0
      %2824 = vmatmul.mubr.bf16.gmra.mrb[0].mxu0 %v1800
      %v2825 = vpop.f32.mrb[0].mxu0
      %v2826 = vadd.f32 0.0, %v2825
      %v2827 = vpop.f32.mrb[0].mxu0
      %v2828 = vpop.f32.mrb[0].mxu0
      %v2829 = vadd.f32 0.0, %v2828
      %v2830 = vpop.f32.mrb[0].mxu0
      %2831 = vmatprep.mubr.bf16.mxu0 0
      %2832 = vmatmul.mubr.bf16.gmra.mrb[0].mxu0 %v1801
      %v2833 = vpop.f32.mrb[0].mxu0
      %v2834 = vadd.f32 0.0, %v2833
      %v2835 = vpop.f32.mrb[0].mxu0
      %v2836 = vpop.f32.mrb[0].mxu0
      %v2837 = vadd.f32 0.0, %v2836
      %v2838 = vpop.f32.mrb[0].mxu0
      %2839 = vmatprep.mubr.bf16.mxu0 0
      %2840 = vmatmul.mubr.bf16.gmra.mrb[0].mxu0 %v1802
      %v2841 = vpop.f32.mrb[0].mxu0
      %v2842 = vadd.f32 0.0, %v2841
      %v2843 = vpop.f32.mrb[0].mxu0
      %v2844 = vpop.f32.mrb[0].mxu0
      %v2845 = vadd.f32 0.0, %v2844
      %v2846 = vpop.f32.mrb[0].mxu0
      %2847 = vmatprep.mubr.bf16.mxu0 0
      %2848 = vmatmul.mubr.bf16.gmra.mrb[0].mxu0 %v2725
      %v2849 = vpop.f32.mrb[0].mxu0
      %v2850 = vadd.f32 0.0, %v2849
      %v2851 = vpop.f32.mrb[0].mxu0
      %v2852 = vpop.f32.mrb[0].mxu0
      %v2853 = vadd.f32 0.0, %v2852
      %v2854 = vpop.f32.mrb[0].mxu0
      %2855 = vdwg.mxu0
      %v2856 = vadd.f32 %v2717, %v2826
      %v2857 = vadd.f32 %v2718, %v2829
      %v2858 = vadd.f32 %v2719, %v2834
      %v2859 = vadd.f32 %v2720, %v2837
      %v2860 = vadd.f32 %v2721, %v2842
      %v2861 = vadd.f32 %v2722, %v2845
      %v2862 = vadd.f32 %v2723, %v2850
      %v2863 = vadd.f32 %v2724, %v2853
      %v2866 = vrot.slane %v1797, 1
      %v2867 = vrot.slane %v1798, 1
      %v2868 = vsel %vm596, %v2866, %v2867
      %v2870 = vpack.c.bf16 %v2868, %v2435
      %s2871 = scalar_lea.vmem %s3, 448
      %v2872 = vld [vmem:[%s2871] sm:$0xf]
      %v2873 = vld [vmem:[%s2871 + $0x4] sm:$0xf]
      %v2874 = vld [vmem:[%s2871 + $0x8] sm:$0xf]
      %v2875 = vld [vmem:[%s2871 + $0xc] sm:$0xf]
      %v2876 = vld [vmem:[%s2871 + $0x10] sm:$0xf]
      %v2877 = vld [vmem:[%s2871 + $0x14] sm:$0xf]
      %v2878 = vld [vmem:[%s2871 + $0x18] sm:$0xf]
      %v2879 = vld [vmem:[%s2871 + $0x1c] sm:$0xf]
      %v2880 = vld [vmem:[%s2871 + $0x20] sm:$0xf]
      %v2881 = vld [vmem:[%s2871 + $0x24] sm:$0xf]
      %v2882 = vld [vmem:[%s2871 + $0x28] sm:$0xf]
      %v2883 = vld [vmem:[%s2871 + $0x2c] sm:$0xf]
      %v2884 = vld [vmem:[%s2871 + $0x30] sm:$0xf]
      %v2885 = vld [vmem:[%s2871 + $0x34] sm:$0xf]
      %v2886 = vld [vmem:[%s2871 + $0x38] sm:$0xf]
      %v2887 = vld [vmem:[%s2871 + $0x3c] sm:$0xf]
      %v2904 = vunpack.c.l.b16 %v2872
      %v2905 = vunpack.c.l.b16 %v2873
      %v2906 = vunpack.c.l.b16 %v2874
      %v2907 = vunpack.c.l.b16 %v2875
      %v2908 = vunpack.c.l.b16 %v2876
      %v2909 = vunpack.c.l.b16 %v2877
      %v2910 = vunpack.c.l.b16 %v2878
      %v2911 = vunpack.c.l.b16 %v2879
      %v2912 = vunpack.c.l.b16 %v2880
      %v2913 = vunpack.c.l.b16 %v2881
      %v2914 = vunpack.c.l.b16 %v2882
      %v2915 = vunpack.c.l.b16 %v2883
      %v2916 = vunpack.c.l.b16 %v2884
      %v2917 = vunpack.c.l.b16 %v2885
      %v2918 = vunpack.c.l.b16 %v2886
      %v2919 = vunpack.c.l.b16 %v2887
      %v2920 = vpack.c.b16 %v2905, %v2904
      %v2921 = vpack.c.b16 %v2907, %v2906
      %v2922 = vpack.c.b16 %v2909, %v2908
      %v2923 = vpack.c.b16 %v2911, %v2910
      %v2924 = vpack.c.b16 %v2913, %v2912
      %v2925 = vpack.c.b16 %v2915, %v2914
      %v2926 = vpack.c.b16 %v2917, %v2916
      %v2927 = vpack.c.b16 %v2919, %v2918
      %2936 = vmatprep.subr.bf16.mxu0 0
      %2937 = vmatpush1.bf16.msra.mxu0 %v2920
      %2938 = vmatprep.subr.bf16.mxu0 0
      %2939 = vmatpush1.bf16.msra.mxu0 %v2921
      %2940 = vmatprep.subr.bf16.mxu0 0
      %2941 = vmatpush1.bf16.msra.mxu0 %v2922
      %2942 = vmatprep.subr.bf16.mxu0 0
      %2943 = vmatpush1.bf16.msra.mxu0 %v2923
      %2944 = vmatprep.subr.bf16.mxu0 0
      %2945 = vmatpush1.bf16.msra.mxu0 %v2924
      %2946 = vmatprep.subr.bf16.mxu0 0
      %2947 = vmatpush1.bf16.msra.mxu0 %v2925
      %2948 = vmatprep.subr.bf16.mxu0 0
      %2949 = vmatpush1.bf16.msra.mxu0 %v2926
      %2950 = vmatprep.subr.bf16.mxu0 0
      %2951 = vmatpush1.bf16.msra.mxu0 %v2927
      %2952 = vmatprep.subr.bf16.mxu0 0
      %2953 = vmatpush1.bf16.msra.mxu0 0
      %2954 = vmatprep.subr.bf16.mxu0 0
      %2955 = vmatpush1.bf16.msra.mxu0 0
      %2956 = vmatprep.subr.bf16.mxu0 0
      %2957 = vmatpush1.bf16.msra.mxu0 0
      %2958 = vmatprep.subr.bf16.mxu0 0
      %2959 = vmatpush1.bf16.msra.mxu0 0
      %2960 = vmatprep.subr.bf16.mxu0 0
      %2961 = vmatpush1.bf16.msra.mxu0 0
      %2962 = vmatprep.subr.bf16.mxu0 0
      %2963 = vmatpush1.bf16.msra.mxu0 0
      %2964 = vmatprep.subr.bf16.mxu0 0
      %2965 = vmatpush1.bf16.msra.mxu0 0
      %2966 = vmatprep.subr.bf16.mxu0 0
      %2967 = vmatpush1.bf16.msra.mxu0 0
      %2968 = vmatprep.mubr.bf16.mxu0 0
      %2969 = vmatmul.mubr.bf16.gmra.mrb[0].mxu0 %v1868
      %v2970 = vpop.f32.mrb[0].mxu0
      %v2971 = vadd.f32 0.0, %v2970
      %v2972 = vpop.f32.mrb[0].mxu0
      %v2973 = vpop.f32.mrb[0].mxu0
      %v2974 = vadd.f32 0.0, %v2973
      %v2975 = vpop.f32.mrb[0].mxu0
      %2976 = vmatprep.mubr.bf16.mxu0 0
      %2977 = vmatmul.mubr.bf16.gmra.mrb[0].mxu0 %v1869
      %v2978 = vpop.f32.mrb[0].mxu0
      %v2979 = vadd.f32 0.0, %v2978
      %v2980 = vpop.f32.mrb[0].mxu0
      %v2981 = vpop.f32.mrb[0].mxu0
      %v2982 = vadd.f32 0.0, %v2981
      %v2983 = vpop.f32.mrb[0].mxu0
      %2984 = vmatprep.mubr.bf16.mxu0 0
      %2985 = vmatmul.mubr.bf16.gmra.mrb[0].mxu0 %v1870
      %v2986 = vpop.f32.mrb[0].mxu0
      %v2987 = vadd.f32 0.0, %v2986
      %v2988 = vpop.f32.mrb[0].mxu0
      %v2989 = vpop.f32.mrb[0].mxu0
      %v2990 = vadd.f32 0.0, %v2989
      %v2991 = vpop.f32.mrb[0].mxu0
      %2992 = vmatprep.mubr.bf16.mxu0 0
      %2993 = vmatmul.mubr.bf16.gmra.mrb[0].mxu0 %v2870
      %v2994 = vpop.f32.mrb[0].mxu0
      %v2995 = vadd.f32 0.0, %v2994
      %v2996 = vpop.f32.mrb[0].mxu0
      %v2997 = vpop.f32.mrb[0].mxu0
      %v2998 = vadd.f32 0.0, %v2997
      %v2999 = vpop.f32.mrb[0].mxu0
      %3000 = vdwg.mxu0
      %v3001 = vadd.f32 %v2856, %v2971
      %v3002 = vadd.f32 %v2857, %v2974
      %v3003 = vadd.f32 %v2858, %v2979
      %v3004 = vadd.f32 %v2859, %v2982
      %v3005 = vadd.f32 %v2860, %v2987
      %v3006 = vadd.f32 %v2861, %v2990
      %v3007 = vadd.f32 %v2862, %v2995
      %v3008 = vadd.f32 %v2863, %v2998
      %v3009 = vrot.slane %v1797, 2
      %v3010 = vrot.slane %v1798, 2
      %v3011 = vsel %vm2114, %v3009, %v3010
      %v3013 = vpack.c.bf16 %v3011, %v2581
      %s3014 = scalar_lea.vmem %s3, 512
      %v3015 = vld [vmem:[%s3014] sm:$0xf]
      %v3016 = vld [vmem:[%s3014 + $0x4] sm:$0xf]
      %v3017 = vld [vmem:[%s3014 + $0x8] sm:$0xf]
      %v3018 = vld [vmem:[%s3014 + $0xc] sm:$0xf]
      %v3019 = vld [vmem:[%s3014 + $0x10] sm:$0xf]
      %v3020 = vld [vmem:[%s3014 + $0x14] sm:$0xf]
      %v3021 = vld [vmem:[%s3014 + $0x18] sm:$0xf]
      %v3022 = vld [vmem:[%s3014 + $0x1c] sm:$0xf]
      %v3023 = vld [vmem:[%s3014 + $0x20] sm:$0xf]
      %v3024 = vld [vmem:[%s3014 + $0x24] sm:$0xf]
      %v3025 = vld [vmem:[%s3014 + $0x28] sm:$0xf]
      %v3026 = vld [vmem:[%s3014 + $0x2c] sm:$0xf]
      %v3027 = vld [vmem:[%s3014 + $0x30] sm:$0xf]
      %v3028 = vld [vmem:[%s3014 + $0x34] sm:$0xf]
      %v3029 = vld [vmem:[%s3014 + $0x38] sm:$0xf]
      %v3030 = vld [vmem:[%s3014 + $0x3c] sm:$0xf]
      %v3047 = vunpack.c.l.b16 %v3015
      %v3048 = vunpack.c.l.b16 %v3016
      %v3049 = vunpack.c.l.b16 %v3017
      %v3050 = vunpack.c.l.b16 %v3018
      %v3051 = vunpack.c.l.b16 %v3019
      %v3052 = vunpack.c.l.b16 %v3020
      %v3053 = vunpack.c.l.b16 %v3021
      %v3054 = vunpack.c.l.b16 %v3022
      %v3055 = vunpack.c.l.b16 %v3023
      %v3056 = vunpack.c.l.b16 %v3024
      %v3057 = vunpack.c.l.b16 %v3025
      %v3058 = vunpack.c.l.b16 %v3026
      %v3059 = vunpack.c.l.b16 %v3027
      %v3060 = vunpack.c.l.b16 %v3028
      %v3061 = vunpack.c.l.b16 %v3029
      %v3062 = vunpack.c.l.b16 %v3030
      %v3063 = vpack.c.b16 %v3048, %v3047
      %v3064 = vpack.c.b16 %v3050, %v3049
      %v3065 = vpack.c.b16 %v3052, %v3051
      %v3066 = vpack.c.b16 %v3054, %v3053
      %v3067 = vpack.c.b16 %v3056, %v3055
      %v3068 = vpack.c.b16 %v3058, %v3057
      %v3069 = vpack.c.b16 %v3060, %v3059
      %v3070 = vpack.c.b16 %v3062, %v3061
      %3079 = vmatprep.subr.bf16.mxu0 0
      %3080 = vmatpush1.bf16.msra.mxu0 %v3063
      %3081 = vmatprep.subr.bf16.mxu0 0
      %3082 = vmatpush1.bf16.msra.mxu0 %v3064
      %3083 = vmatprep.subr.bf16.mxu0 0
      %3084 = vmatpush1.bf16.msra.mxu0 %v3065
      %3085 = vmatprep.subr.bf16.mxu0 0
      %3086 = vmatpush1.bf16.msra.mxu0 %v3066
      %3087 = vmatprep.subr.bf16.mxu0 0
      %3088 = vmatpush1.bf16.msra.mxu0 %v3067
      %3089 = vmatprep.subr.bf16.mxu0 0
      %3090 = vmatpush1.bf16.msra.mxu0 %v3068
      %3091 = vmatprep.subr.bf16.mxu0 0
      %3092 = vmatpush1.bf16.msra.mxu0 %v3069
      %3093 = vmatprep.subr.bf16.mxu0 0
      %3094 = vmatpush1.bf16.msra.mxu0 %v3070
      %3095 = vmatprep.subr.bf16.mxu0 0
      %3096 = vmatpush1.bf16.msra.mxu0 0
      %3097 = vmatprep.subr.bf16.mxu0 0
      %3098 = vmatpush1.bf16.msra.mxu0 0
      %3099 = vmatprep.subr.bf16.mxu0 0
      %3100 = vmatpush1.bf16.msra.mxu0 0
      %3101 = vmatprep.subr.bf16.mxu0 0
      %3102 = vmatpush1.bf16.msra.mxu0 0
      %3103 = vmatprep.subr.bf16.mxu0 0
      %3104 = vmatpush1.bf16.msra.mxu0 0
      %3105 = vmatprep.subr.bf16.mxu0 0
      %3106 = vmatpush1.bf16.msra.mxu0 0
      %3107 = vmatprep.subr.bf16.mxu0 0
      %3108 = vmatpush1.bf16.msra.mxu0 0
      %3109 = vmatprep.subr.bf16.mxu0 0
      %3110 = vmatpush1.bf16.msra.mxu0 0
      %3111 = vmatprep.mubr.bf16.mxu0 0
      %3112 = vmatmul.mubr.bf16.gmra.mrb[0].mxu0 %v2148
      %v3113 = vpop.f32.mrb[0].mxu0
      %v3114 = vadd.f32 0.0, %v3113
      %v3115 = vpop.f32.mrb[0].mxu0
      %v3116 = vpop.f32.mrb[0].mxu0
      %v3117 = vadd.f32 0.0, %v3116
      %v3118 = vpop.f32.mrb[0].mxu0
      %3119 = vmatprep.mubr.bf16.mxu0 0
      %3120 = vmatmul.mubr.bf16.gmra.mrb[0].mxu0 %v2149
      %v3121 = vpop.f32.mrb[0].mxu0
      %v3122 = vadd.f32 0.0, %v3121
      %v3123 = vpop.f32.mrb[0].mxu0
      %v3124 = vpop.f32.mrb[0].mxu0
      %v3125 = vadd.f32 0.0, %v3124
      %v3126 = vpop.f32.mrb[0].mxu0
      %3127 = vmatprep.mubr.bf16.mxu0 0
      %3128 = vmatmul.mubr.bf16.gmra.mrb[0].mxu0 %v2150
      %v3129 = vpop.f32.mrb[0].mxu0
      %v3130 = vadd.f32 0.0, %v3129
      %v3131 = vpop.f32.mrb[0].mxu0
      %v3132 = vpop.f32.mrb[0].mxu0
      %v3133 = vadd.f32 0.0, %v3132
      %v3134 = vpop.f32.mrb[0].mxu0
      %3135 = vmatprep.mubr.bf16.mxu0 0
      %3136 = vmatmul.mubr.bf16.gmra.mrb[0].mxu0 %v3013
      %v3137 = vpop.f32.mrb[0].mxu0
      %v3138 = vadd.f32 0.0, %v3137
      %v3139 = vpop.f32.mrb[0].mxu0
      %v3140 = vpop.f32.mrb[0].mxu0
      %v3141 = vadd.f32 0.0, %v3140
      %v3142 = vpop.f32.mrb[0].mxu0
      %3143 = vdwg.mxu0
      %v3144 = vadd.f32 %v3001, %v3114
      %v3145 = vadd.f32 %v3002, %v3117
      %v3146 = vadd.f32 %v3003, %v3122
      %v3147 = vadd.f32 %v3004, %v3125
      %v3148 = vadd.f32 %v3005, %v3130
      %v3149 = vadd.f32 %v3006, %v3133
      %v3150 = vadd.f32 %v3007, %v3138
      %v3151 = vadd.f32 %v3008, %v3141
      %v3152 = vld [vmem:[%s946] sm:$0xf]
      %v3153 = vld [vmem:[%s946 + $0x8] sm:$0xf]
      %v3154 = vld [vmem:[%s946 + $0x10] sm:$0xf]
      %v3155 = vld [vmem:[%s946 + $0x18] sm:$0xf]
      %v3156 = vld [vmem:[%s946 + $0x20] sm:$0xf]
      %v3157 = vld [vmem:[%s946 + $0x28] sm:$0xf]
      %v3158 = vld [vmem:[%s946 + $0x30] sm:$0xf]
      %v3159 = vld [vmem:[%s946 + $0x38] sm:$0xf]
      %v3160 = vunpack.c.l.bf16 %v3152
      %v3161 = vunpack.c.l.bf16 %v3153
      %v3162 = vunpack.c.l.bf16 %v3154
      %v3163 = vunpack.c.l.bf16 %v3155
      %v3164 = vunpack.c.l.bf16 %v3156
      %v3165 = vunpack.c.l.bf16 %v3157
      %v3166 = vunpack.c.l.bf16 %v3158
      %v3167 = vunpack.c.l.bf16 %v3159
      %v3168 = vpack.c.bf16 %v3161, %v3160
      %v3169 = vpack.c.bf16 %v3163, %v3162
      %v3170 = vpack.c.bf16 %v3165, %v3164
      %v3171 = vpack.c.bf16 %v3167, %v3166
      %v3172 = vld [vmem:[%s5] sm:$0xf]
      %v3173 = vld [vmem:[%s5 + $0x4] sm:$0xf]
      %v3174 = vld [vmem:[%s5 + $0x8] sm:$0xf]
      %v3175 = vld [vmem:[%s5 + $0xc] sm:$0xf]
      %v3176 = vld [vmem:[%s5 + $0x10] sm:$0xf]
      %v3177 = vld [vmem:[%s5 + $0x14] sm:$0xf]
      %v3178 = vld [vmem:[%s5 + $0x18] sm:$0xf]
      %v3179 = vld [vmem:[%s5 + $0x1c] sm:$0xf]
      %v3180 = vld [vmem:[%s5 + $0x20] sm:$0xf]
      %v3181 = vld [vmem:[%s5 + $0x24] sm:$0xf]
      %v3182 = vld [vmem:[%s5 + $0x28] sm:$0xf]
      %v3183 = vld [vmem:[%s5 + $0x2c] sm:$0xf]
      %v3184 = vld [vmem:[%s5 + $0x30] sm:$0xf]
      %v3185 = vld [vmem:[%s5 + $0x34] sm:$0xf]
      %v3186 = vld [vmem:[%s5 + $0x38] sm:$0xf]
      %v3187 = vld [vmem:[%s5 + $0x3c] sm:$0xf]
      %v3204 = vunpack.c.l.b16 %v3172
      %v3205 = vunpack.c.l.b16 %v3173
      %v3206 = vunpack.c.l.b16 %v3174
      %v3207 = vunpack.c.l.b16 %v3175
      %v3208 = vunpack.c.l.b16 %v3176
      %v3209 = vunpack.c.l.b16 %v3177
      %v3210 = vunpack.c.l.b16 %v3178
      %v3211 = vunpack.c.l.b16 %v3179
      %v3212 = vunpack.c.l.b16 %v3180
      %v3213 = vunpack.c.l.b16 %v3181
      %v3214 = vunpack.c.l.b16 %v3182
      %v3215 = vunpack.c.l.b16 %v3183
      %v3216 = vunpack.c.l.b16 %v3184
      %v3217 = vunpack.c.l.b16 %v3185
      %v3218 = vunpack.c.l.b16 %v3186
      %v3219 = vunpack.c.l.b16 %v3187
      %v3220 = vpack.c.b16 %v3205, %v3204
      %v3221 = vpack.c.b16 %v3207, %v3206
      %v3222 = vpack.c.b16 %v3209, %v3208
      %v3223 = vpack.c.b16 %v3211, %v3210
      %v3224 = vpack.c.b16 %v3213, %v3212
      %v3225 = vpack.c.b16 %v3215, %v3214
      %v3226 = vpack.c.b16 %v3217, %v3216
      %v3227 = vpack.c.b16 %v3219, %v3218
      %3236 = vmatprep.subr.bf16.mxu0 0
      %3237 = vmatpush1.bf16.msra.mxu0 %v3220
      %3238 = vmatprep.subr.bf16.mxu0 0
      %3239 = vmatpush1.bf16.msra.mxu0 %v3221
      %3240 = vmatprep.subr.bf16.mxu0 0
      %3241 = vmatpush1.bf16.msra.mxu0 %v3222
      %3242 = vmatprep.subr.bf16.mxu0 0
      %3243 = vmatpush1.bf16.msra.mxu0 %v3223
      %3244 = vmatprep.subr.bf16.mxu0 0
      %3245 = vmatpush1.bf16.msra.mxu0 %v3224
      %3246 = vmatprep.subr.bf16.mxu0 0
      %3247 = vmatpush1.bf16.msra.mxu0 %v3225
      %3248 = vmatprep.subr.bf16.mxu0 0
      %3249 = vmatpush1.bf16.msra.mxu0 %v3226
      %3250 = vmatprep.subr.bf16.mxu0 0
      %3251 = vmatpush1.bf16.msra.mxu0 %v3227
      %3252 = vmatprep.subr.bf16.mxu0 0
      %3253 = vmatpush1.bf16.msra.mxu0 0
      %3254 = vmatprep.subr.bf16.mxu0 0
      %3255 = vmatpush1.bf16.msra.mxu0 0
      %3256 = vmatprep.subr.bf16.mxu0 0
      %3257 = vmatpush1.bf16.msra.mxu0 0
      %3258 = vmatprep.subr.bf16.mxu0 0
      %3259 = vmatpush1.bf16.msra.mxu0 0
      %3260 = vmatprep.subr.bf16.mxu0 0
      %3261 = vmatpush1.bf16.msra.mxu0 0
      %3262 = vmatprep.subr.bf16.mxu0 0
      %3263 = vmatpush1.bf16.msra.mxu0 0
      %3264 = vmatprep.subr.bf16.mxu0 0
      %3265 = vmatpush1.bf16.msra.mxu0 0
      %3266 = vmatprep.subr.bf16.mxu0 0
      %3267 = vmatpush1.bf16.msra.mxu0 0
      %3268 = vmatprep.mubr.bf16.mxu0 0
      %3269 = vmatmul.mubr.bf16.gmra.mrb[0].mxu0 %v3168
      %v3270 = vpop.f32.mrb[0].mxu0
      %v3271 = vadd.f32 0.0, %v3270
      %v3272 = vpop.f32.mrb[0].mxu0
      %v3273 = vpop.f32.mrb[0].mxu0
      %v3274 = vadd.f32 0.0, %v3273
      %v3275 = vpop.f32.mrb[0].mxu0
      %3276 = vmatprep.mubr.bf16.mxu0 0
      %3277 = vmatmul.mubr.bf16.gmra.mrb[0].mxu0 %v3169
      %v3278 = vpop.f32.mrb[0].mxu0
      %v3279 = vadd.f32 0.0, %v3278
      %v3280 = vpop.f32.mrb[0].mxu0
      %v3281 = vpop.f32.mrb[0].mxu0
      %v3282 = vadd.f32 0.0, %v3281
      %v3283 = vpop.f32.mrb[0].mxu0
      %3284 = vmatprep.mubr.bf16.mxu0 0
      %3285 = vmatmul.mubr.bf16.gmra.mrb[0].mxu0 %v3170
      %v3286 = vpop.f32.mrb[0].mxu0
      %v3287 = vadd.f32 0.0, %v3286
      %v3288 = vpop.f32.mrb[0].mxu0
      %v3289 = vpop.f32.mrb[0].mxu0
      %v3290 = vadd.f32 0.0, %v3289
      %v3291 = vpop.f32.mrb[0].mxu0
      %3292 = vmatprep.mubr.bf16.mxu0 0
      %3293 = vmatmul.mubr.bf16.gmra.mrb[0].mxu0 %v3171
      %v3294 = vpop.f32.mrb[0].mxu0
      %v3295 = vadd.f32 0.0, %v3294
      %v3296 = vpop.f32.mrb[0].mxu0
      %v3297 = vpop.f32.mrb[0].mxu0
      %v3298 = vadd.f32 0.0, %v3297
      %v3299 = vpop.f32.mrb[0].mxu0
      %3300 = vdwg.mxu0
      %v3301 = vadd.f32 %v3144, %v3271
      %v3302 = vadd.f32 %v3145, %v3274
      %v3303 = vadd.f32 %v3146, %v3279
      %v3304 = vadd.f32 %v3147, %v3282
      %v3305 = vadd.f32 %v3148, %v3287
      %v3306 = vadd.f32 %v3149, %v3290
      %v3307 = vadd.f32 %v3150, %v3295
      %v3308 = vadd.f32 %v3151, %v3298
      %v3309 = vld [vmem:[%s4] sm:$0x1]
      %v3311 = vlaneseq
      %v3312 = vshrl.u32 %v3311, 7
      %v3313 = vsub.s32 0, %v3312
      %v3314 = vrot.slane %v3309, %v3313
      %v3316 = vadd.f32 %v3301, %v3314
      %v3317 = vadd.f32 %v3302, %v3314
      %v3318 = vadd.f32 %v3303, %v3314
      %v3319 = vadd.f32 %v3304, %v3314
      %v3320 = vadd.f32 %v3305, %v3314
      %v3321 = vadd.f32 %v3306, %v3314
      %v3322 = vadd.f32 %v3307, %v3314
      %v3323 = vadd.f32 %v3308, %v3314
      %v3324 = vmax.f32 %v3316, 0.0
      %v3325 = vmax.f32 %v3317, 0.0
      %v3326 = vmax.f32 %v3318, 0.0
      %v3327 = vmax.f32 %v3319, 0.0
      %v3328 = vmax.f32 %v3320, 0.0
      %v3329 = vmax.f32 %v3321, 0.0
      %v3330 = vmax.f32 %v3322, 0.0
      %v3331 = vmax.f32 %v3323, 0.0
      %3332 = vst [vmem:[%s256] sm:$0xff] %v3324
      %3333 = vst [vmem:[%s256 + $0x8] sm:$0xff] %v3325
      %3334 = vst [vmem:[%s256 + $0x10] sm:$0xff] %v3326
      %3335 = vst [vmem:[%s256 + $0x18] sm:$0xff] %v3327
      %3336 = vst [vmem:[%s256 + $0x20] sm:$0xff] %v3328
      %3337 = vst [vmem:[%s256 + $0x28] sm:$0xff] %v3329
      %3338 = vst [vmem:[%s256 + $0x30] sm:$0xff] %v3330
      %3339 = vst [vmem:[%s256 + $0x38] sm:$0xff] %v3331
      %p3340 = scmp.lt.s32.totalorder %s17, 1
      %s3341 = scalar_select %p3340, %s17, 1
      %s3342 = smul.addr %s3341, 8
      %s3343 = smul.addr %s3342, 8
      %s3344 = scalar_lea.vmem %s6, %s3343
      // Predicated region
      $region45: #{basic_block_forward.1} parent=43 // pred_check
        %p3345 = pneg %p166
      $region46: #{basic_block_forward.1} parent=43 // pred_check_branch
        %3347 = sbr.rel (%p3345) target = $region48
      $region47: #{basic_block_forward.1} parent=43 // pred_region
        _
      $region48: #{basic_block_forward.1} parent=43 // pred_fallthru
        _
    $region44: #{basic_block_forward.1} parent=5 // pred_fallthru
      _
    %p3348 = scmp.le.s32.totalorder 2, %s12
    // Predicated region
    $region49: #{basic_block_forward.1} parent=5 // pred_check
      %p3349 = pneg %p3348
    $region50: #{basic_block_forward.1} parent=5 // pred_check_branch
      %3351 = sbr.rel (%p3349) target = $region52
    $region51: #{basic_block_forward.1} parent=5 // pred_region
      %s3352 = ssub.s32 %s12, 2
      // Predicated region
      $region53: #{basic_block_forward.1} parent=51 // pred_check
        %p3353 = pneg %p172
      $region54: #{basic_block_forward.1} parent=51 // pred_check_branch
        %3355 = sbr.rel (%p3353) target = $region56
      $region55: #{basic_block_forward.1} parent=51 // pred_region
        %p3356 = scmp.lt.s32.totalorder %s18, 1
        %s3357 = scalar_select %p3356, %s18, 1
        %s3358 = smul.addr %s3357, 8
        %s3359 = smul.addr %s3358, 8
        %s3360 = scalar_lea.vmem %s6, %s3359
      $region56: #{basic_block_forward.1} parent=51 // pred_fallthru
        _
    $region52: #{basic_block_forward.1} parent=5 // pred_fallthru
      _
  $region6: #{basic_block_forward.1} parent=0 // loop_footer
    %s16 = sadd.s32 1, %s12
  $region7: #{basic_block_forward.1} parent=0 // loop_footer_branch
    %11 = sbr.rel target = $region3
  $region8: #{basic_block_forward.1} parent=0 // loop_exit
    _

</llo_original>
